<compile_context>
chip_gen: v7x
topology: tpu7x:2x2x1
jax: 0.10.0
libtpu: 0.0.40
codegen_flags: <defaults>
</compile_context>

<pallas_src>
import functools
import math

import jax
import jax.numpy as jnp
from jax.experimental import pallas as pl
from jax.experimental.pallas import tpu as pltpu


def _round_up(x, m):
    return (x + m - 1) // m * m


def _sublane_mult(dtype):
    # sublane packing multiple: 8 for 32-bit, 16 for 16-bit dtypes.
    return 8 * (4 // jnp.dtype(dtype).itemsize)


def _jnp_pad_mode(pad_mode):
    return {"constant": "constant", "replicate": "edge",
            "reflect": "reflect", "circular": "wrap"}[pad_mode]


def _causal_pad(x, t_pad, h_pad, w_pad, pad_mode):
    # Mirrors F.pad(x, (w_pad, w_pad, h_pad, h_pad, t_pad, 0), mode=...), including
    # the "fall back to constant if t_pad >= T" rule from the module's forward().
    mode = pad_mode if t_pad < x.shape[2] else "constant"
    pads = [(0, 0), (0, 0), (t_pad, 0), (h_pad, h_pad), (w_pad, w_pad)]
    if mode == "constant":
        return jnp.pad(x, pads, mode="constant", constant_values=0)
    return jnp.pad(x, pads, mode=_jnp_pad_mode(mode))


def _accumulate_taps(slabs, w_ref, b_ref, o_ref, *, h_ks, w_ks, w_p, n_out):
    """Shared hot path: in-VMEM spatial unfold + per-tap MXU matmuls.

    slabs : list of t_ks (C_in, N_p_ext) arrays (one padded time step each).
    w_ref : (t_ks*h_ks*w_ks, C_out, C_in) weight taps.
    b_ref : (C_out, 1) float32 bias.
    o_ref : (C_out, N_out) output, N_out = H*W_p (W_p-strided output raster).

    Output pixel (h, w) lives at lane r = h*W_p + w; the input needed for tap
    (kh, kw) is lane r + kh*W_p + kw of the flattened padded slab, so the spatial
    im2col is just a static lane-shifted slice (no HBM blow-up, no scratch).
    """
    acc = None
    for kt, slab in enumerate(slabs):
        for kh in range(h_ks):
            for kw in range(w_ks):
                tap = (kt * h_ks + kh) * w_ks + kw
                sh = kh * w_p + kw
                xs = slab[:, sh:sh + n_out]                       # (C_in, N_out)
                d = jnp.dot(w_ref[tap], xs,
                            preferred_element_type=jnp.float32)   # MXU, f32 acc
                acc = d if acc is None else acc + d
    o_ref[...] = (acc + b_ref[...]).astype(o_ref.dtype)


def _kernel_time_resident(x_ref, w_ref, b_ref, o_ref, *, t_ks, stride, dilation,
                          h_ks, w_ks, w_p, n_out):
    # x_ref: (T_p, C_in, N_p_ext) - all padded time steps for this batch index,
    # DMA'd once per batch and reused for every output time step (1x HBM read).
    t0 = pl.program_id(1) * stride
    slabs = [x_ref[t0 + kt * dilation] for kt in range(t_ks)]
    _accumulate_taps(slabs, w_ref, b_ref, o_ref,
                     h_ks=h_ks, w_ks=w_ks, w_p=w_p, n_out=n_out)


def _kernel_time_streamed(*refs, t_ks, h_ks, w_ks, w_p, n_out):
    # refs: t_ks x (C_in, N_p_ext) time slabs (one per temporal tap, fetched by the
    # BlockSpec pipeline per output step), then w_ref, b_ref, o_ref.
    x_refs = refs[:t_ks]
    w_ref, b_ref, o_ref = refs[t_ks], refs[t_ks + 1], refs[t_ks + 2]
    slabs = [r[...] for r in x_refs]
    _accumulate_taps(slabs, w_ref, b_ref, o_ref,
                     h_ks=h_ks, w_ks=w_ks, w_p=w_p, n_out=n_out)


def causal_conv3d(x, weight, bias=None, *, stride=1, dilation=1, pad_mode="constant",
                  compute_dtype=None, time_resident=None, channels_last_out=False):
    """Forward pass matching the PyTorch CausalConv3d module.

    x:      (B, C_in, T, H, W)
    weight: (C_out, C_in, t_ks, h_ks, w_ks)   (h_ks, w_ks odd)
    bias:   (C_out,) or None
    returns (B, C_out, T_out, H, W)   (or (B, T_out, C_out, H, W) when
            channels_last_out=True, skipping the final relayout so a fused
            consumer can take the kernel's native layout).
    """
    assert x.ndim == 5 and weight.ndim == 5
    B, C_in, T, H, W = x.shape
    C_out, C_in_w, t_ks, h_ks, w_ks = weight.shape
    assert C_in_w == C_in
    assert h_ks % 2 == 1 and w_ks % 2 == 1

    t_pad = (t_ks - 1) * dilation + (1 - stride)
    assert t_pad >= 0
    h_pad, w_pad = h_ks // 2, w_ks // 2

    cdt = jnp.dtype(compute_dtype) if compute_dtype is not None else jnp.dtype(x.dtype)
    out_dtype = jnp.dtype(x.dtype)

    # ---- XLA glue: causal pad + one channels-to-sublanes relayout (1x of x) ----
    x_pad = _causal_pad(x.astype(cdt), t_pad, h_pad, w_pad, pad_mode)
    T_p = T + t_pad
    H_p, W_p = H + 2 * h_pad, W + 2 * w_pad
    N_p = H_p * W_p
    N_p_ext = N_p + (w_ks - 1)   # extra lanes so every tap's shifted window is in-bounds
    x_t = jnp.transpose(x_pad, (0, 2, 1, 3, 4)).reshape(B, T_p, C_in, N_p)
    if w_ks > 1:
        x_t = jnp.pad(x_t, [(0, 0), (0, 0), (0, 0), (0, w_ks - 1)])

    T_out = (T_p - (t_ks - 1) * dilation - 1) // stride + 1
    N_out = H * W_p                       # W_p-strided output raster (lane-dense)
    n_taps = t_ks * h_ks * w_ks

    # Weight per (kt, kh, kw) tap; bias in f32.
    w_k = jnp.transpose(weight, (2, 3, 4, 0, 1)).reshape(n_taps, C_out, C_in).astype(cdt)
    if bias is None:
        bias = jnp.zeros((C_out,), jnp.float32)
    b2 = bias.reshape(C_out, 1).astype(jnp.float32)

    itemsize = jnp.dtype(cdt).itemsize
    out_itemsize = out_dtype.itemsize

    # ---- generation-aware VMEM budgeting (v7x: 64 MiB/TC, v5e/v6e: 128 MiB) ----
    try:
        vmem_cap = int(pltpu.get_tpu_info().vmem_capacity_bytes)
    except Exception:
        vmem_cap = 64 << 20        # unknown target: stay conservative (v7x-class)
    if vmem_cap <= (80 << 20):     # v7x-class
        resident_budget, limit_ceiling = 20 << 20, 40 << 20
    else:                          # v5e / v6e
        resident_budget, limit_ceiling = 44 << 20, 96 << 20

    sub_in = _sublane_mult(cdt)
    lanes_in = _round_up(N_p_ext, 128)
    lanes_out = _round_up(N_out, 128)
    slab_bytes = _round_up(C_in, sub_in) * lanes_in * itemsize          # one time step
    x_resident_bytes = T_p * slab_bytes                                  # whole padded clip
    o_block_bytes = _round_up(C_out, _sublane_mult(out_dtype)) * lanes_out * out_itemsize
    w_bytes = n_taps * _round_up(C_out, sub_in) * _round_up(C_in, 128) * itemsize
    acc_bytes = 2 * _round_up(C_out, 8) * lanes_out * 4                  # f32 acc + dot temp
    fixed_bytes = w_bytes + 512 + acc_bytes + (4 << 20)                  # + Mosaic headroom

    need_resident = 2 * (x_resident_bytes + o_block_bytes) + fixed_bytes
    need_streamed = 2 * (t_ks * slab_bytes + o_block_bytes) + fixed_bytes
    if time_resident is None:
        time_resident = (x_resident_bytes <= resident_budget
                         and need_resident <= limit_ceiling)
    need = need_resident if time_resident else need_streamed
    vmem_limit = int(min(max(need, 32 << 20), limit_ceiling))
    if need > limit_ceiling:  # last resort: exceed the soft ceiling rather than fail
        vmem_limit = int(min(need, vmem_cap - (8 << 20)))

    x_read_steps = (B * T_p) if time_resident else (B * T_out * t_ks)
    cost = pl.CostEstimate(
        flops=int(2 * B * T_out * n_taps * C_out * C_in * N_out),
        transcendentals=0,
        bytes_accessed=int(x_read_steps * C_in * N_p_ext * itemsize
                           + w_k.size * itemsize + b2.size * 4
                           + B * T_out * C_out * N_out * out_itemsize))

    grid = (B, T_out)
    out_shape = jax.ShapeDtypeStruct((B, T_out, C_out, N_out), out_dtype)
    out_spec = pl.BlockSpec((None, None, C_out, N_out), lambda b, t: (b, t, 0, 0))
    w_spec = pl.BlockSpec((n_taps, C_out, C_in), lambda b, t: (0, 0, 0))
    b_spec = pl.BlockSpec((C_out, 1), lambda b, t: (0, 0))
    cparams = pltpu.CompilerParams(
        dimension_semantics=("parallel", "parallel"),  # no carried state -> megacore OK
        vmem_limit_bytes=vmem_limit)

    if time_resident:
        kernel = functools.partial(_kernel_time_resident, t_ks=t_ks, stride=stride,
                                   dilation=dilation, h_ks=h_ks, w_ks=w_ks,
                                   w_p=W_p, n_out=N_out)
        # Full padded time extent per batch; the block index does not depend on t,
        # so it is fetched once per batch and reused across all T_out steps.
        x_spec = pl.BlockSpec((None, T_p, C_in, N_p_ext), lambda b, t: (b, 0, 0, 0))
        out = pl.pallas_call(
            kernel, out_shape=out_shape,
            grid_spec=pltpu.PrefetchScalarGridSpec(
                num_scalar_prefetch=0, grid=grid,
                in_specs=[x_spec, w_spec, b_spec], out_specs=out_spec),
            compiler_params=cparams, cost_estimate=cost,
        )(x_t, w_k, b2)
    else:
        kernel = functools.partial(_kernel_time_streamed, t_ks=t_ks, h_ks=h_ks,
                                   w_ks=w_ks, w_p=W_p, n_out=N_out)
        # One small (C_in, N_p_ext) time slab per temporal tap per step: steady,
        # fully pipelined DMAs; VMEM footprint independent of clip length.
        x_specs = [
            pl.BlockSpec((None, None, C_in, N_p_ext),
                         lambda b, t, _kt=kt: (b, t * stride + _kt * dilation, 0, 0))
            for kt in range(t_ks)]
        out = pl.pallas_call(
            kernel, out_shape=out_shape,
            grid_spec=pltpu.PrefetchScalarGridSpec(
                num_scalar_prefetch=0, grid=grid,
                in_specs=x_specs + [w_spec, b_spec], out_specs=out_spec),
            compiler_params=cparams, cost_estimate=cost,
        )(*([x_t] * t_ks), w_k, b2)

    # (B, T_out, C_out, H*W_p) -> (B, T_out, C_out, H, W): drop the W_p-W garbage
    # lanes per raster row.
    out = out.reshape(B, T_out, C_out, H, W_p)[..., :W]
    if channels_last_out:
        return out                               # (B, T_out, C_out, H, W), no relayout
    # NCTHW to match the PyTorch module (skip via channels_last_out=True to avoid
    # this extra HBM round trip when the consumer can take T-major layout).
    return jnp.transpose(out, (0, 2, 1, 3, 4))


def _reference(x, weight, bias, *, stride=1, dilation=1, pad_mode="constant"):
    """Pure-JAX reference using XLA's conv (independent of the kernel's math)."""
    t_ks, h_ks, w_ks = weight.shape[2:]
    t_pad = (t_ks - 1) * dilation + (1 - stride)
    x_pad = _causal_pad(x, t_pad, h_ks // 2, w_ks // 2, pad_mode)
    y = jax.lax.conv_general_dilated(
        x_pad.astype(jnp.float32), weight.astype(jnp.float32),
        window_strides=(stride, 1, 1), padding="VALID",
        rhs_dilation=(dilation, 1, 1),
        dimension_numbers=("NCDHW", "OIDHW", "NCDHW"),
        precision=jax.lax.Precision.HIGHEST)
    return y + bias.reshape(1, -1, 1, 1, 1)


if __name__ == "__main__":
    key = jax.random.PRNGKey(0)
    k_w, k_b, k_x = jax.random.split(key, 3)

    B, C_in, C_out, T, H, W = 2, 4, 4, 8, 16, 16
    t_ks = h_ks = w_ks = 3

    fan_in = C_in * t_ks * h_ks * w_ks
    weight = jax.random.normal(k_w, (C_out, C_in, t_ks, h_ks, w_ks), jnp.float32)
    weight = weight * (1.0 / math.sqrt(fan_in))
    bias = 0.1 * jax.random.normal(k_b, (C_out,), jnp.float32)
    x = jax.random.normal(k_x, (B, C_in, T, H, W), jnp.float32)

    y_ref = _reference(x, weight, bias)

    # f32, auto strategy (whole-clip-resident input block at these shapes).
    y = jax.block_until_ready(jax.jit(causal_conv3d)(x, weight, bias))
    assert y.shape == (B, C_out, T, H, W), y.shape
    err = float(jnp.max(jnp.abs(y - y_ref)))
    assert jnp.allclose(y, y_ref, atol=1e-3, rtol=1e-3), f"f32 mismatch, max abs err {err}"

    # Forced streamed-time path (the long-clip / tight-VMEM fallback).
    fwd_s = jax.jit(functools.partial(causal_conv3d, time_resident=False))
    y_s = jax.block_until_ready(fwd_s(x, weight, bias))
    err_s = float(jnp.max(jnp.abs(y_s - y_ref)))
    assert jnp.allclose(y_s, y_ref, atol=1e-3, rtol=1e-3), f"streamed mismatch, max abs err {err_s}"

    # bf16 compute path (halves HBM read traffic; accumulation stays f32).
    fwd16 = jax.jit(functools.partial(causal_conv3d, compute_dtype=jnp.bfloat16))
    y16 = jax.block_until_ready(fwd16(x, weight, bias))
    err16 = float(jnp.max(jnp.abs(y16 - y_ref)))
    assert jnp.allclose(y16, y_ref, atol=1e-1, rtol=1e-1), f"bf16 mismatch, max abs err {err16}"

    print("KERNEL_OK")
</pallas_src>

<mosaic_0001>
module attributes {stable_mosaic.version = 11 : i64} {
  func.func @_kernel_time_resident(%arg0: i32, %arg1: i32, %arg2: memref<1x10x4x326xf32, #tpu.memory_space<vmem>>, %arg3: memref<27x4x4xf32, #tpu.memory_space<vmem>>, %arg4: memref<4x1xf32, #tpu.memory_space<vmem>>, %arg5: memref<1x1x4x288xf32, #tpu.memory_space<vmem>>) attributes {dimension_semantics = [#tpu.dimension_semantics<parallel>, #tpu.dimension_semantics<parallel>], iteration_bounds = array<i64: 2, 8>, scalar_prefetch = 0 : i64, scratch_operands = 0 : i64, tpu.core_type = #tpu.core_type<tc>, window_params = [{transform_indices = @transform_0, window_bounds = array<i64: 1, 10, 4, 326>}, {pipeline_mode = #tpu.pipeline_mode<synchronous>, transform_indices = @transform_1, window_bounds = array<i64: 27, 4, 4>}, {pipeline_mode = #tpu.pipeline_mode<synchronous>, transform_indices = @transform_2, window_bounds = array<i64: 4, 1>}, {transform_indices = @transform_3, window_bounds = array<i64: 1, 1, 4, 288>}]} {
    %c1_i32 = arith.constant 1 : i32
    %0 = arith.muli %arg1, %c1_i32 : i32
    %c0_i32 = arith.constant 0 : i32
    %1 = arith.addi %0, %c0_i32 : i32
    %c0 = arith.constant 0 : index
    %2 = arith.index_cast %1 : i32 to index
    %c0_0 = arith.constant 0 : index
    %c0_1 = arith.constant 0 : index
    %3 = vector.load %arg2[%c0, %2, %c0_0, %c0_1] : memref<1x10x4x326xf32, #tpu.memory_space<vmem>>, vector<1x1x4x326xf32>
    %4 = vector.shape_cast %3 : vector<1x1x4x326xf32> to vector<4x326xf32>
    %c1_i32_2 = arith.constant 1 : i32
    %5 = arith.addi %0, %c1_i32_2 : i32
    %c0_3 = arith.constant 0 : index
    %6 = arith.index_cast %5 : i32 to index
    %c0_4 = arith.constant 0 : index
    %c0_5 = arith.constant 0 : index
    %7 = vector.load %arg2[%c0_3, %6, %c0_4, %c0_5] : memref<1x10x4x326xf32, #tpu.memory_space<vmem>>, vector<1x1x4x326xf32>
    %8 = vector.shape_cast %7 : vector<1x1x4x326xf32> to vector<4x326xf32>
    %c2_i32 = arith.constant 2 : i32
    %9 = arith.addi %0, %c2_i32 : i32
    %c0_6 = arith.constant 0 : index
    %10 = arith.index_cast %9 : i32 to index
    %c0_7 = arith.constant 0 : index
    %c0_8 = arith.constant 0 : index
    %11 = vector.load %arg2[%c0_6, %10, %c0_7, %c0_8] : memref<1x10x4x326xf32, #tpu.memory_space<vmem>>, vector<1x1x4x326xf32>
    %12 = vector.shape_cast %11 : vector<1x1x4x326xf32> to vector<4x326xf32>
    %13 = vector.extract_strided_slice %4 {offsets = [0, 0], sizes = [4, 288], strides = [1, 1]} : vector<4x326xf32> to vector<4x288xf32>
    %c0_9 = arith.constant 0 : index
    %c0_10 = arith.constant 0 : index
    %c0_11 = arith.constant 0 : index
    %14 = vector.load %arg3[%c0_9, %c0_10, %c0_11] : memref<27x4x4xf32, #tpu.memory_space<vmem>>, vector<1x4x4xf32>
    %15 = vector.shape_cast %14 : vector<1x4x4xf32> to vector<4x4xf32>
    %cst = arith.constant dense<0.000000e+00> : vector<4x288xf32>
    %16 = tpu.matmul %15, %13, %cst {dimension_numbers = #tpu.dot_dimension_numbers<[1], [0], [0], [1], [0, 0, 1, 1], [], []>} : vector<4x4xf32>, vector<4x288xf32>, vector<4x288xf32> -> vector<4x288xf32>
    %17 = vector.extract_strided_slice %4 {offsets = [0, 1], sizes = [4, 288], strides = [1, 1]} : vector<4x326xf32> to vector<4x288xf32>
    %c1 = arith.constant 1 : index
    %c0_12 = arith.constant 0 : index
    %c0_13 = arith.constant 0 : index
    %18 = vector.load %arg3[%c1, %c0_12, %c0_13] : memref<27x4x4xf32, #tpu.memory_space<vmem>>, vector<1x4x4xf32>
    %19 = vector.shape_cast %18 : vector<1x4x4xf32> to vector<4x4xf32>
    %cst_14 = arith.constant dense<0.000000e+00> : vector<4x288xf32>
    %20 = tpu.matmul %19, %17, %cst_14 {dimension_numbers = #tpu.dot_dimension_numbers<[1], [0], [0], [1], [0, 0, 1, 1], [], []>} : vector<4x4xf32>, vector<4x288xf32>, vector<4x288xf32> -> vector<4x288xf32>
    %21 = arith.addf %16, %20 : vector<4x288xf32>
    %22 = vector.extract_strided_slice %4 {offsets = [0, 2], sizes = [4, 288], strides = [1, 1]} : vector<4x326xf32> to vector<4x288xf32>
    %c2 = arith.constant 2 : index
    %c0_15 = arith.constant 0 : index
    %c0_16 = arith.constant 0 : index
    %23 = vector.load %arg3[%c2, %c0_15, %c0_16] : memref<27x4x4xf32, #tpu.memory_space<vmem>>, vector<1x4x4xf32>
    %24 = vector.shape_cast %23 : vector<1x4x4xf32> to vector<4x4xf32>
    %cst_17 = arith.constant dense<0.000000e+00> : vector<4x288xf32>
    %25 = tpu.matmul %24, %22, %cst_17 {dimension_numbers = #tpu.dot_dimension_numbers<[1], [0], [0], [1], [0, 0, 1, 1], [], []>} : vector<4x4xf32>, vector<4x288xf32>, vector<4x288xf32> -> vector<4x288xf32>
    %26 = arith.addf %21, %25 : vector<4x288xf32>
    %27 = vector.extract_strided_slice %4 {offsets = [0, 18], sizes = [4, 288], strides = [1, 1]} : vector<4x326xf32> to vector<4x288xf32>
    %c3 = arith.constant 3 : index
    %c0_18 = arith.constant 0 : index
    %c0_19 = arith.constant 0 : index
    %28 = vector.load %arg3[%c3, %c0_18, %c0_19] : memref<27x4x4xf32, #tpu.memory_space<vmem>>, vector<1x4x4xf32>
    %29 = vector.shape_cast %28 : vector<1x4x4xf32> to vector<4x4xf32>
    %cst_20 = arith.constant dense<0.000000e+00> : vector<4x288xf32>
    %30 = tpu.matmul %29, %27, %cst_20 {dimension_numbers = #tpu.dot_dimension_numbers<[1], [0], [0], [1], [0, 0, 1, 1], [], []>} : vector<4x4xf32>, vector<4x288xf32>, vector<4x288xf32> -> vector<4x288xf32>
    %31 = arith.addf %26, %30 : vector<4x288xf32>
    %32 = vector.extract_strided_slice %4 {offsets = [0, 19], sizes = [4, 288], strides = [1, 1]} : vector<4x326xf32> to vector<4x288xf32>
    %c4 = arith.constant 4 : index
    %c0_21 = arith.constant 0 : index
    %c0_22 = arith.constant 0 : index
    %33 = vector.load %arg3[%c4, %c0_21, %c0_22] : memref<27x4x4xf32, #tpu.memory_space<vmem>>, vector<1x4x4xf32>
    %34 = vector.shape_cast %33 : vector<1x4x4xf32> to vector<4x4xf32>
    %cst_23 = arith.constant dense<0.000000e+00> : vector<4x288xf32>
    %35 = tpu.matmul %34, %32, %cst_23 {dimension_numbers = #tpu.dot_dimension_numbers<[1], [0], [0], [1], [0, 0, 1, 1], [], []>} : vector<4x4xf32>, vector<4x288xf32>, vector<4x288xf32> -> vector<4x288xf32>
    %36 = arith.addf %31, %35 : vector<4x288xf32>
    %37 = vector.extract_strided_slice %4 {offsets = [0, 20], sizes = [4, 288], strides = [1, 1]} : vector<4x326xf32> to vector<4x288xf32>
    %c5 = arith.constant 5 : index
    %c0_24 = arith.constant 0 : index
    %c0_25 = arith.constant 0 : index
    %38 = vector.load %arg3[%c5, %c0_24, %c0_25] : memref<27x4x4xf32, #tpu.memory_space<vmem>>, vector<1x4x4xf32>
    %39 = vector.shape_cast %38 : vector<1x4x4xf32> to vector<4x4xf32>
    %cst_26 = arith.constant dense<0.000000e+00> : vector<4x288xf32>
    %40 = tpu.matmul %39, %37, %cst_26 {dimension_numbers = #tpu.dot_dimension_numbers<[1], [0], [0], [1], [0, 0, 1, 1], [], []>} : vector<4x4xf32>, vector<4x288xf32>, vector<4x288xf32> -> vector<4x288xf32>
    %41 = arith.addf %36, %40 : vector<4x288xf32>
    %42 = vector.extract_strided_slice %4 {offsets = [0, 36], sizes = [4, 288], strides = [1, 1]} : vector<4x326xf32> to vector<4x288xf32>
    %c6 = arith.constant 6 : index
    %c0_27 = arith.constant 0 : index
    %c0_28 = arith.constant 0 : index
    %43 = vector.load %arg3[%c6, %c0_27, %c0_28] : memref<27x4x4xf32, #tpu.memory_space<vmem>>, vector<1x4x4xf32>
    %44 = vector.shape_cast %43 : vector<1x4x4xf32> to vector<4x4xf32>
    %cst_29 = arith.constant dense<0.000000e+00> : vector<4x288xf32>
    %45 = tpu.matmul %44, %42, %cst_29 {dimension_numbers = #tpu.dot_dimension_numbers<[1], [0], [0], [1], [0, 0, 1, 1], [], []>} : vector<4x4xf32>, vector<4x288xf32>, vector<4x288xf32> -> vector<4x288xf32>
    %46 = arith.addf %41, %45 : vector<4x288xf32>
    %47 = vector.extract_strided_slice %4 {offsets = [0, 37], sizes = [4, 288], strides = [1, 1]} : vector<4x326xf32> to vector<4x288xf32>
    %c7 = arith.constant 7 : index
    %c0_30 = arith.constant 0 : index
    %c0_31 = arith.constant 0 : index
    %48 = vector.load %arg3[%c7, %c0_30, %c0_31] : memref<27x4x4xf32, #tpu.memory_space<vmem>>, vector<1x4x4xf32>
    %49 = vector.shape_cast %48 : vector<1x4x4xf32> to vector<4x4xf32>
    %cst_32 = arith.constant dense<0.000000e+00> : vector<4x288xf32>
    %50 = tpu.matmul %49, %47, %cst_32 {dimension_numbers = #tpu.dot_dimension_numbers<[1], [0], [0], [1], [0, 0, 1, 1], [], []>} : vector<4x4xf32>, vector<4x288xf32>, vector<4x288xf32> -> vector<4x288xf32>
    %51 = arith.addf %46, %50 : vector<4x288xf32>
    %52 = vector.extract_strided_slice %4 {offsets = [0, 38], sizes = [4, 288], strides = [1, 1]} : vector<4x326xf32> to vector<4x288xf32>
    %c8 = arith.constant 8 : index
    %c0_33 = arith.constant 0 : index
    %c0_34 = arith.constant 0 : index
    %53 = vector.load %arg3[%c8, %c0_33, %c0_34] : memref<27x4x4xf32, #tpu.memory_space<vmem>>, vector<1x4x4xf32>
    %54 = vector.shape_cast %53 : vector<1x4x4xf32> to vector<4x4xf32>
    %cst_35 = arith.constant dense<0.000000e+00> : vector<4x288xf32>
    %55 = tpu.matmul %54, %52, %cst_35 {dimension_numbers = #tpu.dot_dimension_numbers<[1], [0], [0], [1], [0, 0, 1, 1], [], []>} : vector<4x4xf32>, vector<4x288xf32>, vector<4x288xf32> -> vector<4x288xf32>
    %56 = arith.addf %51, %55 : vector<4x288xf32>
    %57 = vector.extract_strided_slice %8 {offsets = [0, 0], sizes = [4, 288], strides = [1, 1]} : vector<4x326xf32> to vector<4x288xf32>
    %c9 = arith.constant 9 : index
    %c0_36 = arith.constant 0 : index
    %c0_37 = arith.constant 0 : index
    %58 = vector.load %arg3[%c9, %c0_36, %c0_37] : memref<27x4x4xf32, #tpu.memory_space<vmem>>, vector<1x4x4xf32>
    %59 = vector.shape_cast %58 : vector<1x4x4xf32> to vector<4x4xf32>
    %cst_38 = arith.constant dense<0.000000e+00> : vector<4x288xf32>
    %60 = tpu.matmul %59, %57, %cst_38 {dimension_numbers = #tpu.dot_dimension_numbers<[1], [0], [0], [1], [0, 0, 1, 1], [], []>} : vector<4x4xf32>, vector<4x288xf32>, vector<4x288xf32> -> vector<4x288xf32>
    %61 = arith.addf %56, %60 : vector<4x288xf32>
    %62 = vector.extract_strided_slice %8 {offsets = [0, 1], sizes = [4, 288], strides = [1, 1]} : vector<4x326xf32> to vector<4x288xf32>
    %c10 = arith.constant 10 : index
    %c0_39 = arith.constant 0 : index
    %c0_40 = arith.constant 0 : index
    %63 = vector.load %arg3[%c10, %c0_39, %c0_40] : memref<27x4x4xf32, #tpu.memory_space<vmem>>, vector<1x4x4xf32>
    %64 = vector.shape_cast %63 : vector<1x4x4xf32> to vector<4x4xf32>
    %cst_41 = arith.constant dense<0.000000e+00> : vector<4x288xf32>
    %65 = tpu.matmul %64, %62, %cst_41 {dimension_numbers = #tpu.dot_dimension_numbers<[1], [0], [0], [1], [0, 0, 1, 1], [], []>} : vector<4x4xf32>, vector<4x288xf32>, vector<4x288xf32> -> vector<4x288xf32>
    %66 = arith.addf %61, %65 : vector<4x288xf32>
    %67 = vector.extract_strided_slice %8 {offsets = [0, 2], sizes = [4, 288], strides = [1, 1]} : vector<4x326xf32> to vector<4x288xf32>
    %c11 = arith.constant 11 : index
    %c0_42 = arith.constant 0 : index
    %c0_43 = arith.constant 0 : index
    %68 = vector.load %arg3[%c11, %c0_42, %c0_43] : memref<27x4x4xf32, #tpu.memory_space<vmem>>, vector<1x4x4xf32>
    %69 = vector.shape_cast %68 : vector<1x4x4xf32> to vector<4x4xf32>
    %cst_44 = arith.constant dense<0.000000e+00> : vector<4x288xf32>
    %70 = tpu.matmul %69, %67, %cst_44 {dimension_numbers = #tpu.dot_dimension_numbers<[1], [0], [0], [1], [0, 0, 1, 1], [], []>} : vector<4x4xf32>, vector<4x288xf32>, vector<4x288xf32> -> vector<4x288xf32>
    %71 = arith.addf %66, %70 : vector<4x288xf32>
    %72 = vector.extract_strided_slice %8 {offsets = [0, 18], sizes = [4, 288], strides = [1, 1]} : vector<4x326xf32> to vector<4x288xf32>
    %c12 = arith.constant 12 : index
    %c0_45 = arith.constant 0 : index
    %c0_46 = arith.constant 0 : index
    %73 = vector.load %arg3[%c12, %c0_45, %c0_46] : memref<27x4x4xf32, #tpu.memory_space<vmem>>, vector<1x4x4xf32>
    %74 = vector.shape_cast %73 : vector<1x4x4xf32> to vector<4x4xf32>
    %cst_47 = arith.constant dense<0.000000e+00> : vector<4x288xf32>
    %75 = tpu.matmul %74, %72, %cst_47 {dimension_numbers = #tpu.dot_dimension_numbers<[1], [0], [0], [1], [0, 0, 1, 1], [], []>} : vector<4x4xf32>, vector<4x288xf32>, vector<4x288xf32> -> vector<4x288xf32>
    %76 = arith.addf %71, %75 : vector<4x288xf32>
    %77 = vector.extract_strided_slice %8 {offsets = [0, 19], sizes = [4, 288], strides = [1, 1]} : vector<4x326xf32> to vector<4x288xf32>
    %c13 = arith.constant 13 : index
    %c0_48 = arith.constant 0 : index
    %c0_49 = arith.constant 0 : index
    %78 = vector.load %arg3[%c13, %c0_48, %c0_49] : memref<27x4x4xf32, #tpu.memory_space<vmem>>, vector<1x4x4xf32>
    %79 = vector.shape_cast %78 : vector<1x4x4xf32> to vector<4x4xf32>
    %cst_50 = arith.constant dense<0.000000e+00> : vector<4x288xf32>
    %80 = tpu.matmul %79, %77, %cst_50 {dimension_numbers = #tpu.dot_dimension_numbers<[1], [0], [0], [1], [0, 0, 1, 1], [], []>} : vector<4x4xf32>, vector<4x288xf32>, vector<4x288xf32> -> vector<4x288xf32>
    %81 = arith.addf %76, %80 : vector<4x288xf32>
    %82 = vector.extract_strided_slice %8 {offsets = [0, 20], sizes = [4, 288], strides = [1, 1]} : vector<4x326xf32> to vector<4x288xf32>
    %c14 = arith.constant 14 : index
    %c0_51 = arith.constant 0 : index
    %c0_52 = arith.constant 0 : index
    %83 = vector.load %arg3[%c14, %c0_51, %c0_52] : memref<27x4x4xf32, #tpu.memory_space<vmem>>, vector<1x4x4xf32>
    %84 = vector.shape_cast %83 : vector<1x4x4xf32> to vector<4x4xf32>
    %cst_53 = arith.constant dense<0.000000e+00> : vector<4x288xf32>
    %85 = tpu.matmul %84, %82, %cst_53 {dimension_numbers = #tpu.dot_dimension_numbers<[1], [0], [0], [1], [0, 0, 1, 1], [], []>} : vector<4x4xf32>, vector<4x288xf32>, vector<4x288xf32> -> vector<4x288xf32>
    %86 = arith.addf %81, %85 : vector<4x288xf32>
    %87 = vector.extract_strided_slice %8 {offsets = [0, 36], sizes = [4, 288], strides = [1, 1]} : vector<4x326xf32> to vector<4x288xf32>
    %c15 = arith.constant 15 : index
    %c0_54 = arith.constant 0 : index
    %c0_55 = arith.constant 0 : index
    %88 = vector.load %arg3[%c15, %c0_54, %c0_55] : memref<27x4x4xf32, #tpu.memory_space<vmem>>, vector<1x4x4xf32>
    %89 = vector.shape_cast %88 : vector<1x4x4xf32> to vector<4x4xf32>
    %cst_56 = arith.constant dense<0.000000e+00> : vector<4x288xf32>
    %90 = tpu.matmul %89, %87, %cst_56 {dimension_numbers = #tpu.dot_dimension_numbers<[1], [0], [0], [1], [0, 0, 1, 1], [], []>} : vector<4x4xf32>, vector<4x288xf32>, vector<4x288xf32> -> vector<4x288xf32>
    %91 = arith.addf %86, %90 : vector<4x288xf32>
    %92 = vector.extract_strided_slice %8 {offsets = [0, 37], sizes = [4, 288], strides = [1, 1]} : vector<4x326xf32> to vector<4x288xf32>
    %c16 = arith.constant 16 : index
    %c0_57 = arith.constant 0 : index
    %c0_58 = arith.constant 0 : index
    %93 = vector.load %arg3[%c16, %c0_57, %c0_58] : memref<27x4x4xf32, #tpu.memory_space<vmem>>, vector<1x4x4xf32>
    %94 = vector.shape_cast %93 : vector<1x4x4xf32> to vector<4x4xf32>
    %cst_59 = arith.constant dense<0.000000e+00> : vector<4x288xf32>
    %95 = tpu.matmul %94, %92, %cst_59 {dimension_numbers = #tpu.dot_dimension_numbers<[1], [0], [0], [1], [0, 0, 1, 1], [], []>} : vector<4x4xf32>, vector<4x288xf32>, vector<4x288xf32> -> vector<4x288xf32>
    %96 = arith.addf %91, %95 : vector<4x288xf32>
    %97 = vector.extract_strided_slice %8 {offsets = [0, 38], sizes = [4, 288], strides = [1, 1]} : vector<4x326xf32> to vector<4x288xf32>
    %c17 = arith.constant 17 : index
    %c0_60 = arith.constant 0 : index
    %c0_61 = arith.constant 0 : index
    %98 = vector.load %arg3[%c17, %c0_60, %c0_61] : memref<27x4x4xf32, #tpu.memory_space<vmem>>, vector<1x4x4xf32>
    %99 = vector.shape_cast %98 : vector<1x4x4xf32> to vector<4x4xf32>
    %cst_62 = arith.constant dense<0.000000e+00> : vector<4x288xf32>
    %100 = tpu.matmul %99, %97, %cst_62 {dimension_numbers = #tpu.dot_dimension_numbers<[1], [0], [0], [1], [0, 0, 1, 1], [], []>} : vector<4x4xf32>, vector<4x288xf32>, vector<4x288xf32> -> vector<4x288xf32>
    %101 = arith.addf %96, %100 : vector<4x288xf32>
    %102 = vector.extract_strided_slice %12 {offsets = [0, 0], sizes = [4, 288], strides = [1, 1]} : vector<4x326xf32> to vector<4x288xf32>
    %c18 = arith.constant 18 : index
    %c0_63 = arith.constant 0 : index
    %c0_64 = arith.constant 0 : index
    %103 = vector.load %arg3[%c18, %c0_63, %c0_64] : memref<27x4x4xf32, #tpu.memory_space<vmem>>, vector<1x4x4xf32>
    %104 = vector.shape_cast %103 : vector<1x4x4xf32> to vector<4x4xf32>
    %cst_65 = arith.constant dense<0.000000e+00> : vector<4x288xf32>
    %105 = tpu.matmul %104, %102, %cst_65 {dimension_numbers = #tpu.dot_dimension_numbers<[1], [0], [0], [1], [0, 0, 1, 1], [], []>} : vector<4x4xf32>, vector<4x288xf32>, vector<4x288xf32> -> vector<4x288xf32>
    %106 = arith.addf %101, %105 : vector<4x288xf32>
    %107 = vector.extract_strided_slice %12 {offsets = [0, 1], sizes = [4, 288], strides = [1, 1]} : vector<4x326xf32> to vector<4x288xf32>
    %c19 = arith.constant 19 : index
    %c0_66 = arith.constant 0 : index
    %c0_67 = arith.constant 0 : index
    %108 = vector.load %arg3[%c19, %c0_66, %c0_67] : memref<27x4x4xf32, #tpu.memory_space<vmem>>, vector<1x4x4xf32>
    %109 = vector.shape_cast %108 : vector<1x4x4xf32> to vector<4x4xf32>
    %cst_68 = arith.constant dense<0.000000e+00> : vector<4x288xf32>
    %110 = tpu.matmul %109, %107, %cst_68 {dimension_numbers = #tpu.dot_dimension_numbers<[1], [0], [0], [1], [0, 0, 1, 1], [], []>} : vector<4x4xf32>, vector<4x288xf32>, vector<4x288xf32> -> vector<4x288xf32>
    %111 = arith.addf %106, %110 : vector<4x288xf32>
    %112 = vector.extract_strided_slice %12 {offsets = [0, 2], sizes = [4, 288], strides = [1, 1]} : vector<4x326xf32> to vector<4x288xf32>
    %c20 = arith.constant 20 : index
    %c0_69 = arith.constant 0 : index
    %c0_70 = arith.constant 0 : index
    %113 = vector.load %arg3[%c20, %c0_69, %c0_70] : memref<27x4x4xf32, #tpu.memory_space<vmem>>, vector<1x4x4xf32>
    %114 = vector.shape_cast %113 : vector<1x4x4xf32> to vector<4x4xf32>
    %cst_71 = arith.constant dense<0.000000e+00> : vector<4x288xf32>
    %115 = tpu.matmul %114, %112, %cst_71 {dimension_numbers = #tpu.dot_dimension_numbers<[1], [0], [0], [1], [0, 0, 1, 1], [], []>} : vector<4x4xf32>, vector<4x288xf32>, vector<4x288xf32> -> vector<4x288xf32>
    %116 = arith.addf %111, %115 : vector<4x288xf32>
    %117 = vector.extract_strided_slice %12 {offsets = [0, 18], sizes = [4, 288], strides = [1, 1]} : vector<4x326xf32> to vector<4x288xf32>
    %c21 = arith.constant 21 : index
    %c0_72 = arith.constant 0 : index
    %c0_73 = arith.constant 0 : index
    %118 = vector.load %arg3[%c21, %c0_72, %c0_73] : memref<27x4x4xf32, #tpu.memory_space<vmem>>, vector<1x4x4xf32>
    %119 = vector.shape_cast %118 : vector<1x4x4xf32> to vector<4x4xf32>
    %cst_74 = arith.constant dense<0.000000e+00> : vector<4x288xf32>
    %120 = tpu.matmul %119, %117, %cst_74 {dimension_numbers = #tpu.dot_dimension_numbers<[1], [0], [0], [1], [0, 0, 1, 1], [], []>} : vector<4x4xf32>, vector<4x288xf32>, vector<4x288xf32> -> vector<4x288xf32>
    %121 = arith.addf %116, %120 : vector<4x288xf32>
    %122 = vector.extract_strided_slice %12 {offsets = [0, 19], sizes = [4, 288], strides = [1, 1]} : vector<4x326xf32> to vector<4x288xf32>
    %c22 = arith.constant 22 : index
    %c0_75 = arith.constant 0 : index
    %c0_76 = arith.constant 0 : index
    %123 = vector.load %arg3[%c22, %c0_75, %c0_76] : memref<27x4x4xf32, #tpu.memory_space<vmem>>, vector<1x4x4xf32>
    %124 = vector.shape_cast %123 : vector<1x4x4xf32> to vector<4x4xf32>
    %cst_77 = arith.constant dense<0.000000e+00> : vector<4x288xf32>
    %125 = tpu.matmul %124, %122, %cst_77 {dimension_numbers = #tpu.dot_dimension_numbers<[1], [0], [0], [1], [0, 0, 1, 1], [], []>} : vector<4x4xf32>, vector<4x288xf32>, vector<4x288xf32> -> vector<4x288xf32>
    %126 = arith.addf %121, %125 : vector<4x288xf32>
    %127 = vector.extract_strided_slice %12 {offsets = [0, 20], sizes = [4, 288], strides = [1, 1]} : vector<4x326xf32> to vector<4x288xf32>
    %c23 = arith.constant 23 : index
    %c0_78 = arith.constant 0 : index
    %c0_79 = arith.constant 0 : index
    %128 = vector.load %arg3[%c23, %c0_78, %c0_79] : memref<27x4x4xf32, #tpu.memory_space<vmem>>, vector<1x4x4xf32>
    %129 = vector.shape_cast %128 : vector<1x4x4xf32> to vector<4x4xf32>
    %cst_80 = arith.constant dense<0.000000e+00> : vector<4x288xf32>
    %130 = tpu.matmul %129, %127, %cst_80 {dimension_numbers = #tpu.dot_dimension_numbers<[1], [0], [0], [1], [0, 0, 1, 1], [], []>} : vector<4x4xf32>, vector<4x288xf32>, vector<4x288xf32> -> vector<4x288xf32>
    %131 = arith.addf %126, %130 : vector<4x288xf32>
    %132 = vector.extract_strided_slice %12 {offsets = [0, 36], sizes = [4, 288], strides = [1, 1]} : vector<4x326xf32> to vector<4x288xf32>
    %c24 = arith.constant 24 : index
    %c0_81 = arith.constant 0 : index
    %c0_82 = arith.constant 0 : index
    %133 = vector.load %arg3[%c24, %c0_81, %c0_82] : memref<27x4x4xf32, #tpu.memory_space<vmem>>, vector<1x4x4xf32>
    %134 = vector.shape_cast %133 : vector<1x4x4xf32> to vector<4x4xf32>
    %cst_83 = arith.constant dense<0.000000e+00> : vector<4x288xf32>
    %135 = tpu.matmul %134, %132, %cst_83 {dimension_numbers = #tpu.dot_dimension_numbers<[1], [0], [0], [1], [0, 0, 1, 1], [], []>} : vector<4x4xf32>, vector<4x288xf32>, vector<4x288xf32> -> vector<4x288xf32>
    %136 = arith.addf %131, %135 : vector<4x288xf32>
    %137 = vector.extract_strided_slice %12 {offsets = [0, 37], sizes = [4, 288], strides = [1, 1]} : vector<4x326xf32> to vector<4x288xf32>
    %c25 = arith.constant 25 : index
    %c0_84 = arith.constant 0 : index
    %c0_85 = arith.constant 0 : index
    %138 = vector.load %arg3[%c25, %c0_84, %c0_85] : memref<27x4x4xf32, #tpu.memory_space<vmem>>, vector<1x4x4xf32>
    %139 = vector.shape_cast %138 : vector<1x4x4xf32> to vector<4x4xf32>
    %cst_86 = arith.constant dense<0.000000e+00> : vector<4x288xf32>
    %140 = tpu.matmul %139, %137, %cst_86 {dimension_numbers = #tpu.dot_dimension_numbers<[1], [0], [0], [1], [0, 0, 1, 1], [], []>} : vector<4x4xf32>, vector<4x288xf32>, vector<4x288xf32> -> vector<4x288xf32>
    %141 = arith.addf %136, %140 : vector<4x288xf32>
    %142 = vector.extract_strided_slice %12 {offsets = [0, 38], sizes = [4, 288], strides = [1, 1]} : vector<4x326xf32> to vector<4x288xf32>
    %c26 = arith.constant 26 : index
    %c0_87 = arith.constant 0 : index
    %c0_88 = arith.constant 0 : index
    %143 = vector.load %arg3[%c26, %c0_87, %c0_88] : memref<27x4x4xf32, #tpu.memory_space<vmem>>, vector<1x4x4xf32>
    %144 = vector.shape_cast %143 : vector<1x4x4xf32> to vector<4x4xf32>
    %cst_89 = arith.constant dense<0.000000e+00> : vector<4x288xf32>
    %145 = tpu.matmul %144, %142, %cst_89 {dimension_numbers = #tpu.dot_dimension_numbers<[1], [0], [0], [1], [0, 0, 1, 1], [], []>} : vector<4x4xf32>, vector<4x288xf32>, vector<4x288xf32> -> vector<4x288xf32>
    %146 = arith.addf %141, %145 : vector<4x288xf32>
    %c0_90 = arith.constant 0 : index
    %c0_91 = arith.constant 0 : index
    %147 = vector.load %arg4[%c0_90, %c0_91] : memref<4x1xf32, #tpu.memory_space<vmem>>, vector<4x1xf32>
    %148 = vector.broadcast %147 : vector<4x1xf32> to vector<4x288xf32>
    %149 = arith.addf %146, %148 : vector<4x288xf32>
    %c0_92 = arith.constant 0 : index
    %c0_93 = arith.constant 0 : index
    %c0_94 = arith.constant 0 : index
    %c0_95 = arith.constant 0 : index
    %150 = vector.load %arg5[%c0_92, %c0_93, %c0_94, %c0_95] : memref<1x1x4x288xf32, #tpu.memory_space<vmem>>, vector<1x1x4x288xf32>
    %151 = vector.shape_cast %150 : vector<1x1x4x288xf32> to vector<4x288xf32>
    %152 = vector.shape_cast %149 : vector<4x288xf32> to vector<1x1x4x288xf32>
    tpu.vector_store %arg5[%c0_92, %c0_93, %c0_94, %c0_95], %152 {strides = array<i32>} : memref<1x1x4x288xf32, #tpu.memory_space<vmem>>, vector<1x1x4x288xf32>,
    return
  }
  func.func @transform_0(%arg0: i32, %arg1: i32) -> (i32, i32, i32, i32) {
    %c0_i32 = arith.constant 0 : i32
    %c0_i32_0 = arith.constant 0 : i32
    %c0_i32_1 = arith.constant 0 : i32
    %c0_i32_2 = arith.constant 0 : i32
    return %arg0, %c0_i32, %c0_i32_0, %c0_i32_1 : i32, i32, i32, i32
  }
  func.func @transform_1(%arg0: i32, %arg1: i32) -> (i32, i32, i32) {
    %c0_i32 = arith.constant 0 : i32
    %c0_i32_0 = arith.constant 0 : i32
    %c0_i32_1 = arith.constant 0 : i32
    %c0_i32_2 = arith.constant 0 : i32
    return %c0_i32, %c0_i32_0, %c0_i32_1 : i32, i32, i32
  }
  func.func @transform_2(%arg0: i32, %arg1: i32) -> (i32, i32) {
    %c0_i32 = arith.constant 0 : i32
    %c0_i32_0 = arith.constant 0 : i32
    %c0_i32_1 = arith.constant 0 : i32
    return %c0_i32, %c0_i32_0 : i32, i32
  }
  func.func @transform_3(%arg0: i32, %arg1: i32) -> (i32, i32, i32, i32) {
    %c0_i32 = arith.constant 0 : i32
    %c0_i32_0 = arith.constant 0 : i32
    %c0_i32_1 = arith.constant 0 : i32
    return %arg0, %arg1, %c0_i32, %c0_i32_0 : i32, i32, i32, i32
  }
}

</mosaic_0001>

<llo_original>
// kernel: causal_conv3d.1
$region0: #{causal_conv3d.1}
  #allocation0 [shape = 'u32[]', space=smem, size = 0x4, offset = 0x4, fixed_abs, tag = 'smem constant byte address 0x4 - core index']
  #allocation1 [shape = 'u32[144,128]{1,0:T(1,128)}', space=vmem, size = 0x12000, scoped, tag = 'internal scratch']
  %s0 = inlined_call_operand.vmem [shape: f32[2,10,4,326], index: 0, kind: input, shape index: {}]
  %s1 = inlined_call_operand.vmem [shape: f32[27,4,4], index: 1, kind: input, shape index: {}]
  %s2 = inlined_call_operand.vmem [shape: f32[4,1], index: 2, kind: input, shape index: {}]
  %s3 = inlined_call_operand.vmem [shape: f32[2,8,4,288], index: 3, kind: output, shape index: {}]
  %s4 = sld [smem:[#allocation0]]
  $region45: #{causal_conv3d.1} parent=0
    _
  %s6 = ssub.s32 1, %s4
  %s7 = scalar_select 0, %s6, %s4
  loop: start=0, step=1, limit=18
  $region2: #{causal_conv3d.1} parent=0 // loop_pre_header
    _
  $region3: #{causal_conv3d.1} parent=0 // loop_header
    %s9 = sphi 0, %s13
    %p10 = scmp.ge.s32.totalorder %s9, 18
    %s16 = sphi 0, %s28
    %s17 = sphi 0, %s24
    %s18 = sphi 0, %s16
    %s19 = sphi 0, %s17
    %s20 = sphi 0, %s18
    %s21 = sphi 0, %s19
    %s31 = sphi 0, %s33
    %s34 = sphi 0, %s31
    %s35 = sphi 0, %s34
    %s51 = sphi 0, %s35
    %s55 = sphi 0, %s55
    %s57 = sphi 0, %s55
    %s58 = sphi 0, %s57
    %s72 = sphi 0, %s58
    %s76 = sphi 0, %s76
    %s78 = sphi 0, %s76
    %s79 = sphi 0, %s78
    %s93 = sphi 0, %s79
    %s101 = sphi 0, %s103
    %s104 = sphi 0, %s101
    %s105 = sphi 0, %s104
    %s121 = sphi 0, %s105
  $region4: #{causal_conv3d.1} parent=0 // loop_header_branch
    %12 = sbr.rel (%p10) target = $region8
  $region5: #{causal_conv3d.1} parent=0 // loop_body
    %s14 = ssub.s32 %s9, 1
    %s15 = ssub.s32 %s9, 2
    %s22 = sadd.s32 1, %s17
    %p23 = scmp.ge.s32.totalorder %s22, 8
    %s24 = scalar_select %p23, 0, %s22
    %s25 = sadd.s32 1, %s16
    %s26 = scalar_select %p23, %s25, %s16
    %p27 = scmp.ge.s32.totalorder %s26, 2
    %s28 = scalar_select %p27, 0, %s26
    %s29 = ssub.s32 %s16, %s28
    %p30 = scmp.eq.s32.totalorder %s29, 0
    %s32 = sadd.s32 %s31, 1
    %s33 = scalar_select %p30, %s31, %s32
    %p36 = pneg %p30
    %p37 = scmp.eq.s32.totalorder %s9, 15
    %p38 = por %p36, %p37
    %p39 = scmp.ne.s32.totalorder %s31, %s34
    %p40 = scmp.eq.s32.totalorder %s9, 0
    %p41 = por %p39, %p40
    %p42 = scmp.ne.s32.totalorder %s31, %s34
    %p43 = scmp.eq.s32.totalorder %s14, 15
    %p44 = por %p42, %p43
    %p45 = scmp.ne.s32.totalorder %s34, %s35
    %p46 = scmp.eq.s32.totalorder %s14, 0
    %p47 = por %p45, %p46
    %p48 = scmp.ne.s32.totalorder %s34, %s35
    %p49 = scmp.eq.s32.totalorder %s15, 15
    %p50 = por %p48, %p49
    %p52 = scmp.ne.s32.totalorder %s35, %s51
    %p53 = scmp.eq.s32.totalorder %s15, 0
    %p54 = por %p52, %p53
    %s56 = sadd.s32 %s55, 1
    %p59 = scmp.eq.s32.totalorder %s9, 15
    %p60 = scmp.ne.s32.totalorder %s55, %s57
    %p61 = scmp.eq.s32.totalorder %s9, 0
    %p62 = por %p60, %p61
    %p63 = scmp.ne.s32.totalorder %s55, %s57
    %p64 = scmp.eq.s32.totalorder %s14, 15
    %p65 = por %p63, %p64
    %p66 = scmp.ne.s32.totalorder %s57, %s58
    %p67 = scmp.eq.s32.totalorder %s14, 0
    %p68 = por %p66, %p67
    %p69 = scmp.ne.s32.totalorder %s57, %s58
    %p70 = scmp.eq.s32.totalorder %s15, 15
    %p71 = por %p69, %p70
    %p73 = scmp.ne.s32.totalorder %s58, %s72
    %p74 = scmp.eq.s32.totalorder %s15, 0
    %p75 = por %p73, %p74
    %s77 = sadd.s32 %s76, 1
    %p80 = scmp.eq.s32.totalorder %s9, 15
    %p81 = scmp.ne.s32.totalorder %s76, %s78
    %p82 = scmp.eq.s32.totalorder %s9, 0
    %p83 = por %p81, %p82
    %p84 = scmp.ne.s32.totalorder %s76, %s78
    %p85 = scmp.eq.s32.totalorder %s14, 15
    %p86 = por %p84, %p85
    %p87 = scmp.ne.s32.totalorder %s78, %s79
    %p88 = scmp.eq.s32.totalorder %s14, 0
    %p89 = por %p87, %p88
    %p90 = scmp.ne.s32.totalorder %s78, %s79
    %p91 = scmp.eq.s32.totalorder %s15, 15
    %p92 = por %p90, %p91
    %p94 = scmp.ne.s32.totalorder %s79, %s93
    %p95 = scmp.eq.s32.totalorder %s15, 0
    %p96 = por %p94, %p95
    %s97 = ssub.s32 %s16, %s28
    %s98 = ssub.s32 %s17, %s24
    %s99 = sor.u32 %s97, %s98
    %p100 = scmp.eq.s32.totalorder %s99, 0
    %s102 = sadd.s32 %s101, 1
    %s103 = scalar_select %p100, %s101, %s102
    %p106 = pneg %p100
    %p107 = scmp.eq.s32.totalorder %s9, 15
    %p108 = por %p106, %p107
    %p109 = scmp.ne.s32.totalorder %s101, %s104
    %p110 = scmp.eq.s32.totalorder %s9, 0
    %p111 = por %p109, %p110
    %p112 = scmp.ne.s32.totalorder %s101, %s104
    %p113 = scmp.eq.s32.totalorder %s14, 15
    %p114 = por %p112, %p113
    %p115 = scmp.ne.s32.totalorder %s104, %s105
    %p116 = scmp.eq.s32.totalorder %s14, 0
    %p117 = por %p115, %p116
    %p118 = scmp.ne.s32.totalorder %s104, %s105
    %p119 = scmp.eq.s32.totalorder %s15, 15
    %p120 = por %p118, %p119
    %p122 = scmp.ne.s32.totalorder %s105, %s121
    %p123 = scmp.eq.s32.totalorder %s15, 0
    %p124 = por %p122, %p123
    %p125 = scmp.le.s32.totalorder 1, %s9
    %p126 = scmp.lt.s32.totalorder %s9, 17
    %p127 = pnand %p125, %p126
    %p128 = pneg %p127
    // Predicated region
    $region9: #{causal_conv3d.1} parent=5 // pred_check
      _
    $region10: #{causal_conv3d.1} parent=5 // pred_check_branch
      %130 = sbr.rel (%p127) target = $region12
    $region11: #{causal_conv3d.1} parent=5 // pred_region
      %s131 = ssub.s32 %s9, 1
      // Predicated region
      $region13: #{causal_conv3d.1} parent=11 // pred_check
        %p132 = pneg %p68
      $region14: #{causal_conv3d.1} parent=11 // pred_check_branch
        %134 = sbr.rel (%p132) target = $region16
      $region15: #{causal_conv3d.1} parent=11 // pred_region
        _
      $region16: #{causal_conv3d.1} parent=11 // pred_fallthru
        _
      // Predicated region
      $region17: #{causal_conv3d.1} parent=11 // pred_check
        %p135 = pneg %p89
      $region18: #{causal_conv3d.1} parent=11 // pred_check_branch
        %137 = sbr.rel (%p135) target = $region20
      $region19: #{causal_conv3d.1} parent=11 // pred_region
        _
      $region20: #{causal_conv3d.1} parent=11 // pred_fallthru
        _
    $region12: #{causal_conv3d.1} parent=5 // pred_fallthru
      _
    %p138 = scmp.lt.s32.totalorder %s9, 16
    // Predicated region
    $region21: #{causal_conv3d.1} parent=5 // pred_check
      %p139 = pneg %p138
    $region22: #{causal_conv3d.1} parent=5 // pred_check_branch
      %141 = sbr.rel (%p139) target = $region24
    $region23: #{causal_conv3d.1} parent=5 // pred_region
      // Predicated region
      $region25: #{causal_conv3d.1} parent=23 // pred_check
        %p142 = pneg %p41
      $region26: #{causal_conv3d.1} parent=23 // pred_check_branch
        %144 = sbr.rel (%p142) target = $region28
      $region27: #{causal_conv3d.1} parent=23 // pred_region
        %p145 = scmp.lt.s32.totalorder %s16, 1
        %s146 = scalar_select %p145, %s16, 1
        %s147 = smul.addr %s146, 30
        %s148 = smul.addr %s147, 4
        %s149 = scalar_lea.vmem %s0, %s148
      $region28: #{causal_conv3d.1} parent=23 // pred_fallthru
        _
    $region24: #{causal_conv3d.1} parent=5 // pred_fallthru
      _
    %p150 = scmp.le.s32.totalorder 1, %s9
    %p151 = scmp.lt.s32.totalorder %s9, 17
    %p152 = pnand %p150, %p151
    %p153 = pneg %p152
    // Predicated region
    $region29: #{causal_conv3d.1} parent=5 // pred_check
      _
    $region30: #{causal_conv3d.1} parent=5 // pred_check_branch
      %155 = sbr.rel (%p152) target = $region32
    $region31: #{causal_conv3d.1} parent=5 // pred_region
      %s156 = ssub.s32 %s9, 1
      %p157 = scmp.lt.s32.totalorder %s18, 1
      %s158 = scalar_select %p157, %s18, 1
      %s159 = smul.addr %s158, 30
      %s160 = smul.addr %s159, 4
      %s161 = scalar_lea.vmem %s0, %s160
      %p162 = pneg %p47
      %p163 = pneg %p44
      %p164 = pneg %p68
      %p165 = pneg %p65
      %p166 = pneg %p89
      %p167 = pneg %p86
      %p168 = pneg %p117
      %p169 = pneg %p114
      %p170 = scmp.lt.s32.totalorder %s18, 1
      %s171 = scalar_select %p170, %s18, 1
      %p172 = scmp.lt.s32.totalorder %s19, 7
      %s173 = scalar_select %p172, %s19, 7
      %s174 = smul.addr %s173, 3
      %s175 = smul.addr %s171, 24
      %s176 = sadd.s32 %s174, %s175
      %s177 = smul.addr %s176, 4
      %s178 = scalar_lea.vmem %s3, %s177
      %p179 = scmp.lt.s32.totalorder %s18, 1
      %s180 = scalar_select %p179, %s18, 1
      %s181 = smul.addr %s180, 30
      %s182 = smul.addr %s181, 4
      %s183 = scalar_lea.vmem %s0, %s182
      %p184 = scmp.lt.s32.totalorder %s18, 1
      %s185 = scalar_select %p184, %s18, 1
      %p186 = scmp.lt.s32.totalorder %s19, 7
      %s187 = scalar_select %p186, %s19, 7
      %s188 = smul.addr %s187, 3
      %s189 = smul.addr %s185, 24
      %s190 = sadd.s32 %s188, %s189
      %s191 = smul.addr %s190, 4
      %s192 = scalar_lea.vmem %s3, %s191
      %s193 = smul.u32 %s19, 3
      %s194 = smul.addr %s193, 4
      %s195 = scalar_lea.vmem %s183, %s194
      %v196 = vld [vmem:[%s195] sm:$0xff]
      %v197 = vld [vmem:[%s195 + $0x8] sm:$0xf]
      %s198 = sadd.s32 %s19, 1
      %s199 = smul.u32 %s198, 3
      %s200 = smul.addr %s199, 4
      %s201 = scalar_lea.vmem %s183, %s200
      %v202 = vld [vmem:[%s201] sm:$0xff]
      %v203 = vld [vmem:[%s201 + $0x8] sm:$0xf]
      %s204 = sadd.s32 %s19, 2
      %s205 = smul.u32 %s204, 3
      %s206 = smul.addr %s205, 4
      %s207 = scalar_lea.vmem %s183, %s206
      %v208 = vld [vmem:[%s207] sm:$0xff]
      %v209 = vld [vmem:[%s207 + $0x8] sm:$0xf]
      %v210 = vld [vmem:[%s1] sm:$0xf]
      %s211 = scalar_lea.vmem %s1, 4
      %v212 = vld [vmem:[%s211] sm:$0xf]
      %v215 = vcombine.high %v196, %v196
      %216 = vrot.lane.b32.xlu0 %v196, 127
      %v217 = vpop.permute.xlu0 %216
      %218 = vrot.lane.b32.xlu0 %v215, 127
      %v219 = vpop.permute.xlu0 %218
      %220 = vrot.lane.b32.xlu0 %v197, 127
      %v221 = vpop.permute.xlu0 %220
      %vm222 = vcmask 1039360
      %v223 = vsel %vm222, %v217, %v219
      %v224 = vsel %vm222, %v219, %v221
      %vm225 = vcmask 31744
      %v227 = vsel %vm225, %v212, 0
      %vm229 = vcmask 1043456
      %v230 = vsel %vm229, %v223, 0
      %v232 = vsel %vm229, %v224, 0
      %v234 = vsel %vm229, %v221, 0
      %236 = vmatprep.subr.mxu0 %v232
      %237 = vmatpush1.msra.mxu0 %v230
      %238 = vmatprep.subr.mxu0 0.0
      %239 = vmatpush1.msra.mxu0 0.0
      %240 = vmatprep.subr.mxu0 0.0
      %241 = vmatpush1.msra.mxu0 0.0
      %242 = vmatprep.subr.mxu0 0.0
      %243 = vmatpush1.msra.mxu0 0.0
      %244 = vmatprep.subr.mxu0 0.0
      %245 = vmatpush1.msra.mxu0 0.0
      %246 = vmatprep.subr.mxu0 0.0
      %247 = vmatpush1.msra.mxu0 0.0
      %248 = vmatprep.subr.mxu0 0.0
      %249 = vmatpush1.msra.mxu0 0.0
      %250 = vmatprep.subr.mxu0 0.0
      %251 = vmatpush1.msra.mxu0 0.0
      %252 = vmatprep.subr.mxu0 0.0
      %253 = vmatpush1.msra.mxu0 0.0
      %254 = vmatprep.subr.mxu0 0.0
      %255 = vmatpush1.msra.mxu0 0.0
      %256 = vmatprep.subr.mxu0 0.0
      %257 = vmatpush1.msra.mxu0 0.0
      %258 = vmatprep.subr.mxu0 0.0
      %259 = vmatpush1.msra.mxu0 0.0
      %260 = vmatprep.subr.mxu0 0.0
      %261 = vmatpush1.msra.mxu0 0.0
      %262 = vmatprep.subr.mxu0 0.0
      %263 = vmatpush1.msra.mxu0 0.0
      %264 = vmatprep.subr.mxu0 0.0
      %265 = vmatpush1.msra.mxu0 0.0
      %266 = vmatprep.subr.mxu0 0.0
      %267 = vmatpush1.msra.mxu0 0.0
      %268 = vmatprep.subr.mxu0 0.0
      %269 = vmatpush1.msra.mxu0 0.0
      %270 = vmatprep.subr.mxu0 0.0
      %271 = vmatpush1.msra.mxu0 0.0
      %272 = vmatprep.subr.mxu0 0.0
      %273 = vmatpush1.msra.mxu0 0.0
      %274 = vmatprep.subr.mxu0 0.0
      %275 = vmatpush1.msra.mxu0 0.0
      %276 = vmatprep.subr.mxu0 0.0
      %277 = vmatpush1.msra.mxu0 0.0
      %278 = vmatprep.subr.mxu0 0.0
      %279 = vmatpush1.msra.mxu0 0.0
      %280 = vmatprep.subr.mxu0 0.0
      %281 = vmatpush1.msra.mxu0 0.0
      %282 = vmatprep.subr.mxu0 0.0
      %283 = vmatpush1.msra.mxu0 0.0
      %284 = vmatprep.subr.mxu0 0.0
      %285 = vmatpush1.msra.mxu0 0.0
      %286 = vmatprep.subr.mxu0 0.0
      %287 = vmatpush1.msra.mxu0 0.0
      %288 = vmatprep.subr.mxu0 0.0
      %289 = vmatpush1.msra.mxu0 0.0
      %290 = vmatprep.subr.mxu0 0.0
      %291 = vmatpush1.msra.mxu0 0.0
      %292 = vmatprep.subr.mxu0 0.0
      %293 = vmatpush1.msra.mxu0 0.0
      %294 = vmatprep.subr.mxu0 0.0
      %295 = vmatpush1.msra.mxu0 0.0
      %296 = vmatprep.subr.mxu0 0.0
      %297 = vmatpush1.msra.mxu0 0.0
      %298 = vmatprep.subr.mxu0 0.0
      %299 = vmatpush1.msra.mxu0 0.0
      %300 = vmatprep.mubr.f32.mxu0 0.0
      %301 = vmatmul.mubr.f32.gmra.mrb[0].mxu0 %v227
      %v302 = vpop.f32.mrb[0].mxu0
      %v303 = vadd.f32 0.0, %v302
      %v304 = vpop.f32.mrb[0].mxu0
      %v305 = vadd.f32 0.0, %v304
      %306 = vdwg.mxu0
      %307 = vmatprep.subr.mxu0 0.0
      %308 = vmatpush1.msra.mxu0 %v234
      %309 = vmatprep.subr.mxu0 0.0
      %310 = vmatpush1.msra.mxu0 0.0
      %311 = vmatprep.subr.mxu0 0.0
      %312 = vmatpush1.msra.mxu0 0.0
      %313 = vmatprep.subr.mxu0 0.0
      %314 = vmatpush1.msra.mxu0 0.0
      %315 = vmatprep.subr.mxu0 0.0
      %316 = vmatpush1.msra.mxu0 0.0
      %317 = vmatprep.subr.mxu0 0.0
      %318 = vmatpush1.msra.mxu0 0.0
      %319 = vmatprep.subr.mxu0 0.0
      %320 = vmatpush1.msra.mxu0 0.0
      %321 = vmatprep.subr.mxu0 0.0
      %322 = vmatpush1.msra.mxu0 0.0
      %323 = vmatprep.subr.mxu0 0.0
      %324 = vmatpush1.msra.mxu0 0.0
      %325 = vmatprep.subr.mxu0 0.0
      %326 = vmatpush1.msra.mxu0 0.0
      %327 = vmatprep.subr.mxu0 0.0
      %328 = vmatpush1.msra.mxu0 0.0
      %329 = vmatprep.subr.mxu0 0.0
      %330 = vmatpush1.msra.mxu0 0.0
      %331 = vmatprep.subr.mxu0 0.0
      %332 = vmatpush1.msra.mxu0 0.0
      %333 = vmatprep.subr.mxu0 0.0
      %334 = vmatpush1.msra.mxu0 0.0
      %335 = vmatprep.subr.mxu0 0.0
      %336 = vmatpush1.msra.mxu0 0.0
      %337 = vmatprep.subr.mxu0 0.0
      %338 = vmatpush1.msra.mxu0 0.0
      %339 = vmatprep.subr.mxu0 0.0
      %340 = vmatpush1.msra.mxu0 0.0
      %341 = vmatprep.subr.mxu0 0.0
      %342 = vmatpush1.msra.mxu0 0.0
      %343 = vmatprep.subr.mxu0 0.0
      %344 = vmatpush1.msra.mxu0 0.0
      %345 = vmatprep.subr.mxu0 0.0
      %346 = vmatpush1.msra.mxu0 0.0
      %347 = vmatprep.subr.mxu0 0.0
      %348 = vmatpush1.msra.mxu0 0.0
      %349 = vmatprep.subr.mxu0 0.0
      %350 = vmatpush1.msra.mxu0 0.0
      %351 = vmatprep.subr.mxu0 0.0
      %352 = vmatpush1.msra.mxu0 0.0
      %353 = vmatprep.subr.mxu0 0.0
      %354 = vmatpush1.msra.mxu0 0.0
      %355 = vmatprep.subr.mxu0 0.0
      %356 = vmatpush1.msra.mxu0 0.0
      %357 = vmatprep.subr.mxu0 0.0
      %358 = vmatpush1.msra.mxu0 0.0
      %359 = vmatprep.subr.mxu0 0.0
      %360 = vmatpush1.msra.mxu0 0.0
      %361 = vmatprep.subr.mxu0 0.0
      %362 = vmatpush1.msra.mxu0 0.0
      %363 = vmatprep.subr.mxu0 0.0
      %364 = vmatpush1.msra.mxu0 0.0
      %365 = vmatprep.subr.mxu0 0.0
      %366 = vmatpush1.msra.mxu0 0.0
      %367 = vmatprep.subr.mxu0 0.0
      %368 = vmatpush1.msra.mxu0 0.0
      %369 = vmatprep.subr.mxu0 0.0
      %370 = vmatpush1.msra.mxu0 0.0
      %371 = vmatprep.mubr.f32.mxu0 0.0
      %372 = vmatmul.mubr.f32.gmra.mrb[0].mxu0 %v227
      %v373 = vpop.f32.mrb[0].mxu0
      %v374 = vadd.f32 0.0, %v373
      %v375 = vpop.f32.mrb[0].mxu0
      %376 = vdwg.mxu0
      %v378 = vsel %vm225, %v210, 0
      %v380 = vsel %vm229, %v196, 0
      %v382 = vsel %vm229, %v215, 0
      %v384 = vsel %vm229, %v197, 0
      %386 = vmatprep.subr.mxu0 %v382
      %387 = vmatpush1.msra.mxu0 %v380
      %388 = vmatprep.subr.mxu0 0.0
      %389 = vmatpush1.msra.mxu0 0.0
      %390 = vmatprep.subr.mxu0 0.0
      %391 = vmatpush1.msra.mxu0 0.0
      %392 = vmatprep.subr.mxu0 0.0
      %393 = vmatpush1.msra.mxu0 0.0
      %394 = vmatprep.subr.mxu0 0.0
      %395 = vmatpush1.msra.mxu0 0.0
      %396 = vmatprep.subr.mxu0 0.0
      %397 = vmatpush1.msra.mxu0 0.0
      %398 = vmatprep.subr.mxu0 0.0
      %399 = vmatpush1.msra.mxu0 0.0
      %400 = vmatprep.subr.mxu0 0.0
      %401 = vmatpush1.msra.mxu0 0.0
      %402 = vmatprep.subr.mxu0 0.0
      %403 = vmatpush1.msra.mxu0 0.0
      %404 = vmatprep.subr.mxu0 0.0
      %405 = vmatpush1.msra.mxu0 0.0
      %406 = vmatprep.subr.mxu0 0.0
      %407 = vmatpush1.msra.mxu0 0.0
      %408 = vmatprep.subr.mxu0 0.0
      %409 = vmatpush1.msra.mxu0 0.0
      %410 = vmatprep.subr.mxu0 0.0
      %411 = vmatpush1.msra.mxu0 0.0
      %412 = vmatprep.subr.mxu0 0.0
      %413 = vmatpush1.msra.mxu0 0.0
      %414 = vmatprep.subr.mxu0 0.0
      %415 = vmatpush1.msra.mxu0 0.0
      %416 = vmatprep.subr.mxu0 0.0
      %417 = vmatpush1.msra.mxu0 0.0
      %418 = vmatprep.subr.mxu0 0.0
      %419 = vmatpush1.msra.mxu0 0.0
      %420 = vmatprep.subr.mxu0 0.0
      %421 = vmatpush1.msra.mxu0 0.0
      %422 = vmatprep.subr.mxu0 0.0
      %423 = vmatpush1.msra.mxu0 0.0
      %424 = vmatprep.subr.mxu0 0.0
      %425 = vmatpush1.msra.mxu0 0.0
      %426 = vmatprep.subr.mxu0 0.0
      %427 = vmatpush1.msra.mxu0 0.0
      %428 = vmatprep.subr.mxu0 0.0
      %429 = vmatpush1.msra.mxu0 0.0
      %430 = vmatprep.subr.mxu0 0.0
      %431 = vmatpush1.msra.mxu0 0.0
      %432 = vmatprep.subr.mxu0 0.0
      %433 = vmatpush1.msra.mxu0 0.0
      %434 = vmatprep.subr.mxu0 0.0
      %435 = vmatpush1.msra.mxu0 0.0
      %436 = vmatprep.subr.mxu0 0.0
      %437 = vmatpush1.msra.mxu0 0.0
      %438 = vmatprep.subr.mxu0 0.0
      %439 = vmatpush1.msra.mxu0 0.0
      %440 = vmatprep.subr.mxu0 0.0
      %441 = vmatpush1.msra.mxu0 0.0
      %442 = vmatprep.subr.mxu0 0.0
      %443 = vmatpush1.msra.mxu0 0.0
      %444 = vmatprep.subr.mxu0 0.0
      %445 = vmatpush1.msra.mxu0 0.0
      %446 = vmatprep.subr.mxu0 0.0
      %447 = vmatpush1.msra.mxu0 0.0
      %448 = vmatprep.subr.mxu0 0.0
      %449 = vmatpush1.msra.mxu0 0.0
      %450 = vmatprep.mubr.f32.mxu0 0.0
      %451 = vmatmul.mubr.f32.gmra.mrb[0].mxu0 %v378
      %v452 = vpop.f32.mrb[0].mxu0
      %v453 = vadd.f32 %v303, %v452
      %v454 = vpop.f32.mrb[0].mxu0
      %v455 = vadd.f32 %v305, %v454
      %456 = vdwg.mxu0
      %457 = vmatprep.subr.mxu0 0.0
      %458 = vmatpush1.msra.mxu0 %v384
      %459 = vmatprep.subr.mxu0 0.0
      %460 = vmatpush1.msra.mxu0 0.0
      %461 = vmatprep.subr.mxu0 0.0
      %462 = vmatpush1.msra.mxu0 0.0
      %463 = vmatprep.subr.mxu0 0.0
      %464 = vmatpush1.msra.mxu0 0.0
      %465 = vmatprep.subr.mxu0 0.0
      %466 = vmatpush1.msra.mxu0 0.0
      %467 = vmatprep.subr.mxu0 0.0
      %468 = vmatpush1.msra.mxu0 0.0
      %469 = vmatprep.subr.mxu0 0.0
      %470 = vmatpush1.msra.mxu0 0.0
      %471 = vmatprep.subr.mxu0 0.0
      %472 = vmatpush1.msra.mxu0 0.0
      %473 = vmatprep.subr.mxu0 0.0
      %474 = vmatpush1.msra.mxu0 0.0
      %475 = vmatprep.subr.mxu0 0.0
      %476 = vmatpush1.msra.mxu0 0.0
      %477 = vmatprep.subr.mxu0 0.0
      %478 = vmatpush1.msra.mxu0 0.0
      %479 = vmatprep.subr.mxu0 0.0
      %480 = vmatpush1.msra.mxu0 0.0
      %481 = vmatprep.subr.mxu0 0.0
      %482 = vmatpush1.msra.mxu0 0.0
      %483 = vmatprep.subr.mxu0 0.0
      %484 = vmatpush1.msra.mxu0 0.0
      %485 = vmatprep.subr.mxu0 0.0
      %486 = vmatpush1.msra.mxu0 0.0
      %487 = vmatprep.subr.mxu0 0.0
      %488 = vmatpush1.msra.mxu0 0.0
      %489 = vmatprep.subr.mxu0 0.0
      %490 = vmatpush1.msra.mxu0 0.0
      %491 = vmatprep.subr.mxu0 0.0
      %492 = vmatpush1.msra.mxu0 0.0
      %493 = vmatprep.subr.mxu0 0.0
      %494 = vmatpush1.msra.mxu0 0.0
      %495 = vmatprep.subr.mxu0 0.0
      %496 = vmatpush1.msra.mxu0 0.0
      %497 = vmatprep.subr.mxu0 0.0
      %498 = vmatpush1.msra.mxu0 0.0
      %499 = vmatprep.subr.mxu0 0.0
      %500 = vmatpush1.msra.mxu0 0.0
      %501 = vmatprep.subr.mxu0 0.0
      %502 = vmatpush1.msra.mxu0 0.0
      %503 = vmatprep.subr.mxu0 0.0
      %504 = vmatpush1.msra.mxu0 0.0
      %505 = vmatprep.subr.mxu0 0.0
      %506 = vmatpush1.msra.mxu0 0.0
      %507 = vmatprep.subr.mxu0 0.0
      %508 = vmatpush1.msra.mxu0 0.0
      %509 = vmatprep.subr.mxu0 0.0
      %510 = vmatpush1.msra.mxu0 0.0
      %511 = vmatprep.subr.mxu0 0.0
      %512 = vmatpush1.msra.mxu0 0.0
      %513 = vmatprep.subr.mxu0 0.0
      %514 = vmatpush1.msra.mxu0 0.0
      %515 = vmatprep.subr.mxu0 0.0
      %516 = vmatpush1.msra.mxu0 0.0
      %517 = vmatprep.subr.mxu0 0.0
      %518 = vmatpush1.msra.mxu0 0.0
      %519 = vmatprep.subr.mxu0 0.0
      %520 = vmatpush1.msra.mxu0 0.0
      %521 = vmatprep.mubr.f32.mxu0 0.0
      %522 = vmatmul.mubr.f32.gmra.mrb[0].mxu0 %v378
      %v523 = vpop.f32.mrb[0].mxu0
      %v524 = vadd.f32 %v374, %v523
      %v525 = vpop.f32.mrb[0].mxu0
      %526 = vdwg.mxu0
      %s527 = scalar_lea.vmem %s1, 8
      %v528 = vld [vmem:[%s527] sm:$0xf]
      %529 = vrot.lane.b32.xlu0 %v196, 126
      %v530 = vpop.permute.xlu0 %529
      %531 = vrot.lane.b32.xlu0 %v215, 126
      %v532 = vpop.permute.xlu0 %531
      %533 = vrot.lane.b32.xlu0 %v197, 126
      %v534 = vpop.permute.xlu0 %533
      %vm535 = vcmask 1031168
      %v536 = vsel %vm535, %v530, %v532
      %v537 = vsel %vm535, %v532, %v534
      %v539 = vsel %vm225, %v528, 0
      %v541 = vsel %vm229, %v536, 0
      %v543 = vsel %vm229, %v537, 0
      %v545 = vsel %vm229, %v534, 0
      %547 = vmatprep.subr.mxu0 %v543
      %548 = vmatpush1.msra.mxu0 %v541
      %549 = vmatprep.subr.mxu0 0.0
      %550 = vmatpush1.msra.mxu0 0.0
      %551 = vmatprep.subr.mxu0 0.0
      %552 = vmatpush1.msra.mxu0 0.0
      %553 = vmatprep.subr.mxu0 0.0
      %554 = vmatpush1.msra.mxu0 0.0
      %555 = vmatprep.subr.mxu0 0.0
      %556 = vmatpush1.msra.mxu0 0.0
      %557 = vmatprep.subr.mxu0 0.0
      %558 = vmatpush1.msra.mxu0 0.0
      %559 = vmatprep.subr.mxu0 0.0
      %560 = vmatpush1.msra.mxu0 0.0
      %561 = vmatprep.subr.mxu0 0.0
      %562 = vmatpush1.msra.mxu0 0.0
      %563 = vmatprep.subr.mxu0 0.0
      %564 = vmatpush1.msra.mxu0 0.0
      %565 = vmatprep.subr.mxu0 0.0
      %566 = vmatpush1.msra.mxu0 0.0
      %567 = vmatprep.subr.mxu0 0.0
      %568 = vmatpush1.msra.mxu0 0.0
      %569 = vmatprep.subr.mxu0 0.0
      %570 = vmatpush1.msra.mxu0 0.0
      %571 = vmatprep.subr.mxu0 0.0
      %572 = vmatpush1.msra.mxu0 0.0
      %573 = vmatprep.subr.mxu0 0.0
      %574 = vmatpush1.msra.mxu0 0.0
      %575 = vmatprep.subr.mxu0 0.0
      %576 = vmatpush1.msra.mxu0 0.0
      %577 = vmatprep.subr.mxu0 0.0
      %578 = vmatpush1.msra.mxu0 0.0
      %579 = vmatprep.subr.mxu0 0.0
      %580 = vmatpush1.msra.mxu0 0.0
      %581 = vmatprep.subr.mxu0 0.0
      %582 = vmatpush1.msra.mxu0 0.0
      %583 = vmatprep.subr.mxu0 0.0
      %584 = vmatpush1.msra.mxu0 0.0
      %585 = vmatprep.subr.mxu0 0.0
      %586 = vmatpush1.msra.mxu0 0.0
      %587 = vmatprep.subr.mxu0 0.0
      %588 = vmatpush1.msra.mxu0 0.0
      %589 = vmatprep.subr.mxu0 0.0
      %590 = vmatpush1.msra.mxu0 0.0
      %591 = vmatprep.subr.mxu0 0.0
      %592 = vmatpush1.msra.mxu0 0.0
      %593 = vmatprep.subr.mxu0 0.0
      %594 = vmatpush1.msra.mxu0 0.0
      %595 = vmatprep.subr.mxu0 0.0
      %596 = vmatpush1.msra.mxu0 0.0
      %597 = vmatprep.subr.mxu0 0.0
      %598 = vmatpush1.msra.mxu0 0.0
      %599 = vmatprep.subr.mxu0 0.0
      %600 = vmatpush1.msra.mxu0 0.0
      %601 = vmatprep.subr.mxu0 0.0
      %602 = vmatpush1.msra.mxu0 0.0
      %603 = vmatprep.subr.mxu0 0.0
      %604 = vmatpush1.msra.mxu0 0.0
      %605 = vmatprep.subr.mxu0 0.0
      %606 = vmatpush1.msra.mxu0 0.0
      %607 = vmatprep.subr.mxu0 0.0
      %608 = vmatpush1.msra.mxu0 0.0
      %609 = vmatprep.subr.mxu0 0.0
      %610 = vmatpush1.msra.mxu0 0.0
      %611 = vmatprep.mubr.f32.mxu0 0.0
      %612 = vmatmul.mubr.f32.gmra.mrb[0].mxu0 %v539
      %v613 = vpop.f32.mrb[0].mxu0
      %v614 = vadd.f32 0.0, %v613
      %v615 = vpop.f32.mrb[0].mxu0
      %v616 = vadd.f32 0.0, %v615
      %617 = vdwg.mxu0
      %618 = vmatprep.subr.mxu0 0.0
      %619 = vmatpush1.msra.mxu0 %v545
      %620 = vmatprep.subr.mxu0 0.0
      %621 = vmatpush1.msra.mxu0 0.0
      %622 = vmatprep.subr.mxu0 0.0
      %623 = vmatpush1.msra.mxu0 0.0
      %624 = vmatprep.subr.mxu0 0.0
      %625 = vmatpush1.msra.mxu0 0.0
      %626 = vmatprep.subr.mxu0 0.0
      %627 = vmatpush1.msra.mxu0 0.0
      %628 = vmatprep.subr.mxu0 0.0
      %629 = vmatpush1.msra.mxu0 0.0
      %630 = vmatprep.subr.mxu0 0.0
      %631 = vmatpush1.msra.mxu0 0.0
      %632 = vmatprep.subr.mxu0 0.0
      %633 = vmatpush1.msra.mxu0 0.0
      %634 = vmatprep.subr.mxu0 0.0
      %635 = vmatpush1.msra.mxu0 0.0
      %636 = vmatprep.subr.mxu0 0.0
      %637 = vmatpush1.msra.mxu0 0.0
      %638 = vmatprep.subr.mxu0 0.0
      %639 = vmatpush1.msra.mxu0 0.0
      %640 = vmatprep.subr.mxu0 0.0
      %641 = vmatpush1.msra.mxu0 0.0
      %642 = vmatprep.subr.mxu0 0.0
      %643 = vmatpush1.msra.mxu0 0.0
      %644 = vmatprep.subr.mxu0 0.0
      %645 = vmatpush1.msra.mxu0 0.0
      %646 = vmatprep.subr.mxu0 0.0
      %647 = vmatpush1.msra.mxu0 0.0
      %648 = vmatprep.subr.mxu0 0.0
      %649 = vmatpush1.msra.mxu0 0.0
      %650 = vmatprep.subr.mxu0 0.0
      %651 = vmatpush1.msra.mxu0 0.0
      %652 = vmatprep.subr.mxu0 0.0
      %653 = vmatpush1.msra.mxu0 0.0
      %654 = vmatprep.subr.mxu0 0.0
      %655 = vmatpush1.msra.mxu0 0.0
      %656 = vmatprep.subr.mxu0 0.0
      %657 = vmatpush1.msra.mxu0 0.0
      %658 = vmatprep.subr.mxu0 0.0
      %659 = vmatpush1.msra.mxu0 0.0
      %660 = vmatprep.subr.mxu0 0.0
      %661 = vmatpush1.msra.mxu0 0.0
      %662 = vmatprep.subr.mxu0 0.0
      %663 = vmatpush1.msra.mxu0 0.0
      %664 = vmatprep.subr.mxu0 0.0
      %665 = vmatpush1.msra.mxu0 0.0
      %666 = vmatprep.subr.mxu0 0.0
      %667 = vmatpush1.msra.mxu0 0.0
      %668 = vmatprep.subr.mxu0 0.0
      %669 = vmatpush1.msra.mxu0 0.0
      %670 = vmatprep.subr.mxu0 0.0
      %671 = vmatpush1.msra.mxu0 0.0
      %672 = vmatprep.subr.mxu0 0.0
      %673 = vmatpush1.msra.mxu0 0.0
      %674 = vmatprep.subr.mxu0 0.0
      %675 = vmatpush1.msra.mxu0 0.0
      %676 = vmatprep.subr.mxu0 0.0
      %677 = vmatpush1.msra.mxu0 0.0
      %678 = vmatprep.subr.mxu0 0.0
      %679 = vmatpush1.msra.mxu0 0.0
      %680 = vmatprep.subr.mxu0 0.0
      %681 = vmatpush1.msra.mxu0 0.0
      %682 = vmatprep.mubr.f32.mxu0 0.0
      %683 = vmatmul.mubr.f32.gmra.mrb[0].mxu0 %v539
      %v684 = vpop.f32.mrb[0].mxu0
      %v685 = vadd.f32 0.0, %v684
      %v686 = vpop.f32.mrb[0].mxu0
      %687 = vdwg.mxu0
      %v688 = vadd.f32 %v453, %v614
      %v689 = vadd.f32 %v455, %v616
      %v690 = vadd.f32 %v524, %v685
      %s691 = scalar_lea.vmem %s1, 12
      %v692 = vld [vmem:[%s691] sm:$0xf]
      %693 = vrot.lane.b32.xlu0 %v196, 110
      %v694 = vpop.permute.xlu0 %693
      %695 = vrot.lane.b32.xlu0 %v215, 110
      %v696 = vpop.permute.xlu0 %695
      %697 = vrot.lane.b32.xlu0 %v197, 110
      %v698 = vpop.permute.xlu0 %697
      %vm699 = vcmask 900096
      %v700 = vsel %vm699, %v694, %v696
      %v701 = vsel %vm699, %v696, %v698
      %v703 = vsel %vm225, %v692, 0
      %v705 = vsel %vm229, %v700, 0
      %v707 = vsel %vm229, %v701, 0
      %v709 = vsel %vm229, %v698, 0
      %711 = vmatprep.subr.mxu0 %v707
      %712 = vmatpush1.msra.mxu0 %v705
      %713 = vmatprep.subr.mxu0 0.0
      %714 = vmatpush1.msra.mxu0 0.0
      %715 = vmatprep.subr.mxu0 0.0
      %716 = vmatpush1.msra.mxu0 0.0
      %717 = vmatprep.subr.mxu0 0.0
      %718 = vmatpush1.msra.mxu0 0.0
      %719 = vmatprep.subr.mxu0 0.0
      %720 = vmatpush1.msra.mxu0 0.0
      %721 = vmatprep.subr.mxu0 0.0
      %722 = vmatpush1.msra.mxu0 0.0
      %723 = vmatprep.subr.mxu0 0.0
      %724 = vmatpush1.msra.mxu0 0.0
      %725 = vmatprep.subr.mxu0 0.0
      %726 = vmatpush1.msra.mxu0 0.0
      %727 = vmatprep.subr.mxu0 0.0
      %728 = vmatpush1.msra.mxu0 0.0
      %729 = vmatprep.subr.mxu0 0.0
      %730 = vmatpush1.msra.mxu0 0.0
      %731 = vmatprep.subr.mxu0 0.0
      %732 = vmatpush1.msra.mxu0 0.0
      %733 = vmatprep.subr.mxu0 0.0
      %734 = vmatpush1.msra.mxu0 0.0
      %735 = vmatprep.subr.mxu0 0.0
      %736 = vmatpush1.msra.mxu0 0.0
      %737 = vmatprep.subr.mxu0 0.0
      %738 = vmatpush1.msra.mxu0 0.0
      %739 = vmatprep.subr.mxu0 0.0
      %740 = vmatpush1.msra.mxu0 0.0
      %741 = vmatprep.subr.mxu0 0.0
      %742 = vmatpush1.msra.mxu0 0.0
      %743 = vmatprep.subr.mxu0 0.0
      %744 = vmatpush1.msra.mxu0 0.0
      %745 = vmatprep.subr.mxu0 0.0
      %746 = vmatpush1.msra.mxu0 0.0
      %747 = vmatprep.subr.mxu0 0.0
      %748 = vmatpush1.msra.mxu0 0.0
      %749 = vmatprep.subr.mxu0 0.0
      %750 = vmatpush1.msra.mxu0 0.0
      %751 = vmatprep.subr.mxu0 0.0
      %752 = vmatpush1.msra.mxu0 0.0
      %753 = vmatprep.subr.mxu0 0.0
      %754 = vmatpush1.msra.mxu0 0.0
      %755 = vmatprep.subr.mxu0 0.0
      %756 = vmatpush1.msra.mxu0 0.0
      %757 = vmatprep.subr.mxu0 0.0
      %758 = vmatpush1.msra.mxu0 0.0
      %759 = vmatprep.subr.mxu0 0.0
      %760 = vmatpush1.msra.mxu0 0.0
      %761 = vmatprep.subr.mxu0 0.0
      %762 = vmatpush1.msra.mxu0 0.0
      %763 = vmatprep.subr.mxu0 0.0
      %764 = vmatpush1.msra.mxu0 0.0
      %765 = vmatprep.subr.mxu0 0.0
      %766 = vmatpush1.msra.mxu0 0.0
      %767 = vmatprep.subr.mxu0 0.0
      %768 = vmatpush1.msra.mxu0 0.0
      %769 = vmatprep.subr.mxu0 0.0
      %770 = vmatpush1.msra.mxu0 0.0
      %771 = vmatprep.subr.mxu0 0.0
      %772 = vmatpush1.msra.mxu0 0.0
      %773 = vmatprep.subr.mxu0 0.0
      %774 = vmatpush1.msra.mxu0 0.0
      %775 = vmatprep.mubr.f32.mxu0 0.0
      %776 = vmatmul.mubr.f32.gmra.mrb[0].mxu0 %v703
      %v777 = vpop.f32.mrb[0].mxu0
      %v778 = vadd.f32 0.0, %v777
      %v779 = vpop.f32.mrb[0].mxu0
      %v780 = vadd.f32 0.0, %v779
      %781 = vdwg.mxu0
      %782 = vmatprep.subr.mxu0 0.0
      %783 = vmatpush1.msra.mxu0 %v709
      %784 = vmatprep.subr.mxu0 0.0
      %785 = vmatpush1.msra.mxu0 0.0
      %786 = vmatprep.subr.mxu0 0.0
      %787 = vmatpush1.msra.mxu0 0.0
      %788 = vmatprep.subr.mxu0 0.0
      %789 = vmatpush1.msra.mxu0 0.0
      %790 = vmatprep.subr.mxu0 0.0
      %791 = vmatpush1.msra.mxu0 0.0
      %792 = vmatprep.subr.mxu0 0.0
      %793 = vmatpush1.msra.mxu0 0.0
      %794 = vmatprep.subr.mxu0 0.0
      %795 = vmatpush1.msra.mxu0 0.0
      %796 = vmatprep.subr.mxu0 0.0
      %797 = vmatpush1.msra.mxu0 0.0
      %798 = vmatprep.subr.mxu0 0.0
      %799 = vmatpush1.msra.mxu0 0.0
      %800 = vmatprep.subr.mxu0 0.0
      %801 = vmatpush1.msra.mxu0 0.0
      %802 = vmatprep.subr.mxu0 0.0
      %803 = vmatpush1.msra.mxu0 0.0
      %804 = vmatprep.subr.mxu0 0.0
      %805 = vmatpush1.msra.mxu0 0.0
      %806 = vmatprep.subr.mxu0 0.0
      %807 = vmatpush1.msra.mxu0 0.0
      %808 = vmatprep.subr.mxu0 0.0
      %809 = vmatpush1.msra.mxu0 0.0
      %810 = vmatprep.subr.mxu0 0.0
      %811 = vmatpush1.msra.mxu0 0.0
      %812 = vmatprep.subr.mxu0 0.0
      %813 = vmatpush1.msra.mxu0 0.0
      %814 = vmatprep.subr.mxu0 0.0
      %815 = vmatpush1.msra.mxu0 0.0
      %816 = vmatprep.subr.mxu0 0.0
      %817 = vmatpush1.msra.mxu0 0.0
      %818 = vmatprep.subr.mxu0 0.0
      %819 = vmatpush1.msra.mxu0 0.0
      %820 = vmatprep.subr.mxu0 0.0
      %821 = vmatpush1.msra.mxu0 0.0
      %822 = vmatprep.subr.mxu0 0.0
      %823 = vmatpush1.msra.mxu0 0.0
      %824 = vmatprep.subr.mxu0 0.0
      %825 = vmatpush1.msra.mxu0 0.0
      %826 = vmatprep.subr.mxu0 0.0
      %827 = vmatpush1.msra.mxu0 0.0
      %828 = vmatprep.subr.mxu0 0.0
      %829 = vmatpush1.msra.mxu0 0.0
      %830 = vmatprep.subr.mxu0 0.0
      %831 = vmatpush1.msra.mxu0 0.0
      %832 = vmatprep.subr.mxu0 0.0
      %833 = vmatpush1.msra.mxu0 0.0
      %834 = vmatprep.subr.mxu0 0.0
      %835 = vmatpush1.msra.mxu0 0.0
      %836 = vmatprep.subr.mxu0 0.0
      %837 = vmatpush1.msra.mxu0 0.0
      %838 = vmatprep.subr.mxu0 0.0
      %839 = vmatpush1.msra.mxu0 0.0
      %840 = vmatprep.subr.mxu0 0.0
      %841 = vmatpush1.msra.mxu0 0.0
      %842 = vmatprep.subr.mxu0 0.0
      %843 = vmatpush1.msra.mxu0 0.0
      %844 = vmatprep.subr.mxu0 0.0
      %845 = vmatpush1.msra.mxu0 0.0
      %846 = vmatprep.mubr.f32.mxu0 0.0
      %847 = vmatmul.mubr.f32.gmra.mrb[0].mxu0 %v703
      %v848 = vpop.f32.mrb[0].mxu0
      %v849 = vadd.f32 0.0, %v848
      %v850 = vpop.f32.mrb[0].mxu0
      %851 = vdwg.mxu0
      %v852 = vadd.f32 %v688, %v778
      %v853 = vadd.f32 %v689, %v780
      %v854 = vadd.f32 %v690, %v849
      %s855 = scalar_lea.vmem %s1, 16
      %v856 = vld [vmem:[%s855] sm:$0xf]
      %857 = vrot.lane.b32.xlu0 %v196, 109
      %v858 = vpop.permute.xlu0 %857
      %859 = vrot.lane.b32.xlu0 %v215, 109
      %v860 = vpop.permute.xlu0 %859
      %861 = vrot.lane.b32.xlu0 %v197, 109
      %v862 = vpop.permute.xlu0 %861
      %vm863 = vcmask 891904
      %v864 = vsel %vm863, %v858, %v860
      %v865 = vsel %vm863, %v860, %v862
      %v867 = vsel %vm225, %v856, 0
      %v869 = vsel %vm229, %v864, 0
      %v871 = vsel %vm229, %v865, 0
      %v873 = vsel %vm229, %v862, 0
      %875 = vmatprep.subr.mxu0 %v871
      %876 = vmatpush1.msra.mxu0 %v869
      %877 = vmatprep.subr.mxu0 0.0
      %878 = vmatpush1.msra.mxu0 0.0
      %879 = vmatprep.subr.mxu0 0.0
      %880 = vmatpush1.msra.mxu0 0.0
      %881 = vmatprep.subr.mxu0 0.0
      %882 = vmatpush1.msra.mxu0 0.0
      %883 = vmatprep.subr.mxu0 0.0
      %884 = vmatpush1.msra.mxu0 0.0
      %885 = vmatprep.subr.mxu0 0.0
      %886 = vmatpush1.msra.mxu0 0.0
      %887 = vmatprep.subr.mxu0 0.0
      %888 = vmatpush1.msra.mxu0 0.0
      %889 = vmatprep.subr.mxu0 0.0
      %890 = vmatpush1.msra.mxu0 0.0
      %891 = vmatprep.subr.mxu0 0.0
      %892 = vmatpush1.msra.mxu0 0.0
      %893 = vmatprep.subr.mxu0 0.0
      %894 = vmatpush1.msra.mxu0 0.0
      %895 = vmatprep.subr.mxu0 0.0
      %896 = vmatpush1.msra.mxu0 0.0
      %897 = vmatprep.subr.mxu0 0.0
      %898 = vmatpush1.msra.mxu0 0.0
      %899 = vmatprep.subr.mxu0 0.0
      %900 = vmatpush1.msra.mxu0 0.0
      %901 = vmatprep.subr.mxu0 0.0
      %902 = vmatpush1.msra.mxu0 0.0
      %903 = vmatprep.subr.mxu0 0.0
      %904 = vmatpush1.msra.mxu0 0.0
      %905 = vmatprep.subr.mxu0 0.0
      %906 = vmatpush1.msra.mxu0 0.0
      %907 = vmatprep.subr.mxu0 0.0
      %908 = vmatpush1.msra.mxu0 0.0
      %909 = vmatprep.subr.mxu0 0.0
      %910 = vmatpush1.msra.mxu0 0.0
      %911 = vmatprep.subr.mxu0 0.0
      %912 = vmatpush1.msra.mxu0 0.0
      %913 = vmatprep.subr.mxu0 0.0
      %914 = vmatpush1.msra.mxu0 0.0
      %915 = vmatprep.subr.mxu0 0.0
      %916 = vmatpush1.msra.mxu0 0.0
      %917 = vmatprep.subr.mxu0 0.0
      %918 = vmatpush1.msra.mxu0 0.0
      %919 = vmatprep.subr.mxu0 0.0
      %920 = vmatpush1.msra.mxu0 0.0
      %921 = vmatprep.subr.mxu0 0.0
      %922 = vmatpush1.msra.mxu0 0.0
      %923 = vmatprep.subr.mxu0 0.0
      %924 = vmatpush1.msra.mxu0 0.0
      %925 = vmatprep.subr.mxu0 0.0
      %926 = vmatpush1.msra.mxu0 0.0
      %927 = vmatprep.subr.mxu0 0.0
      %928 = vmatpush1.msra.mxu0 0.0
      %929 = vmatprep.subr.mxu0 0.0
      %930 = vmatpush1.msra.mxu0 0.0
      %931 = vmatprep.subr.mxu0 0.0
      %932 = vmatpush1.msra.mxu0 0.0
      %933 = vmatprep.subr.mxu0 0.0
      %934 = vmatpush1.msra.mxu0 0.0
      %935 = vmatprep.subr.mxu0 0.0
      %936 = vmatpush1.msra.mxu0 0.0
      %937 = vmatprep.subr.mxu0 0.0
      %938 = vmatpush1.msra.mxu0 0.0
      %939 = vmatprep.mubr.f32.mxu0 0.0
      %940 = vmatmul.mubr.f32.gmra.mrb[0].mxu0 %v867
      %v941 = vpop.f32.mrb[0].mxu0
      %v942 = vadd.f32 0.0, %v941
      %v943 = vpop.f32.mrb[0].mxu0
      %v944 = vadd.f32 0.0, %v943
      %945 = vdwg.mxu0
      %946 = vmatprep.subr.mxu0 0.0
      %947 = vmatpush1.msra.mxu0 %v873
      %948 = vmatprep.subr.mxu0 0.0
      %949 = vmatpush1.msra.mxu0 0.0
      %950 = vmatprep.subr.mxu0 0.0
      %951 = vmatpush1.msra.mxu0 0.0
      %952 = vmatprep.subr.mxu0 0.0
      %953 = vmatpush1.msra.mxu0 0.0
      %954 = vmatprep.subr.mxu0 0.0
      %955 = vmatpush1.msra.mxu0 0.0
      %956 = vmatprep.subr.mxu0 0.0
      %957 = vmatpush1.msra.mxu0 0.0
      %958 = vmatprep.subr.mxu0 0.0
      %959 = vmatpush1.msra.mxu0 0.0
      %960 = vmatprep.subr.mxu0 0.0
      %961 = vmatpush1.msra.mxu0 0.0
      %962 = vmatprep.subr.mxu0 0.0
      %963 = vmatpush1.msra.mxu0 0.0
      %964 = vmatprep.subr.mxu0 0.0
      %965 = vmatpush1.msra.mxu0 0.0
      %966 = vmatprep.subr.mxu0 0.0
      %967 = vmatpush1.msra.mxu0 0.0
      %968 = vmatprep.subr.mxu0 0.0
      %969 = vmatpush1.msra.mxu0 0.0
      %970 = vmatprep.subr.mxu0 0.0
      %971 = vmatpush1.msra.mxu0 0.0
      %972 = vmatprep.subr.mxu0 0.0
      %973 = vmatpush1.msra.mxu0 0.0
      %974 = vmatprep.subr.mxu0 0.0
      %975 = vmatpush1.msra.mxu0 0.0
      %976 = vmatprep.subr.mxu0 0.0
      %977 = vmatpush1.msra.mxu0 0.0
      %978 = vmatprep.subr.mxu0 0.0
      %979 = vmatpush1.msra.mxu0 0.0
      %980 = vmatprep.subr.mxu0 0.0
      %981 = vmatpush1.msra.mxu0 0.0
      %982 = vmatprep.subr.mxu0 0.0
      %983 = vmatpush1.msra.mxu0 0.0
      %984 = vmatprep.subr.mxu0 0.0
      %985 = vmatpush1.msra.mxu0 0.0
      %986 = vmatprep.subr.mxu0 0.0
      %987 = vmatpush1.msra.mxu0 0.0
      %988 = vmatprep.subr.mxu0 0.0
      %989 = vmatpush1.msra.mxu0 0.0
      %990 = vmatprep.subr.mxu0 0.0
      %991 = vmatpush1.msra.mxu0 0.0
      %992 = vmatprep.subr.mxu0 0.0
      %993 = vmatpush1.msra.mxu0 0.0
      %994 = vmatprep.subr.mxu0 0.0
      %995 = vmatpush1.msra.mxu0 0.0
      %996 = vmatprep.subr.mxu0 0.0
      %997 = vmatpush1.msra.mxu0 0.0
      %998 = vmatprep.subr.mxu0 0.0
      %999 = vmatpush1.msra.mxu0 0.0
      %1000 = vmatprep.subr.mxu0 0.0
      %1001 = vmatpush1.msra.mxu0 0.0
      %1002 = vmatprep.subr.mxu0 0.0
      %1003 = vmatpush1.msra.mxu0 0.0
      %1004 = vmatprep.subr.mxu0 0.0
      %1005 = vmatpush1.msra.mxu0 0.0
      %1006 = vmatprep.subr.mxu0 0.0
      %1007 = vmatpush1.msra.mxu0 0.0
      %1008 = vmatprep.subr.mxu0 0.0
      %1009 = vmatpush1.msra.mxu0 0.0
      %1010 = vmatprep.mubr.f32.mxu0 0.0
      %1011 = vmatmul.mubr.f32.gmra.mrb[0].mxu0 %v867
      %v1012 = vpop.f32.mrb[0].mxu0
      %v1013 = vadd.f32 0.0, %v1012
      %v1014 = vpop.f32.mrb[0].mxu0
      %1015 = vdwg.mxu0
      %v1016 = vadd.f32 %v852, %v942
      %v1017 = vadd.f32 %v853, %v944
      %v1018 = vadd.f32 %v854, %v1013
      %s1019 = scalar_lea.vmem %s1, 20
      %v1020 = vld [vmem:[%s1019] sm:$0xf]
      %1021 = vrot.lane.b32.xlu0 %v196, 108
      %v1022 = vpop.permute.xlu0 %1021
      %1023 = vrot.lane.b32.xlu0 %v215, 108
      %v1024 = vpop.permute.xlu0 %1023
      %1025 = vrot.lane.b32.xlu0 %v197, 108
      %v1026 = vpop.permute.xlu0 %1025
      %vm1027 = vcmask 883712
      %v1028 = vsel %vm1027, %v1022, %v1024
      %v1029 = vsel %vm1027, %v1024, %v1026
      %v1031 = vsel %vm225, %v1020, 0
      %v1033 = vsel %vm229, %v1028, 0
      %v1035 = vsel %vm229, %v1029, 0
      %v1037 = vsel %vm229, %v1026, 0
      %1039 = vmatprep.subr.mxu0 %v1035
      %1040 = vmatpush1.msra.mxu0 %v1033
      %1041 = vmatprep.subr.mxu0 0.0
      %1042 = vmatpush1.msra.mxu0 0.0
      %1043 = vmatprep.subr.mxu0 0.0
      %1044 = vmatpush1.msra.mxu0 0.0
      %1045 = vmatprep.subr.mxu0 0.0
      %1046 = vmatpush1.msra.mxu0 0.0
      %1047 = vmatprep.subr.mxu0 0.0
      %1048 = vmatpush1.msra.mxu0 0.0
      %1049 = vmatprep.subr.mxu0 0.0
      %1050 = vmatpush1.msra.mxu0 0.0
      %1051 = vmatprep.subr.mxu0 0.0
      %1052 = vmatpush1.msra.mxu0 0.0
      %1053 = vmatprep.subr.mxu0 0.0
      %1054 = vmatpush1.msra.mxu0 0.0
      %1055 = vmatprep.subr.mxu0 0.0
      %1056 = vmatpush1.msra.mxu0 0.0
      %1057 = vmatprep.subr.mxu0 0.0
      %1058 = vmatpush1.msra.mxu0 0.0
      %1059 = vmatprep.subr.mxu0 0.0
      %1060 = vmatpush1.msra.mxu0 0.0
      %1061 = vmatprep.subr.mxu0 0.0
      %1062 = vmatpush1.msra.mxu0 0.0
      %1063 = vmatprep.subr.mxu0 0.0
      %1064 = vmatpush1.msra.mxu0 0.0
      %1065 = vmatprep.subr.mxu0 0.0
      %1066 = vmatpush1.msra.mxu0 0.0
      %1067 = vmatprep.subr.mxu0 0.0
      %1068 = vmatpush1.msra.mxu0 0.0
      %1069 = vmatprep.subr.mxu0 0.0
      %1070 = vmatpush1.msra.mxu0 0.0
      %1071 = vmatprep.subr.mxu0 0.0
      %1072 = vmatpush1.msra.mxu0 0.0
      %1073 = vmatprep.subr.mxu0 0.0
      %1074 = vmatpush1.msra.mxu0 0.0
      %1075 = vmatprep.subr.mxu0 0.0
      %1076 = vmatpush1.msra.mxu0 0.0
      %1077 = vmatprep.subr.mxu0 0.0
      %1078 = vmatpush1.msra.mxu0 0.0
      %1079 = vmatprep.subr.mxu0 0.0
      %1080 = vmatpush1.msra.mxu0 0.0
      %1081 = vmatprep.subr.mxu0 0.0
      %1082 = vmatpush1.msra.mxu0 0.0
      %1083 = vmatprep.subr.mxu0 0.0
      %1084 = vmatpush1.msra.mxu0 0.0
      %1085 = vmatprep.subr.mxu0 0.0
      %1086 = vmatpush1.msra.mxu0 0.0
      %1087 = vmatprep.subr.mxu0 0.0
      %1088 = vmatpush1.msra.mxu0 0.0
      %1089 = vmatprep.subr.mxu0 0.0
      %1090 = vmatpush1.msra.mxu0 0.0
      %1091 = vmatprep.subr.mxu0 0.0
      %1092 = vmatpush1.msra.mxu0 0.0
      %1093 = vmatprep.subr.mxu0 0.0
      %1094 = vmatpush1.msra.mxu0 0.0
      %1095 = vmatprep.subr.mxu0 0.0
      %1096 = vmatpush1.msra.mxu0 0.0
      %1097 = vmatprep.subr.mxu0 0.0
      %1098 = vmatpush1.msra.mxu0 0.0
      %1099 = vmatprep.subr.mxu0 0.0
      %1100 = vmatpush1.msra.mxu0 0.0
      %1101 = vmatprep.subr.mxu0 0.0
      %1102 = vmatpush1.msra.mxu0 0.0
      %1103 = vmatprep.mubr.f32.mxu0 0.0
      %1104 = vmatmul.mubr.f32.gmra.mrb[0].mxu0 %v1031
      %v1105 = vpop.f32.mrb[0].mxu0
      %v1106 = vadd.f32 0.0, %v1105
      %v1107 = vpop.f32.mrb[0].mxu0
      %v1108 = vadd.f32 0.0, %v1107
      %1109 = vdwg.mxu0
      %1110 = vmatprep.subr.mxu0 0.0
      %1111 = vmatpush1.msra.mxu0 %v1037
      %1112 = vmatprep.subr.mxu0 0.0
      %1113 = vmatpush1.msra.mxu0 0.0
      %1114 = vmatprep.subr.mxu0 0.0
      %1115 = vmatpush1.msra.mxu0 0.0
      %1116 = vmatprep.subr.mxu0 0.0
      %1117 = vmatpush1.msra.mxu0 0.0
      %1118 = vmatprep.subr.mxu0 0.0
      %1119 = vmatpush1.msra.mxu0 0.0
      %1120 = vmatprep.subr.mxu0 0.0
      %1121 = vmatpush1.msra.mxu0 0.0
      %1122 = vmatprep.subr.mxu0 0.0
      %1123 = vmatpush1.msra.mxu0 0.0
      %1124 = vmatprep.subr.mxu0 0.0
      %1125 = vmatpush1.msra.mxu0 0.0
      %1126 = vmatprep.subr.mxu0 0.0
      %1127 = vmatpush1.msra.mxu0 0.0
      %1128 = vmatprep.subr.mxu0 0.0
      %1129 = vmatpush1.msra.mxu0 0.0
      %1130 = vmatprep.subr.mxu0 0.0
      %1131 = vmatpush1.msra.mxu0 0.0
      %1132 = vmatprep.subr.mxu0 0.0
      %1133 = vmatpush1.msra.mxu0 0.0
      %1134 = vmatprep.subr.mxu0 0.0
      %1135 = vmatpush1.msra.mxu0 0.0
      %1136 = vmatprep.subr.mxu0 0.0
      %1137 = vmatpush1.msra.mxu0 0.0
      %1138 = vmatprep.subr.mxu0 0.0
      %1139 = vmatpush1.msra.mxu0 0.0
      %1140 = vmatprep.subr.mxu0 0.0
      %1141 = vmatpush1.msra.mxu0 0.0
      %1142 = vmatprep.subr.mxu0 0.0
      %1143 = vmatpush1.msra.mxu0 0.0
      %1144 = vmatprep.subr.mxu0 0.0
      %1145 = vmatpush1.msra.mxu0 0.0
      %1146 = vmatprep.subr.mxu0 0.0
      %1147 = vmatpush1.msra.mxu0 0.0
      %1148 = vmatprep.subr.mxu0 0.0
      %1149 = vmatpush1.msra.mxu0 0.0
      %1150 = vmatprep.subr.mxu0 0.0
      %1151 = vmatpush1.msra.mxu0 0.0
      %1152 = vmatprep.subr.mxu0 0.0
      %1153 = vmatpush1.msra.mxu0 0.0
      %1154 = vmatprep.subr.mxu0 0.0
      %1155 = vmatpush1.msra.mxu0 0.0
      %1156 = vmatprep.subr.mxu0 0.0
      %1157 = vmatpush1.msra.mxu0 0.0
      %1158 = vmatprep.subr.mxu0 0.0
      %1159 = vmatpush1.msra.mxu0 0.0
      %1160 = vmatprep.subr.mxu0 0.0
      %1161 = vmatpush1.msra.mxu0 0.0
      %1162 = vmatprep.subr.mxu0 0.0
      %1163 = vmatpush1.msra.mxu0 0.0
      %1164 = vmatprep.subr.mxu0 0.0
      %1165 = vmatpush1.msra.mxu0 0.0
      %1166 = vmatprep.subr.mxu0 0.0
      %1167 = vmatpush1.msra.mxu0 0.0
      %1168 = vmatprep.subr.mxu0 0.0
      %1169 = vmatpush1.msra.mxu0 0.0
      %1170 = vmatprep.subr.mxu0 0.0
      %1171 = vmatpush1.msra.mxu0 0.0
      %1172 = vmatprep.subr.mxu0 0.0
      %1173 = vmatpush1.msra.mxu0 0.0
      %1174 = vmatprep.mubr.f32.mxu0 0.0
      %1175 = vmatmul.mubr.f32.gmra.mrb[0].mxu0 %v1031
      %v1176 = vpop.f32.mrb[0].mxu0
      %v1177 = vadd.f32 0.0, %v1176
      %v1178 = vpop.f32.mrb[0].mxu0
      %1179 = vdwg.mxu0
      %v1180 = vadd.f32 %v1016, %v1106
      %v1181 = vadd.f32 %v1017, %v1108
      %v1182 = vadd.f32 %v1018, %v1177
      %s1183 = scalar_lea.vmem %s1, 24
      %v1184 = vld [vmem:[%s1183] sm:$0xf]
      %1185 = vrot.lane.b32.xlu0 %v196, 92
      %v1186 = vpop.permute.xlu0 %1185
      %1187 = vrot.lane.b32.xlu0 %v215, 92
      %v1188 = vpop.permute.xlu0 %1187
      %1189 = vrot.lane.b32.xlu0 %v197, 92
      %v1190 = vpop.permute.xlu0 %1189
      %vm1191 = vcmask 752640
      %v1192 = vsel %vm1191, %v1186, %v1188
      %v1193 = vsel %vm1191, %v1188, %v1190
      %v1195 = vsel %vm225, %v1184, 0
      %v1197 = vsel %vm229, %v1192, 0
      %v1199 = vsel %vm229, %v1193, 0
      %v1201 = vsel %vm229, %v1190, 0
      %1203 = vmatprep.subr.mxu0 %v1199
      %1204 = vmatpush1.msra.mxu0 %v1197
      %1205 = vmatprep.subr.mxu0 0.0
      %1206 = vmatpush1.msra.mxu0 0.0
      %1207 = vmatprep.subr.mxu0 0.0
      %1208 = vmatpush1.msra.mxu0 0.0
      %1209 = vmatprep.subr.mxu0 0.0
      %1210 = vmatpush1.msra.mxu0 0.0
      %1211 = vmatprep.subr.mxu0 0.0
      %1212 = vmatpush1.msra.mxu0 0.0
      %1213 = vmatprep.subr.mxu0 0.0
      %1214 = vmatpush1.msra.mxu0 0.0
      %1215 = vmatprep.subr.mxu0 0.0
      %1216 = vmatpush1.msra.mxu0 0.0
      %1217 = vmatprep.subr.mxu0 0.0
      %1218 = vmatpush1.msra.mxu0 0.0
      %1219 = vmatprep.subr.mxu0 0.0
      %1220 = vmatpush1.msra.mxu0 0.0
      %1221 = vmatprep.subr.mxu0 0.0
      %1222 = vmatpush1.msra.mxu0 0.0
      %1223 = vmatprep.subr.mxu0 0.0
      %1224 = vmatpush1.msra.mxu0 0.0
      %1225 = vmatprep.subr.mxu0 0.0
      %1226 = vmatpush1.msra.mxu0 0.0
      %1227 = vmatprep.subr.mxu0 0.0
      %1228 = vmatpush1.msra.mxu0 0.0
      %1229 = vmatprep.subr.mxu0 0.0
      %1230 = vmatpush1.msra.mxu0 0.0
      %1231 = vmatprep.subr.mxu0 0.0
      %1232 = vmatpush1.msra.mxu0 0.0
      %1233 = vmatprep.subr.mxu0 0.0
      %1234 = vmatpush1.msra.mxu0 0.0
      %1235 = vmatprep.subr.mxu0 0.0
      %1236 = vmatpush1.msra.mxu0 0.0
      %1237 = vmatprep.subr.mxu0 0.0
      %1238 = vmatpush1.msra.mxu0 0.0
      %1239 = vmatprep.subr.mxu0 0.0
      %1240 = vmatpush1.msra.mxu0 0.0
      %1241 = vmatprep.subr.mxu0 0.0
      %1242 = vmatpush1.msra.mxu0 0.0
      %1243 = vmatprep.subr.mxu0 0.0
      %1244 = vmatpush1.msra.mxu0 0.0
      %1245 = vmatprep.subr.mxu0 0.0
      %1246 = vmatpush1.msra.mxu0 0.0
      %1247 = vmatprep.subr.mxu0 0.0
      %1248 = vmatpush1.msra.mxu0 0.0
      %1249 = vmatprep.subr.mxu0 0.0
      %1250 = vmatpush1.msra.mxu0 0.0
      %1251 = vmatprep.subr.mxu0 0.0
      %1252 = vmatpush1.msra.mxu0 0.0
      %1253 = vmatprep.subr.mxu0 0.0
      %1254 = vmatpush1.msra.mxu0 0.0
      %1255 = vmatprep.subr.mxu0 0.0
      %1256 = vmatpush1.msra.mxu0 0.0
      %1257 = vmatprep.subr.mxu0 0.0
      %1258 = vmatpush1.msra.mxu0 0.0
      %1259 = vmatprep.subr.mxu0 0.0
      %1260 = vmatpush1.msra.mxu0 0.0
      %1261 = vmatprep.subr.mxu0 0.0
      %1262 = vmatpush1.msra.mxu0 0.0
      %1263 = vmatprep.subr.mxu0 0.0
      %1264 = vmatpush1.msra.mxu0 0.0
      %1265 = vmatprep.subr.mxu0 0.0
      %1266 = vmatpush1.msra.mxu0 0.0
      %1267 = vmatprep.mubr.f32.mxu0 0.0
      %1268 = vmatmul.mubr.f32.gmra.mrb[0].mxu0 %v1195
      %v1269 = vpop.f32.mrb[0].mxu0
      %v1270 = vadd.f32 0.0, %v1269
      %v1271 = vpop.f32.mrb[0].mxu0
      %v1272 = vadd.f32 0.0, %v1271
      %1273 = vdwg.mxu0
      %1274 = vmatprep.subr.mxu0 0.0
      %1275 = vmatpush1.msra.mxu0 %v1201
      %1276 = vmatprep.subr.mxu0 0.0
      %1277 = vmatpush1.msra.mxu0 0.0
      %1278 = vmatprep.subr.mxu0 0.0
      %1279 = vmatpush1.msra.mxu0 0.0
      %1280 = vmatprep.subr.mxu0 0.0
      %1281 = vmatpush1.msra.mxu0 0.0
      %1282 = vmatprep.subr.mxu0 0.0
      %1283 = vmatpush1.msra.mxu0 0.0
      %1284 = vmatprep.subr.mxu0 0.0
      %1285 = vmatpush1.msra.mxu0 0.0
      %1286 = vmatprep.subr.mxu0 0.0
      %1287 = vmatpush1.msra.mxu0 0.0
      %1288 = vmatprep.subr.mxu0 0.0
      %1289 = vmatpush1.msra.mxu0 0.0
      %1290 = vmatprep.subr.mxu0 0.0
      %1291 = vmatpush1.msra.mxu0 0.0
      %1292 = vmatprep.subr.mxu0 0.0
      %1293 = vmatpush1.msra.mxu0 0.0
      %1294 = vmatprep.subr.mxu0 0.0
      %1295 = vmatpush1.msra.mxu0 0.0
      %1296 = vmatprep.subr.mxu0 0.0
      %1297 = vmatpush1.msra.mxu0 0.0
      %1298 = vmatprep.subr.mxu0 0.0
      %1299 = vmatpush1.msra.mxu0 0.0
      %1300 = vmatprep.subr.mxu0 0.0
      %1301 = vmatpush1.msra.mxu0 0.0
      %1302 = vmatprep.subr.mxu0 0.0
      %1303 = vmatpush1.msra.mxu0 0.0
      %1304 = vmatprep.subr.mxu0 0.0
      %1305 = vmatpush1.msra.mxu0 0.0
      %1306 = vmatprep.subr.mxu0 0.0
      %1307 = vmatpush1.msra.mxu0 0.0
      %1308 = vmatprep.subr.mxu0 0.0
      %1309 = vmatpush1.msra.mxu0 0.0
      %1310 = vmatprep.subr.mxu0 0.0
      %1311 = vmatpush1.msra.mxu0 0.0
      %1312 = vmatprep.subr.mxu0 0.0
      %1313 = vmatpush1.msra.mxu0 0.0
      %1314 = vmatprep.subr.mxu0 0.0
      %1315 = vmatpush1.msra.mxu0 0.0
      %1316 = vmatprep.subr.mxu0 0.0
      %1317 = vmatpush1.msra.mxu0 0.0
      %1318 = vmatprep.subr.mxu0 0.0
      %1319 = vmatpush1.msra.mxu0 0.0
      %1320 = vmatprep.subr.mxu0 0.0
      %1321 = vmatpush1.msra.mxu0 0.0
      %1322 = vmatprep.subr.mxu0 0.0
      %1323 = vmatpush1.msra.mxu0 0.0
      %1324 = vmatprep.subr.mxu0 0.0
      %1325 = vmatpush1.msra.mxu0 0.0
      %1326 = vmatprep.subr.mxu0 0.0
      %1327 = vmatpush1.msra.mxu0 0.0
      %1328 = vmatprep.subr.mxu0 0.0
      %1329 = vmatpush1.msra.mxu0 0.0
      %1330 = vmatprep.subr.mxu0 0.0
      %1331 = vmatpush1.msra.mxu0 0.0
      %1332 = vmatprep.subr.mxu0 0.0
      %1333 = vmatpush1.msra.mxu0 0.0
      %1334 = vmatprep.subr.mxu0 0.0
      %1335 = vmatpush1.msra.mxu0 0.0
      %1336 = vmatprep.subr.mxu0 0.0
      %1337 = vmatpush1.msra.mxu0 0.0
      %1338 = vmatprep.mubr.f32.mxu0 0.0
      %1339 = vmatmul.mubr.f32.gmra.mrb[0].mxu0 %v1195
      %v1340 = vpop.f32.mrb[0].mxu0
      %v1341 = vadd.f32 0.0, %v1340
      %v1342 = vpop.f32.mrb[0].mxu0
      %1343 = vdwg.mxu0
      %v1344 = vadd.f32 %v1180, %v1270
      %v1345 = vadd.f32 %v1181, %v1272
      %v1346 = vadd.f32 %v1182, %v1341
      %s1347 = scalar_lea.vmem %s1, 28
      %v1348 = vld [vmem:[%s1347] sm:$0xf]
      %1349 = vrot.lane.b32.xlu0 %v196, 91
      %v1350 = vpop.permute.xlu0 %1349
      %1351 = vrot.lane.b32.xlu0 %v215, 91
      %v1352 = vpop.permute.xlu0 %1351
      %1353 = vrot.lane.b32.xlu0 %v197, 91
      %v1354 = vpop.permute.xlu0 %1353
      %vm1355 = vcmask 744448
      %v1356 = vsel %vm1355, %v1350, %v1352
      %v1357 = vsel %vm1355, %v1352, %v1354
      %v1359 = vsel %vm225, %v1348, 0
      %v1361 = vsel %vm229, %v1356, 0
      %v1363 = vsel %vm229, %v1357, 0
      %v1365 = vsel %vm229, %v1354, 0
      %1367 = vmatprep.subr.mxu0 %v1363
      %1368 = vmatpush1.msra.mxu0 %v1361
      %1369 = vmatprep.subr.mxu0 0.0
      %1370 = vmatpush1.msra.mxu0 0.0
      %1371 = vmatprep.subr.mxu0 0.0
      %1372 = vmatpush1.msra.mxu0 0.0
      %1373 = vmatprep.subr.mxu0 0.0
      %1374 = vmatpush1.msra.mxu0 0.0
      %1375 = vmatprep.subr.mxu0 0.0
      %1376 = vmatpush1.msra.mxu0 0.0
      %1377 = vmatprep.subr.mxu0 0.0
      %1378 = vmatpush1.msra.mxu0 0.0
      %1379 = vmatprep.subr.mxu0 0.0
      %1380 = vmatpush1.msra.mxu0 0.0
      %1381 = vmatprep.subr.mxu0 0.0
      %1382 = vmatpush1.msra.mxu0 0.0
      %1383 = vmatprep.subr.mxu0 0.0
      %1384 = vmatpush1.msra.mxu0 0.0
      %1385 = vmatprep.subr.mxu0 0.0
      %1386 = vmatpush1.msra.mxu0 0.0
      %1387 = vmatprep.subr.mxu0 0.0
      %1388 = vmatpush1.msra.mxu0 0.0
      %1389 = vmatprep.subr.mxu0 0.0
      %1390 = vmatpush1.msra.mxu0 0.0
      %1391 = vmatprep.subr.mxu0 0.0
      %1392 = vmatpush1.msra.mxu0 0.0
      %1393 = vmatprep.subr.mxu0 0.0
      %1394 = vmatpush1.msra.mxu0 0.0
      %1395 = vmatprep.subr.mxu0 0.0
      %1396 = vmatpush1.msra.mxu0 0.0
      %1397 = vmatprep.subr.mxu0 0.0
      %1398 = vmatpush1.msra.mxu0 0.0
      %1399 = vmatprep.subr.mxu0 0.0
      %1400 = vmatpush1.msra.mxu0 0.0
      %1401 = vmatprep.subr.mxu0 0.0
      %1402 = vmatpush1.msra.mxu0 0.0
      %1403 = vmatprep.subr.mxu0 0.0
      %1404 = vmatpush1.msra.mxu0 0.0
      %1405 = vmatprep.subr.mxu0 0.0
      %1406 = vmatpush1.msra.mxu0 0.0
      %1407 = vmatprep.subr.mxu0 0.0
      %1408 = vmatpush1.msra.mxu0 0.0
      %1409 = vmatprep.subr.mxu0 0.0
      %1410 = vmatpush1.msra.mxu0 0.0
      %1411 = vmatprep.subr.mxu0 0.0
      %1412 = vmatpush1.msra.mxu0 0.0
      %1413 = vmatprep.subr.mxu0 0.0
      %1414 = vmatpush1.msra.mxu0 0.0
      %1415 = vmatprep.subr.mxu0 0.0
      %1416 = vmatpush1.msra.mxu0 0.0
      %1417 = vmatprep.subr.mxu0 0.0
      %1418 = vmatpush1.msra.mxu0 0.0
      %1419 = vmatprep.subr.mxu0 0.0
      %1420 = vmatpush1.msra.mxu0 0.0
      %1421 = vmatprep.subr.mxu0 0.0
      %1422 = vmatpush1.msra.mxu0 0.0
      %1423 = vmatprep.subr.mxu0 0.0
      %1424 = vmatpush1.msra.mxu0 0.0
      %1425 = vmatprep.subr.mxu0 0.0
      %1426 = vmatpush1.msra.mxu0 0.0
      %1427 = vmatprep.subr.mxu0 0.0
      %1428 = vmatpush1.msra.mxu0 0.0
      %1429 = vmatprep.subr.mxu0 0.0
      %1430 = vmatpush1.msra.mxu0 0.0
      %1431 = vmatprep.mubr.f32.mxu0 0.0
      %1432 = vmatmul.mubr.f32.gmra.mrb[0].mxu0 %v1359
      %v1433 = vpop.f32.mrb[0].mxu0
      %v1434 = vadd.f32 0.0, %v1433
      %v1435 = vpop.f32.mrb[0].mxu0
      %v1436 = vadd.f32 0.0, %v1435
      %1437 = vdwg.mxu0
      %1438 = vmatprep.subr.mxu0 0.0
      %1439 = vmatpush1.msra.mxu0 %v1365
      %1440 = vmatprep.subr.mxu0 0.0
      %1441 = vmatpush1.msra.mxu0 0.0
      %1442 = vmatprep.subr.mxu0 0.0
      %1443 = vmatpush1.msra.mxu0 0.0
      %1444 = vmatprep.subr.mxu0 0.0
      %1445 = vmatpush1.msra.mxu0 0.0
      %1446 = vmatprep.subr.mxu0 0.0
      %1447 = vmatpush1.msra.mxu0 0.0
      %1448 = vmatprep.subr.mxu0 0.0
      %1449 = vmatpush1.msra.mxu0 0.0
      %1450 = vmatprep.subr.mxu0 0.0
      %1451 = vmatpush1.msra.mxu0 0.0
      %1452 = vmatprep.subr.mxu0 0.0
      %1453 = vmatpush1.msra.mxu0 0.0
      %1454 = vmatprep.subr.mxu0 0.0
      %1455 = vmatpush1.msra.mxu0 0.0
      %1456 = vmatprep.subr.mxu0 0.0
      %1457 = vmatpush1.msra.mxu0 0.0
      %1458 = vmatprep.subr.mxu0 0.0
      %1459 = vmatpush1.msra.mxu0 0.0
      %1460 = vmatprep.subr.mxu0 0.0
      %1461 = vmatpush1.msra.mxu0 0.0
      %1462 = vmatprep.subr.mxu0 0.0
      %1463 = vmatpush1.msra.mxu0 0.0
      %1464 = vmatprep.subr.mxu0 0.0
      %1465 = vmatpush1.msra.mxu0 0.0
      %1466 = vmatprep.subr.mxu0 0.0
      %1467 = vmatpush1.msra.mxu0 0.0
      %1468 = vmatprep.subr.mxu0 0.0
      %1469 = vmatpush1.msra.mxu0 0.0
      %1470 = vmatprep.subr.mxu0 0.0
      %1471 = vmatpush1.msra.mxu0 0.0
      %1472 = vmatprep.subr.mxu0 0.0
      %1473 = vmatpush1.msra.mxu0 0.0
      %1474 = vmatprep.subr.mxu0 0.0
      %1475 = vmatpush1.msra.mxu0 0.0
      %1476 = vmatprep.subr.mxu0 0.0
      %1477 = vmatpush1.msra.mxu0 0.0
      %1478 = vmatprep.subr.mxu0 0.0
      %1479 = vmatpush1.msra.mxu0 0.0
      %1480 = vmatprep.subr.mxu0 0.0
      %1481 = vmatpush1.msra.mxu0 0.0
      %1482 = vmatprep.subr.mxu0 0.0
      %1483 = vmatpush1.msra.mxu0 0.0
      %1484 = vmatprep.subr.mxu0 0.0
      %1485 = vmatpush1.msra.mxu0 0.0
      %1486 = vmatprep.subr.mxu0 0.0
      %1487 = vmatpush1.msra.mxu0 0.0
      %1488 = vmatprep.subr.mxu0 0.0
      %1489 = vmatpush1.msra.mxu0 0.0
      %1490 = vmatprep.subr.mxu0 0.0
      %1491 = vmatpush1.msra.mxu0 0.0
      %1492 = vmatprep.subr.mxu0 0.0
      %1493 = vmatpush1.msra.mxu0 0.0
      %1494 = vmatprep.subr.mxu0 0.0
      %1495 = vmatpush1.msra.mxu0 0.0
      %1496 = vmatprep.subr.mxu0 0.0
      %1497 = vmatpush1.msra.mxu0 0.0
      %1498 = vmatprep.subr.mxu0 0.0
      %1499 = vmatpush1.msra.mxu0 0.0
      %1500 = vmatprep.subr.mxu0 0.0
      %1501 = vmatpush1.msra.mxu0 0.0
      %1502 = vmatprep.mubr.f32.mxu0 0.0
      %1503 = vmatmul.mubr.f32.gmra.mrb[0].mxu0 %v1359
      %v1504 = vpop.f32.mrb[0].mxu0
      %v1505 = vadd.f32 0.0, %v1504
      %v1506 = vpop.f32.mrb[0].mxu0
      %1507 = vdwg.mxu0
      %v1508 = vadd.f32 %v1344, %v1434
      %v1509 = vadd.f32 %v1345, %v1436
      %v1510 = vadd.f32 %v1346, %v1505
      %s1511 = scalar_lea.vmem %s1, 32
      %v1512 = vld [vmem:[%s1511] sm:$0xf]
      %1513 = vrot.lane.b32.xlu0 %v196, 90
      %v1514 = vpop.permute.xlu0 %1513
      %1515 = vrot.lane.b32.xlu0 %v215, 90
      %v1516 = vpop.permute.xlu0 %1515
      %1517 = vrot.lane.b32.xlu0 %v197, 90
      %v1518 = vpop.permute.xlu0 %1517
      %vm1519 = vcmask 736256
      %v1520 = vsel %vm1519, %v1514, %v1516
      %v1521 = vsel %vm1519, %v1516, %v1518
      %v1523 = vsel %vm225, %v1512, 0
      %v1525 = vsel %vm229, %v1520, 0
      %v1527 = vsel %vm229, %v1521, 0
      %v1529 = vsel %vm229, %v1518, 0
      %1531 = vmatprep.subr.mxu0 %v1527
      %1532 = vmatpush1.msra.mxu0 %v1525
      %1533 = vmatprep.subr.mxu0 0.0
      %1534 = vmatpush1.msra.mxu0 0.0
      %1535 = vmatprep.subr.mxu0 0.0
      %1536 = vmatpush1.msra.mxu0 0.0
      %1537 = vmatprep.subr.mxu0 0.0
      %1538 = vmatpush1.msra.mxu0 0.0
      %1539 = vmatprep.subr.mxu0 0.0
      %1540 = vmatpush1.msra.mxu0 0.0
      %1541 = vmatprep.subr.mxu0 0.0
      %1542 = vmatpush1.msra.mxu0 0.0
      %1543 = vmatprep.subr.mxu0 0.0
      %1544 = vmatpush1.msra.mxu0 0.0
      %1545 = vmatprep.subr.mxu0 0.0
      %1546 = vmatpush1.msra.mxu0 0.0
      %1547 = vmatprep.subr.mxu0 0.0
      %1548 = vmatpush1.msra.mxu0 0.0
      %1549 = vmatprep.subr.mxu0 0.0
      %1550 = vmatpush1.msra.mxu0 0.0
      %1551 = vmatprep.subr.mxu0 0.0
      %1552 = vmatpush1.msra.mxu0 0.0
      %1553 = vmatprep.subr.mxu0 0.0
      %1554 = vmatpush1.msra.mxu0 0.0
      %1555 = vmatprep.subr.mxu0 0.0
      %1556 = vmatpush1.msra.mxu0 0.0
      %1557 = vmatprep.subr.mxu0 0.0
      %1558 = vmatpush1.msra.mxu0 0.0
      %1559 = vmatprep.subr.mxu0 0.0
      %1560 = vmatpush1.msra.mxu0 0.0
      %1561 = vmatprep.subr.mxu0 0.0
      %1562 = vmatpush1.msra.mxu0 0.0
      %1563 = vmatprep.subr.mxu0 0.0
      %1564 = vmatpush1.msra.mxu0 0.0
      %1565 = vmatprep.subr.mxu0 0.0
      %1566 = vmatpush1.msra.mxu0 0.0
      %1567 = vmatprep.subr.mxu0 0.0
      %1568 = vmatpush1.msra.mxu0 0.0
      %1569 = vmatprep.subr.mxu0 0.0
      %1570 = vmatpush1.msra.mxu0 0.0
      %1571 = vmatprep.subr.mxu0 0.0
      %1572 = vmatpush1.msra.mxu0 0.0
      %1573 = vmatprep.subr.mxu0 0.0
      %1574 = vmatpush1.msra.mxu0 0.0
      %1575 = vmatprep.subr.mxu0 0.0
      %1576 = vmatpush1.msra.mxu0 0.0
      %1577 = vmatprep.subr.mxu0 0.0
      %1578 = vmatpush1.msra.mxu0 0.0
      %1579 = vmatprep.subr.mxu0 0.0
      %1580 = vmatpush1.msra.mxu0 0.0
      %1581 = vmatprep.subr.mxu0 0.0
      %1582 = vmatpush1.msra.mxu0 0.0
      %1583 = vmatprep.subr.mxu0 0.0
      %1584 = vmatpush1.msra.mxu0 0.0
      %1585 = vmatprep.subr.mxu0 0.0
      %1586 = vmatpush1.msra.mxu0 0.0
      %1587 = vmatprep.subr.mxu0 0.0
      %1588 = vmatpush1.msra.mxu0 0.0
      %1589 = vmatprep.subr.mxu0 0.0
      %1590 = vmatpush1.msra.mxu0 0.0
      %1591 = vmatprep.subr.mxu0 0.0
      %1592 = vmatpush1.msra.mxu0 0.0
      %1593 = vmatprep.subr.mxu0 0.0
      %1594 = vmatpush1.msra.mxu0 0.0
      %1595 = vmatprep.mubr.f32.mxu0 0.0
      %1596 = vmatmul.mubr.f32.gmra.mrb[0].mxu0 %v1523
      %v1597 = vpop.f32.mrb[0].mxu0
      %v1598 = vadd.f32 0.0, %v1597
      %v1599 = vpop.f32.mrb[0].mxu0
      %v1600 = vadd.f32 0.0, %v1599
      %1601 = vdwg.mxu0
      %1602 = vmatprep.subr.mxu0 0.0
      %1603 = vmatpush1.msra.mxu0 %v1529
      %1604 = vmatprep.subr.mxu0 0.0
      %1605 = vmatpush1.msra.mxu0 0.0
      %1606 = vmatprep.subr.mxu0 0.0
      %1607 = vmatpush1.msra.mxu0 0.0
      %1608 = vmatprep.subr.mxu0 0.0
      %1609 = vmatpush1.msra.mxu0 0.0
      %1610 = vmatprep.subr.mxu0 0.0
      %1611 = vmatpush1.msra.mxu0 0.0
      %1612 = vmatprep.subr.mxu0 0.0
      %1613 = vmatpush1.msra.mxu0 0.0
      %1614 = vmatprep.subr.mxu0 0.0
      %1615 = vmatpush1.msra.mxu0 0.0
      %1616 = vmatprep.subr.mxu0 0.0
      %1617 = vmatpush1.msra.mxu0 0.0
      %1618 = vmatprep.subr.mxu0 0.0
      %1619 = vmatpush1.msra.mxu0 0.0
      %1620 = vmatprep.subr.mxu0 0.0
      %1621 = vmatpush1.msra.mxu0 0.0
      %1622 = vmatprep.subr.mxu0 0.0
      %1623 = vmatpush1.msra.mxu0 0.0
      %1624 = vmatprep.subr.mxu0 0.0
      %1625 = vmatpush1.msra.mxu0 0.0
      %1626 = vmatprep.subr.mxu0 0.0
      %1627 = vmatpush1.msra.mxu0 0.0
      %1628 = vmatprep.subr.mxu0 0.0
      %1629 = vmatpush1.msra.mxu0 0.0
      %1630 = vmatprep.subr.mxu0 0.0
      %1631 = vmatpush1.msra.mxu0 0.0
      %1632 = vmatprep.subr.mxu0 0.0
      %1633 = vmatpush1.msra.mxu0 0.0
      %1634 = vmatprep.subr.mxu0 0.0
      %1635 = vmatpush1.msra.mxu0 0.0
      %1636 = vmatprep.subr.mxu0 0.0
      %1637 = vmatpush1.msra.mxu0 0.0
      %1638 = vmatprep.subr.mxu0 0.0
      %1639 = vmatpush1.msra.mxu0 0.0
      %1640 = vmatprep.subr.mxu0 0.0
      %1641 = vmatpush1.msra.mxu0 0.0
      %1642 = vmatprep.subr.mxu0 0.0
      %1643 = vmatpush1.msra.mxu0 0.0
      %1644 = vmatprep.subr.mxu0 0.0
      %1645 = vmatpush1.msra.mxu0 0.0
      %1646 = vmatprep.subr.mxu0 0.0
      %1647 = vmatpush1.msra.mxu0 0.0
      %1648 = vmatprep.subr.mxu0 0.0
      %1649 = vmatpush1.msra.mxu0 0.0
      %1650 = vmatprep.subr.mxu0 0.0
      %1651 = vmatpush1.msra.mxu0 0.0
      %1652 = vmatprep.subr.mxu0 0.0
      %1653 = vmatpush1.msra.mxu0 0.0
      %1654 = vmatprep.subr.mxu0 0.0
      %1655 = vmatpush1.msra.mxu0 0.0
      %1656 = vmatprep.subr.mxu0 0.0
      %1657 = vmatpush1.msra.mxu0 0.0
      %1658 = vmatprep.subr.mxu0 0.0
      %1659 = vmatpush1.msra.mxu0 0.0
      %1660 = vmatprep.subr.mxu0 0.0
      %1661 = vmatpush1.msra.mxu0 0.0
      %1662 = vmatprep.subr.mxu0 0.0
      %1663 = vmatpush1.msra.mxu0 0.0
      %1664 = vmatprep.subr.mxu0 0.0
      %1665 = vmatpush1.msra.mxu0 0.0
      %1666 = vmatprep.mubr.f32.mxu0 0.0
      %1667 = vmatmul.mubr.f32.gmra.mrb[0].mxu0 %v1523
      %v1668 = vpop.f32.mrb[0].mxu0
      %v1669 = vadd.f32 0.0, %v1668
      %v1670 = vpop.f32.mrb[0].mxu0
      %1671 = vdwg.mxu0
      %v1672 = vadd.f32 %v1508, %v1598
      %v1673 = vadd.f32 %v1509, %v1600
      %v1674 = vadd.f32 %v1510, %v1669
      %s1675 = scalar_lea.vmem %s1, 36
      %v1676 = vld [vmem:[%s1675] sm:$0xf]
      %v1679 = vcombine.high %v202, %v202
      %v1681 = vsel %vm225, %v1676, 0
      %v1683 = vsel %vm229, %v202, 0
      %v1685 = vsel %vm229, %v1679, 0
      %v1687 = vsel %vm229, %v203, 0
      %1689 = vmatprep.subr.mxu0 %v1685
      %1690 = vmatpush1.msra.mxu0 %v1683
      %1691 = vmatprep.subr.mxu0 0.0
      %1692 = vmatpush1.msra.mxu0 0.0
      %1693 = vmatprep.subr.mxu0 0.0
      %1694 = vmatpush1.msra.mxu0 0.0
      %1695 = vmatprep.subr.mxu0 0.0
      %1696 = vmatpush1.msra.mxu0 0.0
      %1697 = vmatprep.subr.mxu0 0.0
      %1698 = vmatpush1.msra.mxu0 0.0
      %1699 = vmatprep.subr.mxu0 0.0
      %1700 = vmatpush1.msra.mxu0 0.0
      %1701 = vmatprep.subr.mxu0 0.0
      %1702 = vmatpush1.msra.mxu0 0.0
      %1703 = vmatprep.subr.mxu0 0.0
      %1704 = vmatpush1.msra.mxu0 0.0
      %1705 = vmatprep.subr.mxu0 0.0
      %1706 = vmatpush1.msra.mxu0 0.0
      %1707 = vmatprep.subr.mxu0 0.0
      %1708 = vmatpush1.msra.mxu0 0.0
      %1709 = vmatprep.subr.mxu0 0.0
      %1710 = vmatpush1.msra.mxu0 0.0
      %1711 = vmatprep.subr.mxu0 0.0
      %1712 = vmatpush1.msra.mxu0 0.0
      %1713 = vmatprep.subr.mxu0 0.0
      %1714 = vmatpush1.msra.mxu0 0.0
      %1715 = vmatprep.subr.mxu0 0.0
      %1716 = vmatpush1.msra.mxu0 0.0
      %1717 = vmatprep.subr.mxu0 0.0
      %1718 = vmatpush1.msra.mxu0 0.0
      %1719 = vmatprep.subr.mxu0 0.0
      %1720 = vmatpush1.msra.mxu0 0.0
      %1721 = vmatprep.subr.mxu0 0.0
      %1722 = vmatpush1.msra.mxu0 0.0
      %1723 = vmatprep.subr.mxu0 0.0
      %1724 = vmatpush1.msra.mxu0 0.0
      %1725 = vmatprep.subr.mxu0 0.0
      %1726 = vmatpush1.msra.mxu0 0.0
      %1727 = vmatprep.subr.mxu0 0.0
      %1728 = vmatpush1.msra.mxu0 0.0
      %1729 = vmatprep.subr.mxu0 0.0
      %1730 = vmatpush1.msra.mxu0 0.0
      %1731 = vmatprep.subr.mxu0 0.0
      %1732 = vmatpush1.msra.mxu0 0.0
      %1733 = vmatprep.subr.mxu0 0.0
      %1734 = vmatpush1.msra.mxu0 0.0
      %1735 = vmatprep.subr.mxu0 0.0
      %1736 = vmatpush1.msra.mxu0 0.0
      %1737 = vmatprep.subr.mxu0 0.0
      %1738 = vmatpush1.msra.mxu0 0.0
      %1739 = vmatprep.subr.mxu0 0.0
      %1740 = vmatpush1.msra.mxu0 0.0
      %1741 = vmatprep.subr.mxu0 0.0
      %1742 = vmatpush1.msra.mxu0 0.0
      %1743 = vmatprep.subr.mxu0 0.0
      %1744 = vmatpush1.msra.mxu0 0.0
      %1745 = vmatprep.subr.mxu0 0.0
      %1746 = vmatpush1.msra.mxu0 0.0
      %1747 = vmatprep.subr.mxu0 0.0
      %1748 = vmatpush1.msra.mxu0 0.0
      %1749 = vmatprep.subr.mxu0 0.0
      %1750 = vmatpush1.msra.mxu0 0.0
      %1751 = vmatprep.subr.mxu0 0.0
      %1752 = vmatpush1.msra.mxu0 0.0
      %1753 = vmatprep.mubr.f32.mxu0 0.0
      %1754 = vmatmul.mubr.f32.gmra.mrb[0].mxu0 %v1681
      %v1755 = vpop.f32.mrb[0].mxu0
      %v1756 = vadd.f32 0.0, %v1755
      %v1757 = vpop.f32.mrb[0].mxu0
      %v1758 = vadd.f32 0.0, %v1757
      %1759 = vdwg.mxu0
      %1760 = vmatprep.subr.mxu0 0.0
      %1761 = vmatpush1.msra.mxu0 %v1687
      %1762 = vmatprep.subr.mxu0 0.0
      %1763 = vmatpush1.msra.mxu0 0.0
      %1764 = vmatprep.subr.mxu0 0.0
      %1765 = vmatpush1.msra.mxu0 0.0
      %1766 = vmatprep.subr.mxu0 0.0
      %1767 = vmatpush1.msra.mxu0 0.0
      %1768 = vmatprep.subr.mxu0 0.0
      %1769 = vmatpush1.msra.mxu0 0.0
      %1770 = vmatprep.subr.mxu0 0.0
      %1771 = vmatpush1.msra.mxu0 0.0
      %1772 = vmatprep.subr.mxu0 0.0
      %1773 = vmatpush1.msra.mxu0 0.0
      %1774 = vmatprep.subr.mxu0 0.0
      %1775 = vmatpush1.msra.mxu0 0.0
      %1776 = vmatprep.subr.mxu0 0.0
      %1777 = vmatpush1.msra.mxu0 0.0
      %1778 = vmatprep.subr.mxu0 0.0
      %1779 = vmatpush1.msra.mxu0 0.0
      %1780 = vmatprep.subr.mxu0 0.0
      %1781 = vmatpush1.msra.mxu0 0.0
      %1782 = vmatprep.subr.mxu0 0.0
      %1783 = vmatpush1.msra.mxu0 0.0
      %1784 = vmatprep.subr.mxu0 0.0
      %1785 = vmatpush1.msra.mxu0 0.0
      %1786 = vmatprep.subr.mxu0 0.0
      %1787 = vmatpush1.msra.mxu0 0.0
      %1788 = vmatprep.subr.mxu0 0.0
      %1789 = vmatpush1.msra.mxu0 0.0
      %1790 = vmatprep.subr.mxu0 0.0
      %1791 = vmatpush1.msra.mxu0 0.0
      %1792 = vmatprep.subr.mxu0 0.0
      %1793 = vmatpush1.msra.mxu0 0.0
      %1794 = vmatprep.subr.mxu0 0.0
      %1795 = vmatpush1.msra.mxu0 0.0
      %1796 = vmatprep.subr.mxu0 0.0
      %1797 = vmatpush1.msra.mxu0 0.0
      %1798 = vmatprep.subr.mxu0 0.0
      %1799 = vmatpush1.msra.mxu0 0.0
      %1800 = vmatprep.subr.mxu0 0.0
      %1801 = vmatpush1.msra.mxu0 0.0
      %1802 = vmatprep.subr.mxu0 0.0
      %1803 = vmatpush1.msra.mxu0 0.0
      %1804 = vmatprep.subr.mxu0 0.0
      %1805 = vmatpush1.msra.mxu0 0.0
      %1806 = vmatprep.subr.mxu0 0.0
      %1807 = vmatpush1.msra.mxu0 0.0
      %1808 = vmatprep.subr.mxu0 0.0
      %1809 = vmatpush1.msra.mxu0 0.0
      %1810 = vmatprep.subr.mxu0 0.0
      %1811 = vmatpush1.msra.mxu0 0.0
      %1812 = vmatprep.subr.mxu0 0.0
      %1813 = vmatpush1.msra.mxu0 0.0
      %1814 = vmatprep.subr.mxu0 0.0
      %1815 = vmatpush1.msra.mxu0 0.0
      %1816 = vmatprep.subr.mxu0 0.0
      %1817 = vmatpush1.msra.mxu0 0.0
      %1818 = vmatprep.subr.mxu0 0.0
      %1819 = vmatpush1.msra.mxu0 0.0
      %1820 = vmatprep.subr.mxu0 0.0
      %1821 = vmatpush1.msra.mxu0 0.0
      %1822 = vmatprep.subr.mxu0 0.0
      %1823 = vmatpush1.msra.mxu0 0.0
      %1824 = vmatprep.mubr.f32.mxu0 0.0
      %1825 = vmatmul.mubr.f32.gmra.mrb[0].mxu0 %v1681
      %v1826 = vpop.f32.mrb[0].mxu0
      %v1827 = vadd.f32 0.0, %v1826
      %v1828 = vpop.f32.mrb[0].mxu0
      %1829 = vdwg.mxu0
      %v1830 = vadd.f32 %v1672, %v1756
      %v1831 = vadd.f32 %v1673, %v1758
      %v1832 = vadd.f32 %v1674, %v1827
      %s1833 = scalar_lea.vmem %s1, 40
      %v1834 = vld [vmem:[%s1833] sm:$0xf]
      %1835 = vrot.lane.b32.xlu0 %v202, 127
      %v1836 = vpop.permute.xlu0 %1835
      %1837 = vrot.lane.b32.xlu0 %v1679, 127
      %v1838 = vpop.permute.xlu0 %1837
      %1839 = vrot.lane.b32.xlu0 %v203, 127
      %v1840 = vpop.permute.xlu0 %1839
      %v1841 = vsel %vm222, %v1836, %v1838
      %v1842 = vsel %vm222, %v1838, %v1840
      %v1844 = vsel %vm225, %v1834, 0
      %v1846 = vsel %vm229, %v1841, 0
      %v1848 = vsel %vm229, %v1842, 0
      %v1850 = vsel %vm229, %v1840, 0
      %1852 = vmatprep.subr.mxu0 %v1848
      %1853 = vmatpush1.msra.mxu0 %v1846
      %1854 = vmatprep.subr.mxu0 0.0
      %1855 = vmatpush1.msra.mxu0 0.0
      %1856 = vmatprep.subr.mxu0 0.0
      %1857 = vmatpush1.msra.mxu0 0.0
      %1858 = vmatprep.subr.mxu0 0.0
      %1859 = vmatpush1.msra.mxu0 0.0
      %1860 = vmatprep.subr.mxu0 0.0
      %1861 = vmatpush1.msra.mxu0 0.0
      %1862 = vmatprep.subr.mxu0 0.0
      %1863 = vmatpush1.msra.mxu0 0.0
      %1864 = vmatprep.subr.mxu0 0.0
      %1865 = vmatpush1.msra.mxu0 0.0
      %1866 = vmatprep.subr.mxu0 0.0
      %1867 = vmatpush1.msra.mxu0 0.0
      %1868 = vmatprep.subr.mxu0 0.0
      %1869 = vmatpush1.msra.mxu0 0.0
      %1870 = vmatprep.subr.mxu0 0.0
      %1871 = vmatpush1.msra.mxu0 0.0
      %1872 = vmatprep.subr.mxu0 0.0
      %1873 = vmatpush1.msra.mxu0 0.0
      %1874 = vmatprep.subr.mxu0 0.0
      %1875 = vmatpush1.msra.mxu0 0.0
      %1876 = vmatprep.subr.mxu0 0.0
      %1877 = vmatpush1.msra.mxu0 0.0
      %1878 = vmatprep.subr.mxu0 0.0
      %1879 = vmatpush1.msra.mxu0 0.0
      %1880 = vmatprep.subr.mxu0 0.0
      %1881 = vmatpush1.msra.mxu0 0.0
      %1882 = vmatprep.subr.mxu0 0.0
      %1883 = vmatpush1.msra.mxu0 0.0
      %1884 = vmatprep.subr.mxu0 0.0
      %1885 = vmatpush1.msra.mxu0 0.0
      %1886 = vmatprep.subr.mxu0 0.0
      %1887 = vmatpush1.msra.mxu0 0.0
      %1888 = vmatprep.subr.mxu0 0.0
      %1889 = vmatpush1.msra.mxu0 0.0
      %1890 = vmatprep.subr.mxu0 0.0
      %1891 = vmatpush1.msra.mxu0 0.0
      %1892 = vmatprep.subr.mxu0 0.0
      %1893 = vmatpush1.msra.mxu0 0.0
      %1894 = vmatprep.subr.mxu0 0.0
      %1895 = vmatpush1.msra.mxu0 0.0
      %1896 = vmatprep.subr.mxu0 0.0
      %1897 = vmatpush1.msra.mxu0 0.0
      %1898 = vmatprep.subr.mxu0 0.0
      %1899 = vmatpush1.msra.mxu0 0.0
      %1900 = vmatprep.subr.mxu0 0.0
      %1901 = vmatpush1.msra.mxu0 0.0
      %1902 = vmatprep.subr.mxu0 0.0
      %1903 = vmatpush1.msra.mxu0 0.0
      %1904 = vmatprep.subr.mxu0 0.0
      %1905 = vmatpush1.msra.mxu0 0.0
      %1906 = vmatprep.subr.mxu0 0.0
      %1907 = vmatpush1.msra.mxu0 0.0
      %1908 = vmatprep.subr.mxu0 0.0
      %1909 = vmatpush1.msra.mxu0 0.0
      %1910 = vmatprep.subr.mxu0 0.0
      %1911 = vmatpush1.msra.mxu0 0.0
      %1912 = vmatprep.subr.mxu0 0.0
      %1913 = vmatpush1.msra.mxu0 0.0
      %1914 = vmatprep.subr.mxu0 0.0
      %1915 = vmatpush1.msra.mxu0 0.0
      %1916 = vmatprep.mubr.f32.mxu0 0.0
      %1917 = vmatmul.mubr.f32.gmra.mrb[0].mxu0 %v1844
      %v1918 = vpop.f32.mrb[0].mxu0
      %v1919 = vadd.f32 0.0, %v1918
      %v1920 = vpop.f32.mrb[0].mxu0
      %v1921 = vadd.f32 0.0, %v1920
      %1922 = vdwg.mxu0
      %1923 = vmatprep.subr.mxu0 0.0
      %1924 = vmatpush1.msra.mxu0 %v1850
      %1925 = vmatprep.subr.mxu0 0.0
      %1926 = vmatpush1.msra.mxu0 0.0
      %1927 = vmatprep.subr.mxu0 0.0
      %1928 = vmatpush1.msra.mxu0 0.0
      %1929 = vmatprep.subr.mxu0 0.0
      %1930 = vmatpush1.msra.mxu0 0.0
      %1931 = vmatprep.subr.mxu0 0.0
      %1932 = vmatpush1.msra.mxu0 0.0
      %1933 = vmatprep.subr.mxu0 0.0
      %1934 = vmatpush1.msra.mxu0 0.0
      %1935 = vmatprep.subr.mxu0 0.0
      %1936 = vmatpush1.msra.mxu0 0.0
      %1937 = vmatprep.subr.mxu0 0.0
      %1938 = vmatpush1.msra.mxu0 0.0
      %1939 = vmatprep.subr.mxu0 0.0
      %1940 = vmatpush1.msra.mxu0 0.0
      %1941 = vmatprep.subr.mxu0 0.0
      %1942 = vmatpush1.msra.mxu0 0.0
      %1943 = vmatprep.subr.mxu0 0.0
      %1944 = vmatpush1.msra.mxu0 0.0
      %1945 = vmatprep.subr.mxu0 0.0
      %1946 = vmatpush1.msra.mxu0 0.0
      %1947 = vmatprep.subr.mxu0 0.0
      %1948 = vmatpush1.msra.mxu0 0.0
      %1949 = vmatprep.subr.mxu0 0.0
      %1950 = vmatpush1.msra.mxu0 0.0
      %1951 = vmatprep.subr.mxu0 0.0
      %1952 = vmatpush1.msra.mxu0 0.0
      %1953 = vmatprep.subr.mxu0 0.0
      %1954 = vmatpush1.msra.mxu0 0.0
      %1955 = vmatprep.subr.mxu0 0.0
      %1956 = vmatpush1.msra.mxu0 0.0
      %1957 = vmatprep.subr.mxu0 0.0
      %1958 = vmatpush1.msra.mxu0 0.0
      %1959 = vmatprep.subr.mxu0 0.0
      %1960 = vmatpush1.msra.mxu0 0.0
      %1961 = vmatprep.subr.mxu0 0.0
      %1962 = vmatpush1.msra.mxu0 0.0
      %1963 = vmatprep.subr.mxu0 0.0
      %1964 = vmatpush1.msra.mxu0 0.0
      %1965 = vmatprep.subr.mxu0 0.0
      %1966 = vmatpush1.msra.mxu0 0.0
      %1967 = vmatprep.subr.mxu0 0.0
      %1968 = vmatpush1.msra.mxu0 0.0
      %1969 = vmatprep.subr.mxu0 0.0
      %1970 = vmatpush1.msra.mxu0 0.0
      %1971 = vmatprep.subr.mxu0 0.0
      %1972 = vmatpush1.msra.mxu0 0.0
      %1973 = vmatprep.subr.mxu0 0.0
      %1974 = vmatpush1.msra.mxu0 0.0
      %1975 = vmatprep.subr.mxu0 0.0
      %1976 = vmatpush1.msra.mxu0 0.0
      %1977 = vmatprep.subr.mxu0 0.0
      %1978 = vmatpush1.msra.mxu0 0.0
      %1979 = vmatprep.subr.mxu0 0.0
      %1980 = vmatpush1.msra.mxu0 0.0
      %1981 = vmatprep.subr.mxu0 0.0
      %1982 = vmatpush1.msra.mxu0 0.0
      %1983 = vmatprep.subr.mxu0 0.0
      %1984 = vmatpush1.msra.mxu0 0.0
      %1985 = vmatprep.subr.mxu0 0.0
      %1986 = vmatpush1.msra.mxu0 0.0
      %1987 = vmatprep.mubr.f32.mxu0 0.0
      %1988 = vmatmul.mubr.f32.gmra.mrb[0].mxu0 %v1844
      %v1989 = vpop.f32.mrb[0].mxu0
      %v1990 = vadd.f32 0.0, %v1989
      %v1991 = vpop.f32.mrb[0].mxu0
      %1992 = vdwg.mxu0
      %v1993 = vadd.f32 %v1830, %v1919
      %v1994 = vadd.f32 %v1831, %v1921
      %v1995 = vadd.f32 %v1832, %v1990
      %s1996 = scalar_lea.vmem %s1, 44
      %v1997 = vld [vmem:[%s1996] sm:$0xf]
      %1998 = vrot.lane.b32.xlu0 %v202, 126
      %v1999 = vpop.permute.xlu0 %1998
      %2000 = vrot.lane.b32.xlu0 %v1679, 126
      %v2001 = vpop.permute.xlu0 %2000
      %2002 = vrot.lane.b32.xlu0 %v203, 126
      %v2003 = vpop.permute.xlu0 %2002
      %v2004 = vsel %vm535, %v1999, %v2001
      %v2005 = vsel %vm535, %v2001, %v2003
      %v2007 = vsel %vm225, %v1997, 0
      %v2009 = vsel %vm229, %v2004, 0
      %v2011 = vsel %vm229, %v2005, 0
      %v2013 = vsel %vm229, %v2003, 0
      %2015 = vmatprep.subr.mxu0 %v2011
      %2016 = vmatpush1.msra.mxu0 %v2009
      %2017 = vmatprep.subr.mxu0 0.0
      %2018 = vmatpush1.msra.mxu0 0.0
      %2019 = vmatprep.subr.mxu0 0.0
      %2020 = vmatpush1.msra.mxu0 0.0
      %2021 = vmatprep.subr.mxu0 0.0
      %2022 = vmatpush1.msra.mxu0 0.0
      %2023 = vmatprep.subr.mxu0 0.0
      %2024 = vmatpush1.msra.mxu0 0.0
      %2025 = vmatprep.subr.mxu0 0.0
      %2026 = vmatpush1.msra.mxu0 0.0
      %2027 = vmatprep.subr.mxu0 0.0
      %2028 = vmatpush1.msra.mxu0 0.0
      %2029 = vmatprep.subr.mxu0 0.0
      %2030 = vmatpush1.msra.mxu0 0.0
      %2031 = vmatprep.subr.mxu0 0.0
      %2032 = vmatpush1.msra.mxu0 0.0
      %2033 = vmatprep.subr.mxu0 0.0
      %2034 = vmatpush1.msra.mxu0 0.0
      %2035 = vmatprep.subr.mxu0 0.0
      %2036 = vmatpush1.msra.mxu0 0.0
      %2037 = vmatprep.subr.mxu0 0.0
      %2038 = vmatpush1.msra.mxu0 0.0
      %2039 = vmatprep.subr.mxu0 0.0
      %2040 = vmatpush1.msra.mxu0 0.0
      %2041 = vmatprep.subr.mxu0 0.0
      %2042 = vmatpush1.msra.mxu0 0.0
      %2043 = vmatprep.subr.mxu0 0.0
      %2044 = vmatpush1.msra.mxu0 0.0
      %2045 = vmatprep.subr.mxu0 0.0
      %2046 = vmatpush1.msra.mxu0 0.0
      %2047 = vmatprep.subr.mxu0 0.0
      %2048 = vmatpush1.msra.mxu0 0.0
      %2049 = vmatprep.subr.mxu0 0.0
      %2050 = vmatpush1.msra.mxu0 0.0
      %2051 = vmatprep.subr.mxu0 0.0
      %2052 = vmatpush1.msra.mxu0 0.0
      %2053 = vmatprep.subr.mxu0 0.0
      %2054 = vmatpush1.msra.mxu0 0.0
      %2055 = vmatprep.subr.mxu0 0.0
      %2056 = vmatpush1.msra.mxu0 0.0
      %2057 = vmatprep.subr.mxu0 0.0
      %2058 = vmatpush1.msra.mxu0 0.0
      %2059 = vmatprep.subr.mxu0 0.0
      %2060 = vmatpush1.msra.mxu0 0.0
      %2061 = vmatprep.subr.mxu0 0.0
      %2062 = vmatpush1.msra.mxu0 0.0
      %2063 = vmatprep.subr.mxu0 0.0
      %2064 = vmatpush1.msra.mxu0 0.0
      %2065 = vmatprep.subr.mxu0 0.0
      %2066 = vmatpush1.msra.mxu0 0.0
      %2067 = vmatprep.subr.mxu0 0.0
      %2068 = vmatpush1.msra.mxu0 0.0
      %2069 = vmatprep.subr.mxu0 0.0
      %2070 = vmatpush1.msra.mxu0 0.0
      %2071 = vmatprep.subr.mxu0 0.0
      %2072 = vmatpush1.msra.mxu0 0.0
      %2073 = vmatprep.subr.mxu0 0.0
      %2074 = vmatpush1.msra.mxu0 0.0
      %2075 = vmatprep.subr.mxu0 0.0
      %2076 = vmatpush1.msra.mxu0 0.0
      %2077 = vmatprep.subr.mxu0 0.0
      %2078 = vmatpush1.msra.mxu0 0.0
      %2079 = vmatprep.mubr.f32.mxu0 0.0
      %2080 = vmatmul.mubr.f32.gmra.mrb[0].mxu0 %v2007
      %v2081 = vpop.f32.mrb[0].mxu0
      %v2082 = vadd.f32 0.0, %v2081
      %v2083 = vpop.f32.mrb[0].mxu0
      %v2084 = vadd.f32 0.0, %v2083
      %2085 = vdwg.mxu0
      %2086 = vmatprep.subr.mxu0 0.0
      %2087 = vmatpush1.msra.mxu0 %v2013
      %2088 = vmatprep.subr.mxu0 0.0
      %2089 = vmatpush1.msra.mxu0 0.0
      %2090 = vmatprep.subr.mxu0 0.0
      %2091 = vmatpush1.msra.mxu0 0.0
      %2092 = vmatprep.subr.mxu0 0.0
      %2093 = vmatpush1.msra.mxu0 0.0
      %2094 = vmatprep.subr.mxu0 0.0
      %2095 = vmatpush1.msra.mxu0 0.0
      %2096 = vmatprep.subr.mxu0 0.0
      %2097 = vmatpush1.msra.mxu0 0.0
      %2098 = vmatprep.subr.mxu0 0.0
      %2099 = vmatpush1.msra.mxu0 0.0
      %2100 = vmatprep.subr.mxu0 0.0
      %2101 = vmatpush1.msra.mxu0 0.0
      %2102 = vmatprep.subr.mxu0 0.0
      %2103 = vmatpush1.msra.mxu0 0.0
      %2104 = vmatprep.subr.mxu0 0.0
      %2105 = vmatpush1.msra.mxu0 0.0
      %2106 = vmatprep.subr.mxu0 0.0
      %2107 = vmatpush1.msra.mxu0 0.0
      %2108 = vmatprep.subr.mxu0 0.0
      %2109 = vmatpush1.msra.mxu0 0.0
      %2110 = vmatprep.subr.mxu0 0.0
      %2111 = vmatpush1.msra.mxu0 0.0
      %2112 = vmatprep.subr.mxu0 0.0
      %2113 = vmatpush1.msra.mxu0 0.0
      %2114 = vmatprep.subr.mxu0 0.0
      %2115 = vmatpush1.msra.mxu0 0.0
      %2116 = vmatprep.subr.mxu0 0.0
      %2117 = vmatpush1.msra.mxu0 0.0
      %2118 = vmatprep.subr.mxu0 0.0
      %2119 = vmatpush1.msra.mxu0 0.0
      %2120 = vmatprep.subr.mxu0 0.0
      %2121 = vmatpush1.msra.mxu0 0.0
      %2122 = vmatprep.subr.mxu0 0.0
      %2123 = vmatpush1.msra.mxu0 0.0
      %2124 = vmatprep.subr.mxu0 0.0
      %2125 = vmatpush1.msra.mxu0 0.0
      %2126 = vmatprep.subr.mxu0 0.0
      %2127 = vmatpush1.msra.mxu0 0.0
      %2128 = vmatprep.subr.mxu0 0.0
      %2129 = vmatpush1.msra.mxu0 0.0
      %2130 = vmatprep.subr.mxu0 0.0
      %2131 = vmatpush1.msra.mxu0 0.0
      %2132 = vmatprep.subr.mxu0 0.0
      %2133 = vmatpush1.msra.mxu0 0.0
      %2134 = vmatprep.subr.mxu0 0.0
      %2135 = vmatpush1.msra.mxu0 0.0
      %2136 = vmatprep.subr.mxu0 0.0
      %2137 = vmatpush1.msra.mxu0 0.0
      %2138 = vmatprep.subr.mxu0 0.0
      %2139 = vmatpush1.msra.mxu0 0.0
      %2140 = vmatprep.subr.mxu0 0.0
      %2141 = vmatpush1.msra.mxu0 0.0
      %2142 = vmatprep.subr.mxu0 0.0
      %2143 = vmatpush1.msra.mxu0 0.0
      %2144 = vmatprep.subr.mxu0 0.0
      %2145 = vmatpush1.msra.mxu0 0.0
      %2146 = vmatprep.subr.mxu0 0.0
      %2147 = vmatpush1.msra.mxu0 0.0
      %2148 = vmatprep.subr.mxu0 0.0
      %2149 = vmatpush1.msra.mxu0 0.0
      %2150 = vmatprep.mubr.f32.mxu0 0.0
      %2151 = vmatmul.mubr.f32.gmra.mrb[0].mxu0 %v2007
      %v2152 = vpop.f32.mrb[0].mxu0
      %v2153 = vadd.f32 0.0, %v2152
      %v2154 = vpop.f32.mrb[0].mxu0
      %2155 = vdwg.mxu0
      %v2156 = vadd.f32 %v1993, %v2082
      %v2157 = vadd.f32 %v1994, %v2084
      %v2158 = vadd.f32 %v1995, %v2153
      %s2159 = scalar_lea.vmem %s1, 48
      %v2160 = vld [vmem:[%s2159] sm:$0xf]
      %2161 = vrot.lane.b32.xlu0 %v202, 110
      %v2162 = vpop.permute.xlu0 %2161
      %2163 = vrot.lane.b32.xlu0 %v1679, 110
      %v2164 = vpop.permute.xlu0 %2163
      %2165 = vrot.lane.b32.xlu0 %v203, 110
      %v2166 = vpop.permute.xlu0 %2165
      %v2167 = vsel %vm699, %v2162, %v2164
      %v2168 = vsel %vm699, %v2164, %v2166
      %v2170 = vsel %vm225, %v2160, 0
      %v2172 = vsel %vm229, %v2167, 0
      %v2174 = vsel %vm229, %v2168, 0
      %v2176 = vsel %vm229, %v2166, 0
      %2178 = vmatprep.subr.mxu0 %v2174
      %2179 = vmatpush1.msra.mxu0 %v2172
      %2180 = vmatprep.subr.mxu0 0.0
      %2181 = vmatpush1.msra.mxu0 0.0
      %2182 = vmatprep.subr.mxu0 0.0
      %2183 = vmatpush1.msra.mxu0 0.0
      %2184 = vmatprep.subr.mxu0 0.0
      %2185 = vmatpush1.msra.mxu0 0.0
      %2186 = vmatprep.subr.mxu0 0.0
      %2187 = vmatpush1.msra.mxu0 0.0
      %2188 = vmatprep.subr.mxu0 0.0
      %2189 = vmatpush1.msra.mxu0 0.0
      %2190 = vmatprep.subr.mxu0 0.0
      %2191 = vmatpush1.msra.mxu0 0.0
      %2192 = vmatprep.subr.mxu0 0.0
      %2193 = vmatpush1.msra.mxu0 0.0
      %2194 = vmatprep.subr.mxu0 0.0
      %2195 = vmatpush1.msra.mxu0 0.0
      %2196 = vmatprep.subr.mxu0 0.0
      %2197 = vmatpush1.msra.mxu0 0.0
      %2198 = vmatprep.subr.mxu0 0.0
      %2199 = vmatpush1.msra.mxu0 0.0
      %2200 = vmatprep.subr.mxu0 0.0
      %2201 = vmatpush1.msra.mxu0 0.0
      %2202 = vmatprep.subr.mxu0 0.0
      %2203 = vmatpush1.msra.mxu0 0.0
      %2204 = vmatprep.subr.mxu0 0.0
      %2205 = vmatpush1.msra.mxu0 0.0
      %2206 = vmatprep.subr.mxu0 0.0
      %2207 = vmatpush1.msra.mxu0 0.0
      %2208 = vmatprep.subr.mxu0 0.0
      %2209 = vmatpush1.msra.mxu0 0.0
      %2210 = vmatprep.subr.mxu0 0.0
      %2211 = vmatpush1.msra.mxu0 0.0
      %2212 = vmatprep.subr.mxu0 0.0
      %2213 = vmatpush1.msra.mxu0 0.0
      %2214 = vmatprep.subr.mxu0 0.0
      %2215 = vmatpush1.msra.mxu0 0.0
      %2216 = vmatprep.subr.mxu0 0.0
      %2217 = vmatpush1.msra.mxu0 0.0
      %2218 = vmatprep.subr.mxu0 0.0
      %2219 = vmatpush1.msra.mxu0 0.0
      %2220 = vmatprep.subr.mxu0 0.0
      %2221 = vmatpush1.msra.mxu0 0.0
      %2222 = vmatprep.subr.mxu0 0.0
      %2223 = vmatpush1.msra.mxu0 0.0
      %2224 = vmatprep.subr.mxu0 0.0
      %2225 = vmatpush1.msra.mxu0 0.0
      %2226 = vmatprep.subr.mxu0 0.0
      %2227 = vmatpush1.msra.mxu0 0.0
      %2228 = vmatprep.subr.mxu0 0.0
      %2229 = vmatpush1.msra.mxu0 0.0
      %2230 = vmatprep.subr.mxu0 0.0
      %2231 = vmatpush1.msra.mxu0 0.0
      %2232 = vmatprep.subr.mxu0 0.0
      %2233 = vmatpush1.msra.mxu0 0.0
      %2234 = vmatprep.subr.mxu0 0.0
      %2235 = vmatpush1.msra.mxu0 0.0
      %2236 = vmatprep.subr.mxu0 0.0
      %2237 = vmatpush1.msra.mxu0 0.0
      %2238 = vmatprep.subr.mxu0 0.0
      %2239 = vmatpush1.msra.mxu0 0.0
      %2240 = vmatprep.subr.mxu0 0.0
      %2241 = vmatpush1.msra.mxu0 0.0
      %2242 = vmatprep.mubr.f32.mxu0 0.0
      %2243 = vmatmul.mubr.f32.gmra.mrb[0].mxu0 %v2170
      %v2244 = vpop.f32.mrb[0].mxu0
      %v2245 = vadd.f32 0.0, %v2244
      %v2246 = vpop.f32.mrb[0].mxu0
      %v2247 = vadd.f32 0.0, %v2246
      %2248 = vdwg.mxu0
      %2249 = vmatprep.subr.mxu0 0.0
      %2250 = vmatpush1.msra.mxu0 %v2176
      %2251 = vmatprep.subr.mxu0 0.0
      %2252 = vmatpush1.msra.mxu0 0.0
      %2253 = vmatprep.subr.mxu0 0.0
      %2254 = vmatpush1.msra.mxu0 0.0
      %2255 = vmatprep.subr.mxu0 0.0
      %2256 = vmatpush1.msra.mxu0 0.0
      %2257 = vmatprep.subr.mxu0 0.0
      %2258 = vmatpush1.msra.mxu0 0.0
      %2259 = vmatprep.subr.mxu0 0.0
      %2260 = vmatpush1.msra.mxu0 0.0
      %2261 = vmatprep.subr.mxu0 0.0
      %2262 = vmatpush1.msra.mxu0 0.0
      %2263 = vmatprep.subr.mxu0 0.0
      %2264 = vmatpush1.msra.mxu0 0.0
      %2265 = vmatprep.subr.mxu0 0.0
      %2266 = vmatpush1.msra.mxu0 0.0
      %2267 = vmatprep.subr.mxu0 0.0
      %2268 = vmatpush1.msra.mxu0 0.0
      %2269 = vmatprep.subr.mxu0 0.0
      %2270 = vmatpush1.msra.mxu0 0.0
      %2271 = vmatprep.subr.mxu0 0.0
      %2272 = vmatpush1.msra.mxu0 0.0
      %2273 = vmatprep.subr.mxu0 0.0
      %2274 = vmatpush1.msra.mxu0 0.0
      %2275 = vmatprep.subr.mxu0 0.0
      %2276 = vmatpush1.msra.mxu0 0.0
      %2277 = vmatprep.subr.mxu0 0.0
      %2278 = vmatpush1.msra.mxu0 0.0
      %2279 = vmatprep.subr.mxu0 0.0
      %2280 = vmatpush1.msra.mxu0 0.0
      %2281 = vmatprep.subr.mxu0 0.0
      %2282 = vmatpush1.msra.mxu0 0.0
      %2283 = vmatprep.subr.mxu0 0.0
      %2284 = vmatpush1.msra.mxu0 0.0
      %2285 = vmatprep.subr.mxu0 0.0
      %2286 = vmatpush1.msra.mxu0 0.0
      %2287 = vmatprep.subr.mxu0 0.0
      %2288 = vmatpush1.msra.mxu0 0.0
      %2289 = vmatprep.subr.mxu0 0.0
      %2290 = vmatpush1.msra.mxu0 0.0
      %2291 = vmatprep.subr.mxu0 0.0
      %2292 = vmatpush1.msra.mxu0 0.0
      %2293 = vmatprep.subr.mxu0 0.0
      %2294 = vmatpush1.msra.mxu0 0.0
      %2295 = vmatprep.subr.mxu0 0.0
      %2296 = vmatpush1.msra.mxu0 0.0
      %2297 = vmatprep.subr.mxu0 0.0
      %2298 = vmatpush1.msra.mxu0 0.0
      %2299 = vmatprep.subr.mxu0 0.0
      %2300 = vmatpush1.msra.mxu0 0.0
      %2301 = vmatprep.subr.mxu0 0.0
      %2302 = vmatpush1.msra.mxu0 0.0
      %2303 = vmatprep.subr.mxu0 0.0
      %2304 = vmatpush1.msra.mxu0 0.0
      %2305 = vmatprep.subr.mxu0 0.0
      %2306 = vmatpush1.msra.mxu0 0.0
      %2307 = vmatprep.subr.mxu0 0.0
      %2308 = vmatpush1.msra.mxu0 0.0
      %2309 = vmatprep.subr.mxu0 0.0
      %2310 = vmatpush1.msra.mxu0 0.0
      %2311 = vmatprep.subr.mxu0 0.0
      %2312 = vmatpush1.msra.mxu0 0.0
      %2313 = vmatprep.mubr.f32.mxu0 0.0
      %2314 = vmatmul.mubr.f32.gmra.mrb[0].mxu0 %v2170
      %v2315 = vpop.f32.mrb[0].mxu0
      %v2316 = vadd.f32 0.0, %v2315
      %v2317 = vpop.f32.mrb[0].mxu0
      %2318 = vdwg.mxu0
      %v2319 = vadd.f32 %v2156, %v2245
      %v2320 = vadd.f32 %v2157, %v2247
      %v2321 = vadd.f32 %v2158, %v2316
      %s2322 = scalar_lea.vmem %s1, 52
      %v2323 = vld [vmem:[%s2322] sm:$0xf]
      %2324 = vrot.lane.b32.xlu0 %v202, 109
      %v2325 = vpop.permute.xlu0 %2324
      %2326 = vrot.lane.b32.xlu0 %v1679, 109
      %v2327 = vpop.permute.xlu0 %2326
      %2328 = vrot.lane.b32.xlu0 %v203, 109
      %v2329 = vpop.permute.xlu0 %2328
      %v2330 = vsel %vm863, %v2325, %v2327
      %v2331 = vsel %vm863, %v2327, %v2329
      %v2333 = vsel %vm225, %v2323, 0
      %v2335 = vsel %vm229, %v2330, 0
      %v2337 = vsel %vm229, %v2331, 0
      %v2339 = vsel %vm229, %v2329, 0
      %2341 = vmatprep.subr.mxu0 %v2337
      %2342 = vmatpush1.msra.mxu0 %v2335
      %2343 = vmatprep.subr.mxu0 0.0
      %2344 = vmatpush1.msra.mxu0 0.0
      %2345 = vmatprep.subr.mxu0 0.0
      %2346 = vmatpush1.msra.mxu0 0.0
      %2347 = vmatprep.subr.mxu0 0.0
      %2348 = vmatpush1.msra.mxu0 0.0
      %2349 = vmatprep.subr.mxu0 0.0
      %2350 = vmatpush1.msra.mxu0 0.0
      %2351 = vmatprep.subr.mxu0 0.0
      %2352 = vmatpush1.msra.mxu0 0.0
      %2353 = vmatprep.subr.mxu0 0.0
      %2354 = vmatpush1.msra.mxu0 0.0
      %2355 = vmatprep.subr.mxu0 0.0
      %2356 = vmatpush1.msra.mxu0 0.0
      %2357 = vmatprep.subr.mxu0 0.0
      %2358 = vmatpush1.msra.mxu0 0.0
      %2359 = vmatprep.subr.mxu0 0.0
      %2360 = vmatpush1.msra.mxu0 0.0
      %2361 = vmatprep.subr.mxu0 0.0
      %2362 = vmatpush1.msra.mxu0 0.0
      %2363 = vmatprep.subr.mxu0 0.0
      %2364 = vmatpush1.msra.mxu0 0.0
      %2365 = vmatprep.subr.mxu0 0.0
      %2366 = vmatpush1.msra.mxu0 0.0
      %2367 = vmatprep.subr.mxu0 0.0
      %2368 = vmatpush1.msra.mxu0 0.0
      %2369 = vmatprep.subr.mxu0 0.0
      %2370 = vmatpush1.msra.mxu0 0.0
      %2371 = vmatprep.subr.mxu0 0.0
      %2372 = vmatpush1.msra.mxu0 0.0
      %2373 = vmatprep.subr.mxu0 0.0
      %2374 = vmatpush1.msra.mxu0 0.0
      %2375 = vmatprep.subr.mxu0 0.0
      %2376 = vmatpush1.msra.mxu0 0.0
      %2377 = vmatprep.subr.mxu0 0.0
      %2378 = vmatpush1.msra.mxu0 0.0
      %2379 = vmatprep.subr.mxu0 0.0
      %2380 = vmatpush1.msra.mxu0 0.0
      %2381 = vmatprep.subr.mxu0 0.0
      %2382 = vmatpush1.msra.mxu0 0.0
      %2383 = vmatprep.subr.mxu0 0.0
      %2384 = vmatpush1.msra.mxu0 0.0
      %2385 = vmatprep.subr.mxu0 0.0
      %2386 = vmatpush1.msra.mxu0 0.0
      %2387 = vmatprep.subr.mxu0 0.0
      %2388 = vmatpush1.msra.mxu0 0.0
      %2389 = vmatprep.subr.mxu0 0.0
      %2390 = vmatpush1.msra.mxu0 0.0
      %2391 = vmatprep.subr.mxu0 0.0
      %2392 = vmatpush1.msra.mxu0 0.0
      %2393 = vmatprep.subr.mxu0 0.0
      %2394 = vmatpush1.msra.mxu0 0.0
      %2395 = vmatprep.subr.mxu0 0.0
      %2396 = vmatpush1.msra.mxu0 0.0
      %2397 = vmatprep.subr.mxu0 0.0
      %2398 = vmatpush1.msra.mxu0 0.0
      %2399 = vmatprep.subr.mxu0 0.0
      %2400 = vmatpush1.msra.mxu0 0.0
      %2401 = vmatprep.subr.mxu0 0.0
      %2402 = vmatpush1.msra.mxu0 0.0
      %2403 = vmatprep.subr.mxu0 0.0
      %2404 = vmatpush1.msra.mxu0 0.0
      %2405 = vmatprep.mubr.f32.mxu0 0.0
      %2406 = vmatmul.mubr.f32.gmra.mrb[0].mxu0 %v2333
      %v2407 = vpop.f32.mrb[0].mxu0
      %v2408 = vadd.f32 0.0, %v2407
      %v2409 = vpop.f32.mrb[0].mxu0
      %v2410 = vadd.f32 0.0, %v2409
      %2411 = vdwg.mxu0
      %2412 = vmatprep.subr.mxu0 0.0
      %2413 = vmatpush1.msra.mxu0 %v2339
      %2414 = vmatprep.subr.mxu0 0.0
      %2415 = vmatpush1.msra.mxu0 0.0
      %2416 = vmatprep.subr.mxu0 0.0
      %2417 = vmatpush1.msra.mxu0 0.0
      %2418 = vmatprep.subr.mxu0 0.0
      %2419 = vmatpush1.msra.mxu0 0.0
      %2420 = vmatprep.subr.mxu0 0.0
      %2421 = vmatpush1.msra.mxu0 0.0
      %2422 = vmatprep.subr.mxu0 0.0
      %2423 = vmatpush1.msra.mxu0 0.0
      %2424 = vmatprep.subr.mxu0 0.0
      %2425 = vmatpush1.msra.mxu0 0.0
      %2426 = vmatprep.subr.mxu0 0.0
      %2427 = vmatpush1.msra.mxu0 0.0
      %2428 = vmatprep.subr.mxu0 0.0
      %2429 = vmatpush1.msra.mxu0 0.0
      %2430 = vmatprep.subr.mxu0 0.0
      %2431 = vmatpush1.msra.mxu0 0.0
      %2432 = vmatprep.subr.mxu0 0.0
      %2433 = vmatpush1.msra.mxu0 0.0
      %2434 = vmatprep.subr.mxu0 0.0
      %2435 = vmatpush1.msra.mxu0 0.0
      %2436 = vmatprep.subr.mxu0 0.0
      %2437 = vmatpush1.msra.mxu0 0.0
      %2438 = vmatprep.subr.mxu0 0.0
      %2439 = vmatpush1.msra.mxu0 0.0
      %2440 = vmatprep.subr.mxu0 0.0
      %2441 = vmatpush1.msra.mxu0 0.0
      %2442 = vmatprep.subr.mxu0 0.0
      %2443 = vmatpush1.msra.mxu0 0.0
      %2444 = vmatprep.subr.mxu0 0.0
      %2445 = vmatpush1.msra.mxu0 0.0
      %2446 = vmatprep.subr.mxu0 0.0
      %2447 = vmatpush1.msra.mxu0 0.0
      %2448 = vmatprep.subr.mxu0 0.0
      %2449 = vmatpush1.msra.mxu0 0.0
      %2450 = vmatprep.subr.mxu0 0.0
      %2451 = vmatpush1.msra.mxu0 0.0
      %2452 = vmatprep.subr.mxu0 0.0
      %2453 = vmatpush1.msra.mxu0 0.0
      %2454 = vmatprep.subr.mxu0 0.0
      %2455 = vmatpush1.msra.mxu0 0.0
      %2456 = vmatprep.subr.mxu0 0.0
      %2457 = vmatpush1.msra.mxu0 0.0
      %2458 = vmatprep.subr.mxu0 0.0
      %2459 = vmatpush1.msra.mxu0 0.0
      %2460 = vmatprep.subr.mxu0 0.0
      %2461 = vmatpush1.msra.mxu0 0.0
      %2462 = vmatprep.subr.mxu0 0.0
      %2463 = vmatpush1.msra.mxu0 0.0
      %2464 = vmatprep.subr.mxu0 0.0
      %2465 = vmatpush1.msra.mxu0 0.0
      %2466 = vmatprep.subr.mxu0 0.0
      %2467 = vmatpush1.msra.mxu0 0.0
      %2468 = vmatprep.subr.mxu0 0.0
      %2469 = vmatpush1.msra.mxu0 0.0
      %2470 = vmatprep.subr.mxu0 0.0
      %2471 = vmatpush1.msra.mxu0 0.0
      %2472 = vmatprep.subr.mxu0 0.0
      %2473 = vmatpush1.msra.mxu0 0.0
      %2474 = vmatprep.subr.mxu0 0.0
      %2475 = vmatpush1.msra.mxu0 0.0
      %2476 = vmatprep.mubr.f32.mxu0 0.0
      %2477 = vmatmul.mubr.f32.gmra.mrb[0].mxu0 %v2333
      %v2478 = vpop.f32.mrb[0].mxu0
      %v2479 = vadd.f32 0.0, %v2478
      %v2480 = vpop.f32.mrb[0].mxu0
      %2481 = vdwg.mxu0
      %v2482 = vadd.f32 %v2319, %v2408
      %v2483 = vadd.f32 %v2320, %v2410
      %v2484 = vadd.f32 %v2321, %v2479
      %s2485 = scalar_lea.vmem %s1, 56
      %v2486 = vld [vmem:[%s2485] sm:$0xf]
      %2487 = vrot.lane.b32.xlu0 %v202, 108
      %v2488 = vpop.permute.xlu0 %2487
      %2489 = vrot.lane.b32.xlu0 %v1679, 108
      %v2490 = vpop.permute.xlu0 %2489
      %2491 = vrot.lane.b32.xlu0 %v203, 108
      %v2492 = vpop.permute.xlu0 %2491
      %v2493 = vsel %vm1027, %v2488, %v2490
      %v2494 = vsel %vm1027, %v2490, %v2492
      %v2496 = vsel %vm225, %v2486, 0
      %v2498 = vsel %vm229, %v2493, 0
      %v2500 = vsel %vm229, %v2494, 0
      %v2502 = vsel %vm229, %v2492, 0
      %2504 = vmatprep.subr.mxu0 %v2500
      %2505 = vmatpush1.msra.mxu0 %v2498
      %2506 = vmatprep.subr.mxu0 0.0
      %2507 = vmatpush1.msra.mxu0 0.0
      %2508 = vmatprep.subr.mxu0 0.0
      %2509 = vmatpush1.msra.mxu0 0.0
      %2510 = vmatprep.subr.mxu0 0.0
      %2511 = vmatpush1.msra.mxu0 0.0
      %2512 = vmatprep.subr.mxu0 0.0
      %2513 = vmatpush1.msra.mxu0 0.0
      %2514 = vmatprep.subr.mxu0 0.0
      %2515 = vmatpush1.msra.mxu0 0.0
      %2516 = vmatprep.subr.mxu0 0.0
      %2517 = vmatpush1.msra.mxu0 0.0
      %2518 = vmatprep.subr.mxu0 0.0
      %2519 = vmatpush1.msra.mxu0 0.0
      %2520 = vmatprep.subr.mxu0 0.0
      %2521 = vmatpush1.msra.mxu0 0.0
      %2522 = vmatprep.subr.mxu0 0.0
      %2523 = vmatpush1.msra.mxu0 0.0
      %2524 = vmatprep.subr.mxu0 0.0
      %2525 = vmatpush1.msra.mxu0 0.0
      %2526 = vmatprep.subr.mxu0 0.0
      %2527 = vmatpush1.msra.mxu0 0.0
      %2528 = vmatprep.subr.mxu0 0.0
      %2529 = vmatpush1.msra.mxu0 0.0
      %2530 = vmatprep.subr.mxu0 0.0
      %2531 = vmatpush1.msra.mxu0 0.0
      %2532 = vmatprep.subr.mxu0 0.0
      %2533 = vmatpush1.msra.mxu0 0.0
      %2534 = vmatprep.subr.mxu0 0.0
      %2535 = vmatpush1.msra.mxu0 0.0
      %2536 = vmatprep.subr.mxu0 0.0
      %2537 = vmatpush1.msra.mxu0 0.0
      %2538 = vmatprep.subr.mxu0 0.0
      %2539 = vmatpush1.msra.mxu0 0.0
      %2540 = vmatprep.subr.mxu0 0.0
      %2541 = vmatpush1.msra.mxu0 0.0
      %2542 = vmatprep.subr.mxu0 0.0
      %2543 = vmatpush1.msra.mxu0 0.0
      %2544 = vmatprep.subr.mxu0 0.0
      %2545 = vmatpush1.msra.mxu0 0.0
      %2546 = vmatprep.subr.mxu0 0.0
      %2547 = vmatpush1.msra.mxu0 0.0
      %2548 = vmatprep.subr.mxu0 0.0
      %2549 = vmatpush1.msra.mxu0 0.0
      %2550 = vmatprep.subr.mxu0 0.0
      %2551 = vmatpush1.msra.mxu0 0.0
      %2552 = vmatprep.subr.mxu0 0.0
      %2553 = vmatpush1.msra.mxu0 0.0
      %2554 = vmatprep.subr.mxu0 0.0
      %2555 = vmatpush1.msra.mxu0 0.0
      %2556 = vmatprep.subr.mxu0 0.0
      %2557 = vmatpush1.msra.mxu0 0.0
      %2558 = vmatprep.subr.mxu0 0.0
      %2559 = vmatpush1.msra.mxu0 0.0
      %2560 = vmatprep.subr.mxu0 0.0
      %2561 = vmatpush1.msra.mxu0 0.0
      %2562 = vmatprep.subr.mxu0 0.0
      %2563 = vmatpush1.msra.mxu0 0.0
      %2564 = vmatprep.subr.mxu0 0.0
      %2565 = vmatpush1.msra.mxu0 0.0
      %2566 = vmatprep.subr.mxu0 0.0
      %2567 = vmatpush1.msra.mxu0 0.0
      %2568 = vmatprep.mubr.f32.mxu0 0.0
      %2569 = vmatmul.mubr.f32.gmra.mrb[0].mxu0 %v2496
      %v2570 = vpop.f32.mrb[0].mxu0
      %v2571 = vadd.f32 0.0, %v2570
      %v2572 = vpop.f32.mrb[0].mxu0
      %v2573 = vadd.f32 0.0, %v2572
      %2574 = vdwg.mxu0
      %2575 = vmatprep.subr.mxu0 0.0
      %2576 = vmatpush1.msra.mxu0 %v2502
      %2577 = vmatprep.subr.mxu0 0.0
      %2578 = vmatpush1.msra.mxu0 0.0
      %2579 = vmatprep.subr.mxu0 0.0
      %2580 = vmatpush1.msra.mxu0 0.0
      %2581 = vmatprep.subr.mxu0 0.0
      %2582 = vmatpush1.msra.mxu0 0.0
      %2583 = vmatprep.subr.mxu0 0.0
      %2584 = vmatpush1.msra.mxu0 0.0
      %2585 = vmatprep.subr.mxu0 0.0
      %2586 = vmatpush1.msra.mxu0 0.0
      %2587 = vmatprep.subr.mxu0 0.0
      %2588 = vmatpush1.msra.mxu0 0.0
      %2589 = vmatprep.subr.mxu0 0.0
      %2590 = vmatpush1.msra.mxu0 0.0
      %2591 = vmatprep.subr.mxu0 0.0
      %2592 = vmatpush1.msra.mxu0 0.0
      %2593 = vmatprep.subr.mxu0 0.0
      %2594 = vmatpush1.msra.mxu0 0.0
      %2595 = vmatprep.subr.mxu0 0.0
      %2596 = vmatpush1.msra.mxu0 0.0
      %2597 = vmatprep.subr.mxu0 0.0
      %2598 = vmatpush1.msra.mxu0 0.0
      %2599 = vmatprep.subr.mxu0 0.0
      %2600 = vmatpush1.msra.mxu0 0.0
      %2601 = vmatprep.subr.mxu0 0.0
      %2602 = vmatpush1.msra.mxu0 0.0
      %2603 = vmatprep.subr.mxu0 0.0
      %2604 = vmatpush1.msra.mxu0 0.0
      %2605 = vmatprep.subr.mxu0 0.0
      %2606 = vmatpush1.msra.mxu0 0.0
      %2607 = vmatprep.subr.mxu0 0.0
      %2608 = vmatpush1.msra.mxu0 0.0
      %2609 = vmatprep.subr.mxu0 0.0
      %2610 = vmatpush1.msra.mxu0 0.0
      %2611 = vmatprep.subr.mxu0 0.0
      %2612 = vmatpush1.msra.mxu0 0.0
      %2613 = vmatprep.subr.mxu0 0.0
      %2614 = vmatpush1.msra.mxu0 0.0
      %2615 = vmatprep.subr.mxu0 0.0
      %2616 = vmatpush1.msra.mxu0 0.0
      %2617 = vmatprep.subr.mxu0 0.0
      %2618 = vmatpush1.msra.mxu0 0.0
      %2619 = vmatprep.subr.mxu0 0.0
      %2620 = vmatpush1.msra.mxu0 0.0
      %2621 = vmatprep.subr.mxu0 0.0
      %2622 = vmatpush1.msra.mxu0 0.0
      %2623 = vmatprep.subr.mxu0 0.0
      %2624 = vmatpush1.msra.mxu0 0.0
      %2625 = vmatprep.subr.mxu0 0.0
      %2626 = vmatpush1.msra.mxu0 0.0
      %2627 = vmatprep.subr.mxu0 0.0
      %2628 = vmatpush1.msra.mxu0 0.0
      %2629 = vmatprep.subr.mxu0 0.0
      %2630 = vmatpush1.msra.mxu0 0.0
      %2631 = vmatprep.subr.mxu0 0.0
      %2632 = vmatpush1.msra.mxu0 0.0
      %2633 = vmatprep.subr.mxu0 0.0
      %2634 = vmatpush1.msra.mxu0 0.0
      %2635 = vmatprep.subr.mxu0 0.0
      %2636 = vmatpush1.msra.mxu0 0.0
      %2637 = vmatprep.subr.mxu0 0.0
      %2638 = vmatpush1.msra.mxu0 0.0
      %2639 = vmatprep.mubr.f32.mxu0 0.0
      %2640 = vmatmul.mubr.f32.gmra.mrb[0].mxu0 %v2496
      %v2641 = vpop.f32.mrb[0].mxu0
      %v2642 = vadd.f32 0.0, %v2641
      %v2643 = vpop.f32.mrb[0].mxu0
      %2644 = vdwg.mxu0
      %v2645 = vadd.f32 %v2482, %v2571
      %v2646 = vadd.f32 %v2483, %v2573
      %v2647 = vadd.f32 %v2484, %v2642
      %s2648 = scalar_lea.vmem %s1, 60
      %v2649 = vld [vmem:[%s2648] sm:$0xf]
      %2650 = vrot.lane.b32.xlu0 %v202, 92
      %v2651 = vpop.permute.xlu0 %2650
      %2652 = vrot.lane.b32.xlu0 %v1679, 92
      %v2653 = vpop.permute.xlu0 %2652
      %2654 = vrot.lane.b32.xlu0 %v203, 92
      %v2655 = vpop.permute.xlu0 %2654
      %v2656 = vsel %vm1191, %v2651, %v2653
      %v2657 = vsel %vm1191, %v2653, %v2655
      %v2659 = vsel %vm225, %v2649, 0
      %v2661 = vsel %vm229, %v2656, 0
      %v2663 = vsel %vm229, %v2657, 0
      %v2665 = vsel %vm229, %v2655, 0
      %2667 = vmatprep.subr.mxu0 %v2663
      %2668 = vmatpush1.msra.mxu0 %v2661
      %2669 = vmatprep.subr.mxu0 0.0
      %2670 = vmatpush1.msra.mxu0 0.0
      %2671 = vmatprep.subr.mxu0 0.0
      %2672 = vmatpush1.msra.mxu0 0.0
      %2673 = vmatprep.subr.mxu0 0.0
      %2674 = vmatpush1.msra.mxu0 0.0
      %2675 = vmatprep.subr.mxu0 0.0
      %2676 = vmatpush1.msra.mxu0 0.0
      %2677 = vmatprep.subr.mxu0 0.0
      %2678 = vmatpush1.msra.mxu0 0.0
      %2679 = vmatprep.subr.mxu0 0.0
      %2680 = vmatpush1.msra.mxu0 0.0
      %2681 = vmatprep.subr.mxu0 0.0
      %2682 = vmatpush1.msra.mxu0 0.0
      %2683 = vmatprep.subr.mxu0 0.0
      %2684 = vmatpush1.msra.mxu0 0.0
      %2685 = vmatprep.subr.mxu0 0.0
      %2686 = vmatpush1.msra.mxu0 0.0
      %2687 = vmatprep.subr.mxu0 0.0
      %2688 = vmatpush1.msra.mxu0 0.0
      %2689 = vmatprep.subr.mxu0 0.0
      %2690 = vmatpush1.msra.mxu0 0.0
      %2691 = vmatprep.subr.mxu0 0.0
      %2692 = vmatpush1.msra.mxu0 0.0
      %2693 = vmatprep.subr.mxu0 0.0
      %2694 = vmatpush1.msra.mxu0 0.0
      %2695 = vmatprep.subr.mxu0 0.0
      %2696 = vmatpush1.msra.mxu0 0.0
      %2697 = vmatprep.subr.mxu0 0.0
      %2698 = vmatpush1.msra.mxu0 0.0
      %2699 = vmatprep.subr.mxu0 0.0
      %2700 = vmatpush1.msra.mxu0 0.0
      %2701 = vmatprep.subr.mxu0 0.0
      %2702 = vmatpush1.msra.mxu0 0.0
      %2703 = vmatprep.subr.mxu0 0.0
      %2704 = vmatpush1.msra.mxu0 0.0
      %2705 = vmatprep.subr.mxu0 0.0
      %2706 = vmatpush1.msra.mxu0 0.0
      %2707 = vmatprep.subr.mxu0 0.0
      %2708 = vmatpush1.msra.mxu0 0.0
      %2709 = vmatprep.subr.mxu0 0.0
      %2710 = vmatpush1.msra.mxu0 0.0
      %2711 = vmatprep.subr.mxu0 0.0
      %2712 = vmatpush1.msra.mxu0 0.0
      %2713 = vmatprep.subr.mxu0 0.0
      %2714 = vmatpush1.msra.mxu0 0.0
      %2715 = vmatprep.subr.mxu0 0.0
      %2716 = vmatpush1.msra.mxu0 0.0
      %2717 = vmatprep.subr.mxu0 0.0
      %2718 = vmatpush1.msra.mxu0 0.0
      %2719 = vmatprep.subr.mxu0 0.0
      %2720 = vmatpush1.msra.mxu0 0.0
      %2721 = vmatprep.subr.mxu0 0.0
      %2722 = vmatpush1.msra.mxu0 0.0
      %2723 = vmatprep.subr.mxu0 0.0
      %2724 = vmatpush1.msra.mxu0 0.0
      %2725 = vmatprep.subr.mxu0 0.0
      %2726 = vmatpush1.msra.mxu0 0.0
      %2727 = vmatprep.subr.mxu0 0.0
      %2728 = vmatpush1.msra.mxu0 0.0
      %2729 = vmatprep.subr.mxu0 0.0
      %2730 = vmatpush1.msra.mxu0 0.0
      %2731 = vmatprep.mubr.f32.mxu0 0.0
      %2732 = vmatmul.mubr.f32.gmra.mrb[0].mxu0 %v2659
      %v2733 = vpop.f32.mrb[0].mxu0
      %v2734 = vadd.f32 0.0, %v2733
      %v2735 = vpop.f32.mrb[0].mxu0
      %v2736 = vadd.f32 0.0, %v2735
      %2737 = vdwg.mxu0
      %2738 = vmatprep.subr.mxu0 0.0
      %2739 = vmatpush1.msra.mxu0 %v2665
      %2740 = vmatprep.subr.mxu0 0.0
      %2741 = vmatpush1.msra.mxu0 0.0
      %2742 = vmatprep.subr.mxu0 0.0
      %2743 = vmatpush1.msra.mxu0 0.0
      %2744 = vmatprep.subr.mxu0 0.0
      %2745 = vmatpush1.msra.mxu0 0.0
      %2746 = vmatprep.subr.mxu0 0.0
      %2747 = vmatpush1.msra.mxu0 0.0
      %2748 = vmatprep.subr.mxu0 0.0
      %2749 = vmatpush1.msra.mxu0 0.0
      %2750 = vmatprep.subr.mxu0 0.0
      %2751 = vmatpush1.msra.mxu0 0.0
      %2752 = vmatprep.subr.mxu0 0.0
      %2753 = vmatpush1.msra.mxu0 0.0
      %2754 = vmatprep.subr.mxu0 0.0
      %2755 = vmatpush1.msra.mxu0 0.0
      %2756 = vmatprep.subr.mxu0 0.0
      %2757 = vmatpush1.msra.mxu0 0.0
      %2758 = vmatprep.subr.mxu0 0.0
      %2759 = vmatpush1.msra.mxu0 0.0
      %2760 = vmatprep.subr.mxu0 0.0
      %2761 = vmatpush1.msra.mxu0 0.0
      %2762 = vmatprep.subr.mxu0 0.0
      %2763 = vmatpush1.msra.mxu0 0.0
      %2764 = vmatprep.subr.mxu0 0.0
      %2765 = vmatpush1.msra.mxu0 0.0
      %2766 = vmatprep.subr.mxu0 0.0
      %2767 = vmatpush1.msra.mxu0 0.0
      %2768 = vmatprep.subr.mxu0 0.0
      %2769 = vmatpush1.msra.mxu0 0.0
      %2770 = vmatprep.subr.mxu0 0.0
      %2771 = vmatpush1.msra.mxu0 0.0
      %2772 = vmatprep.subr.mxu0 0.0
      %2773 = vmatpush1.msra.mxu0 0.0
      %2774 = vmatprep.subr.mxu0 0.0
      %2775 = vmatpush1.msra.mxu0 0.0
      %2776 = vmatprep.subr.mxu0 0.0
      %2777 = vmatpush1.msra.mxu0 0.0
      %2778 = vmatprep.subr.mxu0 0.0
      %2779 = vmatpush1.msra.mxu0 0.0
      %2780 = vmatprep.subr.mxu0 0.0
      %2781 = vmatpush1.msra.mxu0 0.0
      %2782 = vmatprep.subr.mxu0 0.0
      %2783 = vmatpush1.msra.mxu0 0.0
      %2784 = vmatprep.subr.mxu0 0.0
      %2785 = vmatpush1.msra.mxu0 0.0
      %2786 = vmatprep.subr.mxu0 0.0
      %2787 = vmatpush1.msra.mxu0 0.0
      %2788 = vmatprep.subr.mxu0 0.0
      %2789 = vmatpush1.msra.mxu0 0.0
      %2790 = vmatprep.subr.mxu0 0.0
      %2791 = vmatpush1.msra.mxu0 0.0
      %2792 = vmatprep.subr.mxu0 0.0
      %2793 = vmatpush1.msra.mxu0 0.0
      %2794 = vmatprep.subr.mxu0 0.0
      %2795 = vmatpush1.msra.mxu0 0.0
      %2796 = vmatprep.subr.mxu0 0.0
      %2797 = vmatpush1.msra.mxu0 0.0
      %2798 = vmatprep.subr.mxu0 0.0
      %2799 = vmatpush1.msra.mxu0 0.0
      %2800 = vmatprep.subr.mxu0 0.0
      %2801 = vmatpush1.msra.mxu0 0.0
      %2802 = vmatprep.mubr.f32.mxu0 0.0
      %2803 = vmatmul.mubr.f32.gmra.mrb[0].mxu0 %v2659
      %v2804 = vpop.f32.mrb[0].mxu0
      %v2805 = vadd.f32 0.0, %v2804
      %v2806 = vpop.f32.mrb[0].mxu0
      %2807 = vdwg.mxu0
      %v2808 = vadd.f32 %v2645, %v2734
      %v2809 = vadd.f32 %v2646, %v2736
      %v2810 = vadd.f32 %v2647, %v2805
      %s2811 = scalar_lea.vmem %s1, 64
      %v2812 = vld [vmem:[%s2811] sm:$0xf]
      %2813 = vrot.lane.b32.xlu0 %v202, 91
      %v2814 = vpop.permute.xlu0 %2813
      %2815 = vrot.lane.b32.xlu0 %v1679, 91
      %v2816 = vpop.permute.xlu0 %2815
      %2817 = vrot.lane.b32.xlu0 %v203, 91
      %v2818 = vpop.permute.xlu0 %2817
      %v2819 = vsel %vm1355, %v2814, %v2816
      %v2820 = vsel %vm1355, %v2816, %v2818
      %v2822 = vsel %vm225, %v2812, 0
      %v2824 = vsel %vm229, %v2819, 0
      %v2826 = vsel %vm229, %v2820, 0
      %v2828 = vsel %vm229, %v2818, 0
      %2830 = vmatprep.subr.mxu0 %v2826
      %2831 = vmatpush1.msra.mxu0 %v2824
      %2832 = vmatprep.subr.mxu0 0.0
      %2833 = vmatpush1.msra.mxu0 0.0
      %2834 = vmatprep.subr.mxu0 0.0
      %2835 = vmatpush1.msra.mxu0 0.0
      %2836 = vmatprep.subr.mxu0 0.0
      %2837 = vmatpush1.msra.mxu0 0.0
      %2838 = vmatprep.subr.mxu0 0.0
      %2839 = vmatpush1.msra.mxu0 0.0
      %2840 = vmatprep.subr.mxu0 0.0
      %2841 = vmatpush1.msra.mxu0 0.0
      %2842 = vmatprep.subr.mxu0 0.0
      %2843 = vmatpush1.msra.mxu0 0.0
      %2844 = vmatprep.subr.mxu0 0.0
      %2845 = vmatpush1.msra.mxu0 0.0
      %2846 = vmatprep.subr.mxu0 0.0
      %2847 = vmatpush1.msra.mxu0 0.0
      %2848 = vmatprep.subr.mxu0 0.0
      %2849 = vmatpush1.msra.mxu0 0.0
      %2850 = vmatprep.subr.mxu0 0.0
      %2851 = vmatpush1.msra.mxu0 0.0
      %2852 = vmatprep.subr.mxu0 0.0
      %2853 = vmatpush1.msra.mxu0 0.0
      %2854 = vmatprep.subr.mxu0 0.0
      %2855 = vmatpush1.msra.mxu0 0.0
      %2856 = vmatprep.subr.mxu0 0.0
      %2857 = vmatpush1.msra.mxu0 0.0
      %2858 = vmatprep.subr.mxu0 0.0
      %2859 = vmatpush1.msra.mxu0 0.0
      %2860 = vmatprep.subr.mxu0 0.0
      %2861 = vmatpush1.msra.mxu0 0.0
      %2862 = vmatprep.subr.mxu0 0.0
      %2863 = vmatpush1.msra.mxu0 0.0
      %2864 = vmatprep.subr.mxu0 0.0
      %2865 = vmatpush1.msra.mxu0 0.0
      %2866 = vmatprep.subr.mxu0 0.0
      %2867 = vmatpush1.msra.mxu0 0.0
      %2868 = vmatprep.subr.mxu0 0.0
      %2869 = vmatpush1.msra.mxu0 0.0
      %2870 = vmatprep.subr.mxu0 0.0
      %2871 = vmatpush1.msra.mxu0 0.0
      %2872 = vmatprep.subr.mxu0 0.0
      %2873 = vmatpush1.msra.mxu0 0.0
      %2874 = vmatprep.subr.mxu0 0.0
      %2875 = vmatpush1.msra.mxu0 0.0
      %2876 = vmatprep.subr.mxu0 0.0
      %2877 = vmatpush1.msra.mxu0 0.0
      %2878 = vmatprep.subr.mxu0 0.0
      %2879 = vmatpush1.msra.mxu0 0.0
      %2880 = vmatprep.subr.mxu0 0.0
      %2881 = vmatpush1.msra.mxu0 0.0
      %2882 = vmatprep.subr.mxu0 0.0
      %2883 = vmatpush1.msra.mxu0 0.0
      %2884 = vmatprep.subr.mxu0 0.0
      %2885 = vmatpush1.msra.mxu0 0.0
      %2886 = vmatprep.subr.mxu0 0.0
      %2887 = vmatpush1.msra.mxu0 0.0
      %2888 = vmatprep.subr.mxu0 0.0
      %2889 = vmatpush1.msra.mxu0 0.0
      %2890 = vmatprep.subr.mxu0 0.0
      %2891 = vmatpush1.msra.mxu0 0.0
      %2892 = vmatprep.subr.mxu0 0.0
      %2893 = vmatpush1.msra.mxu0 0.0
      %2894 = vmatprep.mubr.f32.mxu0 0.0
      %2895 = vmatmul.mubr.f32.gmra.mrb[0].mxu0 %v2822
      %v2896 = vpop.f32.mrb[0].mxu0
      %v2897 = vadd.f32 0.0, %v2896
      %v2898 = vpop.f32.mrb[0].mxu0
      %v2899 = vadd.f32 0.0, %v2898
      %2900 = vdwg.mxu0
      %2901 = vmatprep.subr.mxu0 0.0
      %2902 = vmatpush1.msra.mxu0 %v2828
      %2903 = vmatprep.subr.mxu0 0.0
      %2904 = vmatpush1.msra.mxu0 0.0
      %2905 = vmatprep.subr.mxu0 0.0
      %2906 = vmatpush1.msra.mxu0 0.0
      %2907 = vmatprep.subr.mxu0 0.0
      %2908 = vmatpush1.msra.mxu0 0.0
      %2909 = vmatprep.subr.mxu0 0.0
      %2910 = vmatpush1.msra.mxu0 0.0
      %2911 = vmatprep.subr.mxu0 0.0
      %2912 = vmatpush1.msra.mxu0 0.0
      %2913 = vmatprep.subr.mxu0 0.0
      %2914 = vmatpush1.msra.mxu0 0.0
      %2915 = vmatprep.subr.mxu0 0.0
      %2916 = vmatpush1.msra.mxu0 0.0
      %2917 = vmatprep.subr.mxu0 0.0
      %2918 = vmatpush1.msra.mxu0 0.0
      %2919 = vmatprep.subr.mxu0 0.0
      %2920 = vmatpush1.msra.mxu0 0.0
      %2921 = vmatprep.subr.mxu0 0.0
      %2922 = vmatpush1.msra.mxu0 0.0
      %2923 = vmatprep.subr.mxu0 0.0
      %2924 = vmatpush1.msra.mxu0 0.0
      %2925 = vmatprep.subr.mxu0 0.0
      %2926 = vmatpush1.msra.mxu0 0.0
      %2927 = vmatprep.subr.mxu0 0.0
      %2928 = vmatpush1.msra.mxu0 0.0
      %2929 = vmatprep.subr.mxu0 0.0
      %2930 = vmatpush1.msra.mxu0 0.0
      %2931 = vmatprep.subr.mxu0 0.0
      %2932 = vmatpush1.msra.mxu0 0.0
      %2933 = vmatprep.subr.mxu0 0.0
      %2934 = vmatpush1.msra.mxu0 0.0
      %2935 = vmatprep.subr.mxu0 0.0
      %2936 = vmatpush1.msra.mxu0 0.0
      %2937 = vmatprep.subr.mxu0 0.0
      %2938 = vmatpush1.msra.mxu0 0.0
      %2939 = vmatprep.subr.mxu0 0.0
      %2940 = vmatpush1.msra.mxu0 0.0
      %2941 = vmatprep.subr.mxu0 0.0
      %2942 = vmatpush1.msra.mxu0 0.0
      %2943 = vmatprep.subr.mxu0 0.0
      %2944 = vmatpush1.msra.mxu0 0.0
      %2945 = vmatprep.subr.mxu0 0.0
      %2946 = vmatpush1.msra.mxu0 0.0
      %2947 = vmatprep.subr.mxu0 0.0
      %2948 = vmatpush1.msra.mxu0 0.0
      %2949 = vmatprep.subr.mxu0 0.0
      %2950 = vmatpush1.msra.mxu0 0.0
      %2951 = vmatprep.subr.mxu0 0.0
      %2952 = vmatpush1.msra.mxu0 0.0
      %2953 = vmatprep.subr.mxu0 0.0
      %2954 = vmatpush1.msra.mxu0 0.0
      %2955 = vmatprep.subr.mxu0 0.0
      %2956 = vmatpush1.msra.mxu0 0.0
      %2957 = vmatprep.subr.mxu0 0.0
      %2958 = vmatpush1.msra.mxu0 0.0
      %2959 = vmatprep.subr.mxu0 0.0
      %2960 = vmatpush1.msra.mxu0 0.0
      %2961 = vmatprep.subr.mxu0 0.0
      %2962 = vmatpush1.msra.mxu0 0.0
      %2963 = vmatprep.subr.mxu0 0.0
      %2964 = vmatpush1.msra.mxu0 0.0
      %2965 = vmatprep.mubr.f32.mxu0 0.0
      %2966 = vmatmul.mubr.f32.gmra.mrb[0].mxu0 %v2822
      %v2967 = vpop.f32.mrb[0].mxu0
      %v2968 = vadd.f32 0.0, %v2967
      %v2969 = vpop.f32.mrb[0].mxu0
      %2970 = vdwg.mxu0
      %v2971 = vadd.f32 %v2808, %v2897
      %v2972 = vadd.f32 %v2809, %v2899
      %v2973 = vadd.f32 %v2810, %v2968
      %s2974 = scalar_lea.vmem %s1, 68
      %v2975 = vld [vmem:[%s2974] sm:$0xf]
      %2976 = vrot.lane.b32.xlu0 %v202, 90
      %v2977 = vpop.permute.xlu0 %2976
      %2978 = vrot.lane.b32.xlu0 %v1679, 90
      %v2979 = vpop.permute.xlu0 %2978
      %2980 = vrot.lane.b32.xlu0 %v203, 90
      %v2981 = vpop.permute.xlu0 %2980
      %v2982 = vsel %vm1519, %v2977, %v2979
      %v2983 = vsel %vm1519, %v2979, %v2981
      %v2985 = vsel %vm225, %v2975, 0
      %v2987 = vsel %vm229, %v2982, 0
      %v2989 = vsel %vm229, %v2983, 0
      %v2991 = vsel %vm229, %v2981, 0
      %2993 = vmatprep.subr.mxu0 %v2989
      %2994 = vmatpush1.msra.mxu0 %v2987
      %2995 = vmatprep.subr.mxu0 0.0
      %2996 = vmatpush1.msra.mxu0 0.0
      %2997 = vmatprep.subr.mxu0 0.0
      %2998 = vmatpush1.msra.mxu0 0.0
      %2999 = vmatprep.subr.mxu0 0.0
      %3000 = vmatpush1.msra.mxu0 0.0
      %3001 = vmatprep.subr.mxu0 0.0
      %3002 = vmatpush1.msra.mxu0 0.0
      %3003 = vmatprep.subr.mxu0 0.0
      %3004 = vmatpush1.msra.mxu0 0.0
      %3005 = vmatprep.subr.mxu0 0.0
      %3006 = vmatpush1.msra.mxu0 0.0
      %3007 = vmatprep.subr.mxu0 0.0
      %3008 = vmatpush1.msra.mxu0 0.0
      %3009 = vmatprep.subr.mxu0 0.0
      %3010 = vmatpush1.msra.mxu0 0.0
      %3011 = vmatprep.subr.mxu0 0.0
      %3012 = vmatpush1.msra.mxu0 0.0
      %3013 = vmatprep.subr.mxu0 0.0
      %3014 = vmatpush1.msra.mxu0 0.0
      %3015 = vmatprep.subr.mxu0 0.0
      %3016 = vmatpush1.msra.mxu0 0.0
      %3017 = vmatprep.subr.mxu0 0.0
      %3018 = vmatpush1.msra.mxu0 0.0
      %3019 = vmatprep.subr.mxu0 0.0
      %3020 = vmatpush1.msra.mxu0 0.0
      %3021 = vmatprep.subr.mxu0 0.0
      %3022 = vmatpush1.msra.mxu0 0.0
      %3023 = vmatprep.subr.mxu0 0.0
      %3024 = vmatpush1.msra.mxu0 0.0
      %3025 = vmatprep.subr.mxu0 0.0
      %3026 = vmatpush1.msra.mxu0 0.0
      %3027 = vmatprep.subr.mxu0 0.0
      %3028 = vmatpush1.msra.mxu0 0.0
      %3029 = vmatprep.subr.mxu0 0.0
      %3030 = vmatpush1.msra.mxu0 0.0
      %3031 = vmatprep.subr.mxu0 0.0
      %3032 = vmatpush1.msra.mxu0 0.0
      %3033 = vmatprep.subr.mxu0 0.0
      %3034 = vmatpush1.msra.mxu0 0.0
      %3035 = vmatprep.subr.mxu0 0.0
      %3036 = vmatpush1.msra.mxu0 0.0
      %3037 = vmatprep.subr.mxu0 0.0
      %3038 = vmatpush1.msra.mxu0 0.0
      %3039 = vmatprep.subr.mxu0 0.0
      %3040 = vmatpush1.msra.mxu0 0.0
      %3041 = vmatprep.subr.mxu0 0.0
      %3042 = vmatpush1.msra.mxu0 0.0
      %3043 = vmatprep.subr.mxu0 0.0
      %3044 = vmatpush1.msra.mxu0 0.0
      %3045 = vmatprep.subr.mxu0 0.0
      %3046 = vmatpush1.msra.mxu0 0.0
      %3047 = vmatprep.subr.mxu0 0.0
      %3048 = vmatpush1.msra.mxu0 0.0
      %3049 = vmatprep.subr.mxu0 0.0
      %3050 = vmatpush1.msra.mxu0 0.0
      %3051 = vmatprep.subr.mxu0 0.0
      %3052 = vmatpush1.msra.mxu0 0.0
      %3053 = vmatprep.subr.mxu0 0.0
      %3054 = vmatpush1.msra.mxu0 0.0
      %3055 = vmatprep.subr.mxu0 0.0
      %3056 = vmatpush1.msra.mxu0 0.0
      %3057 = vmatprep.mubr.f32.mxu0 0.0
      %3058 = vmatmul.mubr.f32.gmra.mrb[0].mxu0 %v2985
      %v3059 = vpop.f32.mrb[0].mxu0
      %v3060 = vadd.f32 0.0, %v3059
      %v3061 = vpop.f32.mrb[0].mxu0
      %v3062 = vadd.f32 0.0, %v3061
      %3063 = vdwg.mxu0
      %3064 = vmatprep.subr.mxu0 0.0
      %3065 = vmatpush1.msra.mxu0 %v2991
      %3066 = vmatprep.subr.mxu0 0.0
      %3067 = vmatpush1.msra.mxu0 0.0
      %3068 = vmatprep.subr.mxu0 0.0
      %3069 = vmatpush1.msra.mxu0 0.0
      %3070 = vmatprep.subr.mxu0 0.0
      %3071 = vmatpush1.msra.mxu0 0.0
      %3072 = vmatprep.subr.mxu0 0.0
      %3073 = vmatpush1.msra.mxu0 0.0
      %3074 = vmatprep.subr.mxu0 0.0
      %3075 = vmatpush1.msra.mxu0 0.0
      %3076 = vmatprep.subr.mxu0 0.0
      %3077 = vmatpush1.msra.mxu0 0.0
      %3078 = vmatprep.subr.mxu0 0.0
      %3079 = vmatpush1.msra.mxu0 0.0
      %3080 = vmatprep.subr.mxu0 0.0
      %3081 = vmatpush1.msra.mxu0 0.0
      %3082 = vmatprep.subr.mxu0 0.0
      %3083 = vmatpush1.msra.mxu0 0.0
      %3084 = vmatprep.subr.mxu0 0.0
      %3085 = vmatpush1.msra.mxu0 0.0
      %3086 = vmatprep.subr.mxu0 0.0
      %3087 = vmatpush1.msra.mxu0 0.0
      %3088 = vmatprep.subr.mxu0 0.0
      %3089 = vmatpush1.msra.mxu0 0.0
      %3090 = vmatprep.subr.mxu0 0.0
      %3091 = vmatpush1.msra.mxu0 0.0
      %3092 = vmatprep.subr.mxu0 0.0
      %3093 = vmatpush1.msra.mxu0 0.0
      %3094 = vmatprep.subr.mxu0 0.0
      %3095 = vmatpush1.msra.mxu0 0.0
      %3096 = vmatprep.subr.mxu0 0.0
      %3097 = vmatpush1.msra.mxu0 0.0
      %3098 = vmatprep.subr.mxu0 0.0
      %3099 = vmatpush1.msra.mxu0 0.0
      %3100 = vmatprep.subr.mxu0 0.0
      %3101 = vmatpush1.msra.mxu0 0.0
      %3102 = vmatprep.subr.mxu0 0.0
      %3103 = vmatpush1.msra.mxu0 0.0
      %3104 = vmatprep.subr.mxu0 0.0
      %3105 = vmatpush1.msra.mxu0 0.0
      %3106 = vmatprep.subr.mxu0 0.0
      %3107 = vmatpush1.msra.mxu0 0.0
      %3108 = vmatprep.subr.mxu0 0.0
      %3109 = vmatpush1.msra.mxu0 0.0
      %3110 = vmatprep.subr.mxu0 0.0
      %3111 = vmatpush1.msra.mxu0 0.0
      %3112 = vmatprep.subr.mxu0 0.0
      %3113 = vmatpush1.msra.mxu0 0.0
      %3114 = vmatprep.subr.mxu0 0.0
      %3115 = vmatpush1.msra.mxu0 0.0
      %3116 = vmatprep.subr.mxu0 0.0
      %3117 = vmatpush1.msra.mxu0 0.0
      %3118 = vmatprep.subr.mxu0 0.0
      %3119 = vmatpush1.msra.mxu0 0.0
      %3120 = vmatprep.subr.mxu0 0.0
      %3121 = vmatpush1.msra.mxu0 0.0
      %3122 = vmatprep.subr.mxu0 0.0
      %3123 = vmatpush1.msra.mxu0 0.0
      %3124 = vmatprep.subr.mxu0 0.0
      %3125 = vmatpush1.msra.mxu0 0.0
      %3126 = vmatprep.subr.mxu0 0.0
      %3127 = vmatpush1.msra.mxu0 0.0
      %3128 = vmatprep.mubr.f32.mxu0 0.0
      %3129 = vmatmul.mubr.f32.gmra.mrb[0].mxu0 %v2985
      %v3130 = vpop.f32.mrb[0].mxu0
      %v3131 = vadd.f32 0.0, %v3130
      %v3132 = vpop.f32.mrb[0].mxu0
      %3133 = vdwg.mxu0
      %v3134 = vadd.f32 %v2971, %v3060
      %v3135 = vadd.f32 %v2972, %v3062
      %v3136 = vadd.f32 %v2973, %v3131
      %s3137 = scalar_lea.vmem %s1, 72
      %v3138 = vld [vmem:[%s3137] sm:$0xf]
      %v3141 = vcombine.high %v208, %v208
      %v3143 = vsel %vm225, %v3138, 0
      %v3145 = vsel %vm229, %v208, 0
      %v3147 = vsel %vm229, %v3141, 0
      %v3149 = vsel %vm229, %v209, 0
      %3151 = vmatprep.subr.mxu0 %v3147
      %3152 = vmatpush1.msra.mxu0 %v3145
      %3153 = vmatprep.subr.mxu0 0.0
      %3154 = vmatpush1.msra.mxu0 0.0
      %3155 = vmatprep.subr.mxu0 0.0
      %3156 = vmatpush1.msra.mxu0 0.0
      %3157 = vmatprep.subr.mxu0 0.0
      %3158 = vmatpush1.msra.mxu0 0.0
      %3159 = vmatprep.subr.mxu0 0.0
      %3160 = vmatpush1.msra.mxu0 0.0
      %3161 = vmatprep.subr.mxu0 0.0
      %3162 = vmatpush1.msra.mxu0 0.0
      %3163 = vmatprep.subr.mxu0 0.0
      %3164 = vmatpush1.msra.mxu0 0.0
      %3165 = vmatprep.subr.mxu0 0.0
      %3166 = vmatpush1.msra.mxu0 0.0
      %3167 = vmatprep.subr.mxu0 0.0
      %3168 = vmatpush1.msra.mxu0 0.0
      %3169 = vmatprep.subr.mxu0 0.0
      %3170 = vmatpush1.msra.mxu0 0.0
      %3171 = vmatprep.subr.mxu0 0.0
      %3172 = vmatpush1.msra.mxu0 0.0
      %3173 = vmatprep.subr.mxu0 0.0
      %3174 = vmatpush1.msra.mxu0 0.0
      %3175 = vmatprep.subr.mxu0 0.0
      %3176 = vmatpush1.msra.mxu0 0.0
      %3177 = vmatprep.subr.mxu0 0.0
      %3178 = vmatpush1.msra.mxu0 0.0
      %3179 = vmatprep.subr.mxu0 0.0
      %3180 = vmatpush1.msra.mxu0 0.0
      %3181 = vmatprep.subr.mxu0 0.0
      %3182 = vmatpush1.msra.mxu0 0.0
      %3183 = vmatprep.subr.mxu0 0.0
      %3184 = vmatpush1.msra.mxu0 0.0
      %3185 = vmatprep.subr.mxu0 0.0
      %3186 = vmatpush1.msra.mxu0 0.0
      %3187 = vmatprep.subr.mxu0 0.0
      %3188 = vmatpush1.msra.mxu0 0.0
      %3189 = vmatprep.subr.mxu0 0.0
      %3190 = vmatpush1.msra.mxu0 0.0
      %3191 = vmatprep.subr.mxu0 0.0
      %3192 = vmatpush1.msra.mxu0 0.0
      %3193 = vmatprep.subr.mxu0 0.0
      %3194 = vmatpush1.msra.mxu0 0.0
      %3195 = vmatprep.subr.mxu0 0.0
      %3196 = vmatpush1.msra.mxu0 0.0
      %3197 = vmatprep.subr.mxu0 0.0
      %3198 = vmatpush1.msra.mxu0 0.0
      %3199 = vmatprep.subr.mxu0 0.0
      %3200 = vmatpush1.msra.mxu0 0.0
      %3201 = vmatprep.subr.mxu0 0.0
      %3202 = vmatpush1.msra.mxu0 0.0
      %3203 = vmatprep.subr.mxu0 0.0
      %3204 = vmatpush1.msra.mxu0 0.0
      %3205 = vmatprep.subr.mxu0 0.0
      %3206 = vmatpush1.msra.mxu0 0.0
      %3207 = vmatprep.subr.mxu0 0.0
      %3208 = vmatpush1.msra.mxu0 0.0
      %3209 = vmatprep.subr.mxu0 0.0
      %3210 = vmatpush1.msra.mxu0 0.0
      %3211 = vmatprep.subr.mxu0 0.0
      %3212 = vmatpush1.msra.mxu0 0.0
      %3213 = vmatprep.subr.mxu0 0.0
      %3214 = vmatpush1.msra.mxu0 0.0
      %3215 = vmatprep.mubr.f32.mxu0 0.0
      %3216 = vmatmul.mubr.f32.gmra.mrb[0].mxu0 %v3143
      %v3217 = vpop.f32.mrb[0].mxu0
      %v3218 = vadd.f32 0.0, %v3217
      %v3219 = vpop.f32.mrb[0].mxu0
      %v3220 = vadd.f32 0.0, %v3219
      %3221 = vdwg.mxu0
      %3222 = vmatprep.subr.mxu0 0.0
      %3223 = vmatpush1.msra.mxu0 %v3149
      %3224 = vmatprep.subr.mxu0 0.0
      %3225 = vmatpush1.msra.mxu0 0.0
      %3226 = vmatprep.subr.mxu0 0.0
      %3227 = vmatpush1.msra.mxu0 0.0
      %3228 = vmatprep.subr.mxu0 0.0
      %3229 = vmatpush1.msra.mxu0 0.0
      %3230 = vmatprep.subr.mxu0 0.0
      %3231 = vmatpush1.msra.mxu0 0.0
      %3232 = vmatprep.subr.mxu0 0.0
      %3233 = vmatpush1.msra.mxu0 0.0
      %3234 = vmatprep.subr.mxu0 0.0
      %3235 = vmatpush1.msra.mxu0 0.0
      %3236 = vmatprep.subr.mxu0 0.0
      %3237 = vmatpush1.msra.mxu0 0.0
      %3238 = vmatprep.subr.mxu0 0.0
      %3239 = vmatpush1.msra.mxu0 0.0
      %3240 = vmatprep.subr.mxu0 0.0
      %3241 = vmatpush1.msra.mxu0 0.0
      %3242 = vmatprep.subr.mxu0 0.0
      %3243 = vmatpush1.msra.mxu0 0.0
      %3244 = vmatprep.subr.mxu0 0.0
      %3245 = vmatpush1.msra.mxu0 0.0
      %3246 = vmatprep.subr.mxu0 0.0
      %3247 = vmatpush1.msra.mxu0 0.0
      %3248 = vmatprep.subr.mxu0 0.0
      %3249 = vmatpush1.msra.mxu0 0.0
      %3250 = vmatprep.subr.mxu0 0.0
      %3251 = vmatpush1.msra.mxu0 0.0
      %3252 = vmatprep.subr.mxu0 0.0
      %3253 = vmatpush1.msra.mxu0 0.0
      %3254 = vmatprep.subr.mxu0 0.0
      %3255 = vmatpush1.msra.mxu0 0.0
      %3256 = vmatprep.subr.mxu0 0.0
      %3257 = vmatpush1.msra.mxu0 0.0
      %3258 = vmatprep.subr.mxu0 0.0
      %3259 = vmatpush1.msra.mxu0 0.0
      %3260 = vmatprep.subr.mxu0 0.0
      %3261 = vmatpush1.msra.mxu0 0.0
      %3262 = vmatprep.subr.mxu0 0.0
      %3263 = vmatpush1.msra.mxu0 0.0
      %3264 = vmatprep.subr.mxu0 0.0
      %3265 = vmatpush1.msra.mxu0 0.0
      %3266 = vmatprep.subr.mxu0 0.0
      %3267 = vmatpush1.msra.mxu0 0.0
      %3268 = vmatprep.subr.mxu0 0.0
      %3269 = vmatpush1.msra.mxu0 0.0
      %3270 = vmatprep.subr.mxu0 0.0
      %3271 = vmatpush1.msra.mxu0 0.0
      %3272 = vmatprep.subr.mxu0 0.0
      %3273 = vmatpush1.msra.mxu0 0.0
      %3274 = vmatprep.subr.mxu0 0.0
      %3275 = vmatpush1.msra.mxu0 0.0
      %3276 = vmatprep.subr.mxu0 0.0
      %3277 = vmatpush1.msra.mxu0 0.0
      %3278 = vmatprep.subr.mxu0 0.0
      %3279 = vmatpush1.msra.mxu0 0.0
      %3280 = vmatprep.subr.mxu0 0.0
      %3281 = vmatpush1.msra.mxu0 0.0
      %3282 = vmatprep.subr.mxu0 0.0
      %3283 = vmatpush1.msra.mxu0 0.0
      %3284 = vmatprep.subr.mxu0 0.0
      %3285 = vmatpush1.msra.mxu0 0.0
      %3286 = vmatprep.mubr.f32.mxu0 0.0
      %3287 = vmatmul.mubr.f32.gmra.mrb[0].mxu0 %v3143
      %v3288 = vpop.f32.mrb[0].mxu0
      %v3289 = vadd.f32 0.0, %v3288
      %v3290 = vpop.f32.mrb[0].mxu0
      %3291 = vdwg.mxu0
      %v3292 = vadd.f32 %v3134, %v3218
      %v3293 = vadd.f32 %v3135, %v3220
      %v3294 = vadd.f32 %v3136, %v3289
      %s3295 = scalar_lea.vmem %s1, 76
      %v3296 = vld [vmem:[%s3295] sm:$0xf]
      %3297 = vrot.lane.b32.xlu0 %v208, 127
      %v3298 = vpop.permute.xlu0 %3297
      %3299 = vrot.lane.b32.xlu0 %v3141, 127
      %v3300 = vpop.permute.xlu0 %3299
      %3301 = vrot.lane.b32.xlu0 %v209, 127
      %v3302 = vpop.permute.xlu0 %3301
      %v3303 = vsel %vm222, %v3298, %v3300
      %v3304 = vsel %vm222, %v3300, %v3302
      %v3306 = vsel %vm225, %v3296, 0
      %v3308 = vsel %vm229, %v3303, 0
      %v3310 = vsel %vm229, %v3304, 0
      %v3312 = vsel %vm229, %v3302, 0
      %3314 = vmatprep.subr.mxu0 %v3310
      %3315 = vmatpush1.msra.mxu0 %v3308
      %3316 = vmatprep.subr.mxu0 0.0
      %3317 = vmatpush1.msra.mxu0 0.0
      %3318 = vmatprep.subr.mxu0 0.0
      %3319 = vmatpush1.msra.mxu0 0.0
      %3320 = vmatprep.subr.mxu0 0.0
      %3321 = vmatpush1.msra.mxu0 0.0
      %3322 = vmatprep.subr.mxu0 0.0
      %3323 = vmatpush1.msra.mxu0 0.0
      %3324 = vmatprep.subr.mxu0 0.0
      %3325 = vmatpush1.msra.mxu0 0.0
      %3326 = vmatprep.subr.mxu0 0.0
      %3327 = vmatpush1.msra.mxu0 0.0
      %3328 = vmatprep.subr.mxu0 0.0
      %3329 = vmatpush1.msra.mxu0 0.0
      %3330 = vmatprep.subr.mxu0 0.0
      %3331 = vmatpush1.msra.mxu0 0.0
      %3332 = vmatprep.subr.mxu0 0.0
      %3333 = vmatpush1.msra.mxu0 0.0
      %3334 = vmatprep.subr.mxu0 0.0
      %3335 = vmatpush1.msra.mxu0 0.0
      %3336 = vmatprep.subr.mxu0 0.0
      %3337 = vmatpush1.msra.mxu0 0.0
      %3338 = vmatprep.subr.mxu0 0.0
      %3339 = vmatpush1.msra.mxu0 0.0
      %3340 = vmatprep.subr.mxu0 0.0
      %3341 = vmatpush1.msra.mxu0 0.0
      %3342 = vmatprep.subr.mxu0 0.0
      %3343 = vmatpush1.msra.mxu0 0.0
      %3344 = vmatprep.subr.mxu0 0.0
      %3345 = vmatpush1.msra.mxu0 0.0
      %3346 = vmatprep.subr.mxu0 0.0
      %3347 = vmatpush1.msra.mxu0 0.0
      %3348 = vmatprep.subr.mxu0 0.0
      %3349 = vmatpush1.msra.mxu0 0.0
      %3350 = vmatprep.subr.mxu0 0.0
      %3351 = vmatpush1.msra.mxu0 0.0
      %3352 = vmatprep.subr.mxu0 0.0
      %3353 = vmatpush1.msra.mxu0 0.0
      %3354 = vmatprep.subr.mxu0 0.0
      %3355 = vmatpush1.msra.mxu0 0.0
      %3356 = vmatprep.subr.mxu0 0.0
      %3357 = vmatpush1.msra.mxu0 0.0
      %3358 = vmatprep.subr.mxu0 0.0
      %3359 = vmatpush1.msra.mxu0 0.0
      %3360 = vmatprep.subr.mxu0 0.0
      %3361 = vmatpush1.msra.mxu0 0.0
      %3362 = vmatprep.subr.mxu0 0.0
      %3363 = vmatpush1.msra.mxu0 0.0
      %3364 = vmatprep.subr.mxu0 0.0
      %3365 = vmatpush1.msra.mxu0 0.0
      %3366 = vmatprep.subr.mxu0 0.0
      %3367 = vmatpush1.msra.mxu0 0.0
      %3368 = vmatprep.subr.mxu0 0.0
      %3369 = vmatpush1.msra.mxu0 0.0
      %3370 = vmatprep.subr.mxu0 0.0
      %3371 = vmatpush1.msra.mxu0 0.0
      %3372 = vmatprep.subr.mxu0 0.0
      %3373 = vmatpush1.msra.mxu0 0.0
      %3374 = vmatprep.subr.mxu0 0.0
      %3375 = vmatpush1.msra.mxu0 0.0
      %3376 = vmatprep.subr.mxu0 0.0
      %3377 = vmatpush1.msra.mxu0 0.0
      %3378 = vmatprep.mubr.f32.mxu0 0.0
      %3379 = vmatmul.mubr.f32.gmra.mrb[0].mxu0 %v3306
      %v3380 = vpop.f32.mrb[0].mxu0
      %v3381 = vadd.f32 0.0, %v3380
      %v3382 = vpop.f32.mrb[0].mxu0
      %v3383 = vadd.f32 0.0, %v3382
      %3384 = vdwg.mxu0
      %3385 = vmatprep.subr.mxu0 0.0
      %3386 = vmatpush1.msra.mxu0 %v3312
      %3387 = vmatprep.subr.mxu0 0.0
      %3388 = vmatpush1.msra.mxu0 0.0
      %3389 = vmatprep.subr.mxu0 0.0
      %3390 = vmatpush1.msra.mxu0 0.0
      %3391 = vmatprep.subr.mxu0 0.0
      %3392 = vmatpush1.msra.mxu0 0.0
      %3393 = vmatprep.subr.mxu0 0.0
      %3394 = vmatpush1.msra.mxu0 0.0
      %3395 = vmatprep.subr.mxu0 0.0
      %3396 = vmatpush1.msra.mxu0 0.0
      %3397 = vmatprep.subr.mxu0 0.0
      %3398 = vmatpush1.msra.mxu0 0.0
      %3399 = vmatprep.subr.mxu0 0.0
      %3400 = vmatpush1.msra.mxu0 0.0
      %3401 = vmatprep.subr.mxu0 0.0
      %3402 = vmatpush1.msra.mxu0 0.0
      %3403 = vmatprep.subr.mxu0 0.0
      %3404 = vmatpush1.msra.mxu0 0.0
      %3405 = vmatprep.subr.mxu0 0.0
      %3406 = vmatpush1.msra.mxu0 0.0
      %3407 = vmatprep.subr.mxu0 0.0
      %3408 = vmatpush1.msra.mxu0 0.0
      %3409 = vmatprep.subr.mxu0 0.0
      %3410 = vmatpush1.msra.mxu0 0.0
      %3411 = vmatprep.subr.mxu0 0.0
      %3412 = vmatpush1.msra.mxu0 0.0
      %3413 = vmatprep.subr.mxu0 0.0
      %3414 = vmatpush1.msra.mxu0 0.0
      %3415 = vmatprep.subr.mxu0 0.0
      %3416 = vmatpush1.msra.mxu0 0.0
      %3417 = vmatprep.subr.mxu0 0.0
      %3418 = vmatpush1.msra.mxu0 0.0
      %3419 = vmatprep.subr.mxu0 0.0
      %3420 = vmatpush1.msra.mxu0 0.0
      %3421 = vmatprep.subr.mxu0 0.0
      %3422 = vmatpush1.msra.mxu0 0.0
      %3423 = vmatprep.subr.mxu0 0.0
      %3424 = vmatpush1.msra.mxu0 0.0
      %3425 = vmatprep.subr.mxu0 0.0
      %3426 = vmatpush1.msra.mxu0 0.0
      %3427 = vmatprep.subr.mxu0 0.0
      %3428 = vmatpush1.msra.mxu0 0.0
      %3429 = vmatprep.subr.mxu0 0.0
      %3430 = vmatpush1.msra.mxu0 0.0
      %3431 = vmatprep.subr.mxu0 0.0
      %3432 = vmatpush1.msra.mxu0 0.0
      %3433 = vmatprep.subr.mxu0 0.0
      %3434 = vmatpush1.msra.mxu0 0.0
      %3435 = vmatprep.subr.mxu0 0.0
      %3436 = vmatpush1.msra.mxu0 0.0
      %3437 = vmatprep.subr.mxu0 0.0
      %3438 = vmatpush1.msra.mxu0 0.0
      %3439 = vmatprep.subr.mxu0 0.0
      %3440 = vmatpush1.msra.mxu0 0.0
      %3441 = vmatprep.subr.mxu0 0.0
      %3442 = vmatpush1.msra.mxu0 0.0
      %3443 = vmatprep.subr.mxu0 0.0
      %3444 = vmatpush1.msra.mxu0 0.0
      %3445 = vmatprep.subr.mxu0 0.0
      %3446 = vmatpush1.msra.mxu0 0.0
      %3447 = vmatprep.subr.mxu0 0.0
      %3448 = vmatpush1.msra.mxu0 0.0
      %3449 = vmatprep.mubr.f32.mxu0 0.0
      %3450 = vmatmul.mubr.f32.gmra.mrb[0].mxu0 %v3306
      %v3451 = vpop.f32.mrb[0].mxu0
      %v3452 = vadd.f32 0.0, %v3451
      %v3453 = vpop.f32.mrb[0].mxu0
      %3454 = vdwg.mxu0
      %v3455 = vadd.f32 %v3292, %v3381
      %v3456 = vadd.f32 %v3293, %v3383
      %v3457 = vadd.f32 %v3294, %v3452
      %s3458 = scalar_lea.vmem %s1, 80
      %v3459 = vld [vmem:[%s3458] sm:$0xf]
      %3460 = vrot.lane.b32.xlu0 %v208, 126
      %v3461 = vpop.permute.xlu0 %3460
      %3462 = vrot.lane.b32.xlu0 %v3141, 126
      %v3463 = vpop.permute.xlu0 %3462
      %3464 = vrot.lane.b32.xlu0 %v209, 126
      %v3465 = vpop.permute.xlu0 %3464
      %v3466 = vsel %vm535, %v3461, %v3463
      %v3467 = vsel %vm535, %v3463, %v3465
      %v3469 = vsel %vm225, %v3459, 0
      %v3471 = vsel %vm229, %v3466, 0
      %v3473 = vsel %vm229, %v3467, 0
      %v3475 = vsel %vm229, %v3465, 0
      %3477 = vmatprep.subr.mxu0 %v3473
      %3478 = vmatpush1.msra.mxu0 %v3471
      %3479 = vmatprep.subr.mxu0 0.0
      %3480 = vmatpush1.msra.mxu0 0.0
      %3481 = vmatprep.subr.mxu0 0.0
      %3482 = vmatpush1.msra.mxu0 0.0
      %3483 = vmatprep.subr.mxu0 0.0
      %3484 = vmatpush1.msra.mxu0 0.0
      %3485 = vmatprep.subr.mxu0 0.0
      %3486 = vmatpush1.msra.mxu0 0.0
      %3487 = vmatprep.subr.mxu0 0.0
      %3488 = vmatpush1.msra.mxu0 0.0
      %3489 = vmatprep.subr.mxu0 0.0
      %3490 = vmatpush1.msra.mxu0 0.0
      %3491 = vmatprep.subr.mxu0 0.0
      %3492 = vmatpush1.msra.mxu0 0.0
      %3493 = vmatprep.subr.mxu0 0.0
      %3494 = vmatpush1.msra.mxu0 0.0
      %3495 = vmatprep.subr.mxu0 0.0
      %3496 = vmatpush1.msra.mxu0 0.0
      %3497 = vmatprep.subr.mxu0 0.0
      %3498 = vmatpush1.msra.mxu0 0.0
      %3499 = vmatprep.subr.mxu0 0.0
      %3500 = vmatpush1.msra.mxu0 0.0
      %3501 = vmatprep.subr.mxu0 0.0
      %3502 = vmatpush1.msra.mxu0 0.0
      %3503 = vmatprep.subr.mxu0 0.0
      %3504 = vmatpush1.msra.mxu0 0.0
      %3505 = vmatprep.subr.mxu0 0.0
      %3506 = vmatpush1.msra.mxu0 0.0
      %3507 = vmatprep.subr.mxu0 0.0
      %3508 = vmatpush1.msra.mxu0 0.0
      %3509 = vmatprep.subr.mxu0 0.0
      %3510 = vmatpush1.msra.mxu0 0.0
      %3511 = vmatprep.subr.mxu0 0.0
      %3512 = vmatpush1.msra.mxu0 0.0
      %3513 = vmatprep.subr.mxu0 0.0
      %3514 = vmatpush1.msra.mxu0 0.0
      %3515 = vmatprep.subr.mxu0 0.0
      %3516 = vmatpush1.msra.mxu0 0.0
      %3517 = vmatprep.subr.mxu0 0.0
      %3518 = vmatpush1.msra.mxu0 0.0
      %3519 = vmatprep.subr.mxu0 0.0
      %3520 = vmatpush1.msra.mxu0 0.0
      %3521 = vmatprep.subr.mxu0 0.0
      %3522 = vmatpush1.msra.mxu0 0.0
      %3523 = vmatprep.subr.mxu0 0.0
      %3524 = vmatpush1.msra.mxu0 0.0
      %3525 = vmatprep.subr.mxu0 0.0
      %3526 = vmatpush1.msra.mxu0 0.0
      %3527 = vmatprep.subr.mxu0 0.0
      %3528 = vmatpush1.msra.mxu0 0.0
      %3529 = vmatprep.subr.mxu0 0.0
      %3530 = vmatpush1.msra.mxu0 0.0
      %3531 = vmatprep.subr.mxu0 0.0
      %3532 = vmatpush1.msra.mxu0 0.0
      %3533 = vmatprep.subr.mxu0 0.0
      %3534 = vmatpush1.msra.mxu0 0.0
      %3535 = vmatprep.subr.mxu0 0.0
      %3536 = vmatpush1.msra.mxu0 0.0
      %3537 = vmatprep.subr.mxu0 0.0
      %3538 = vmatpush1.msra.mxu0 0.0
      %3539 = vmatprep.subr.mxu0 0.0
      %3540 = vmatpush1.msra.mxu0 0.0
      %3541 = vmatprep.mubr.f32.mxu0 0.0
      %3542 = vmatmul.mubr.f32.gmra.mrb[0].mxu0 %v3469
      %v3543 = vpop.f32.mrb[0].mxu0
      %v3544 = vadd.f32 0.0, %v3543
      %v3545 = vpop.f32.mrb[0].mxu0
      %v3546 = vadd.f32 0.0, %v3545
      %3547 = vdwg.mxu0
      %3548 = vmatprep.subr.mxu0 0.0
      %3549 = vmatpush1.msra.mxu0 %v3475
      %3550 = vmatprep.subr.mxu0 0.0
      %3551 = vmatpush1.msra.mxu0 0.0
      %3552 = vmatprep.subr.mxu0 0.0
      %3553 = vmatpush1.msra.mxu0 0.0
      %3554 = vmatprep.subr.mxu0 0.0
      %3555 = vmatpush1.msra.mxu0 0.0
      %3556 = vmatprep.subr.mxu0 0.0
      %3557 = vmatpush1.msra.mxu0 0.0
      %3558 = vmatprep.subr.mxu0 0.0
      %3559 = vmatpush1.msra.mxu0 0.0
      %3560 = vmatprep.subr.mxu0 0.0
      %3561 = vmatpush1.msra.mxu0 0.0
      %3562 = vmatprep.subr.mxu0 0.0
      %3563 = vmatpush1.msra.mxu0 0.0
      %3564 = vmatprep.subr.mxu0 0.0
      %3565 = vmatpush1.msra.mxu0 0.0
      %3566 = vmatprep.subr.mxu0 0.0
      %3567 = vmatpush1.msra.mxu0 0.0
      %3568 = vmatprep.subr.mxu0 0.0
      %3569 = vmatpush1.msra.mxu0 0.0
      %3570 = vmatprep.subr.mxu0 0.0
      %3571 = vmatpush1.msra.mxu0 0.0
      %3572 = vmatprep.subr.mxu0 0.0
      %3573 = vmatpush1.msra.mxu0 0.0
      %3574 = vmatprep.subr.mxu0 0.0
      %3575 = vmatpush1.msra.mxu0 0.0
      %3576 = vmatprep.subr.mxu0 0.0
      %3577 = vmatpush1.msra.mxu0 0.0
      %3578 = vmatprep.subr.mxu0 0.0
      %3579 = vmatpush1.msra.mxu0 0.0
      %3580 = vmatprep.subr.mxu0 0.0
      %3581 = vmatpush1.msra.mxu0 0.0
      %3582 = vmatprep.subr.mxu0 0.0
      %3583 = vmatpush1.msra.mxu0 0.0
      %3584 = vmatprep.subr.mxu0 0.0
      %3585 = vmatpush1.msra.mxu0 0.0
      %3586 = vmatprep.subr.mxu0 0.0
      %3587 = vmatpush1.msra.mxu0 0.0
      %3588 = vmatprep.subr.mxu0 0.0
      %3589 = vmatpush1.msra.mxu0 0.0
      %3590 = vmatprep.subr.mxu0 0.0
      %3591 = vmatpush1.msra.mxu0 0.0
      %3592 = vmatprep.subr.mxu0 0.0
      %3593 = vmatpush1.msra.mxu0 0.0
      %3594 = vmatprep.subr.mxu0 0.0
      %3595 = vmatpush1.msra.mxu0 0.0
      %3596 = vmatprep.subr.mxu0 0.0
      %3597 = vmatpush1.msra.mxu0 0.0
      %3598 = vmatprep.subr.mxu0 0.0
      %3599 = vmatpush1.msra.mxu0 0.0
      %3600 = vmatprep.subr.mxu0 0.0
      %3601 = vmatpush1.msra.mxu0 0.0
      %3602 = vmatprep.subr.mxu0 0.0
      %3603 = vmatpush1.msra.mxu0 0.0
      %3604 = vmatprep.subr.mxu0 0.0
      %3605 = vmatpush1.msra.mxu0 0.0
      %3606 = vmatprep.subr.mxu0 0.0
      %3607 = vmatpush1.msra.mxu0 0.0
      %3608 = vmatprep.subr.mxu0 0.0
      %3609 = vmatpush1.msra.mxu0 0.0
      %3610 = vmatprep.subr.mxu0 0.0
      %3611 = vmatpush1.msra.mxu0 0.0
      %3612 = vmatprep.mubr.f32.mxu0 0.0
      %3613 = vmatmul.mubr.f32.gmra.mrb[0].mxu0 %v3469
      %v3614 = vpop.f32.mrb[0].mxu0
      %v3615 = vadd.f32 0.0, %v3614
      %v3616 = vpop.f32.mrb[0].mxu0
      %3617 = vdwg.mxu0
      %v3618 = vadd.f32 %v3455, %v3544
      %v3619 = vadd.f32 %v3456, %v3546
      %v3620 = vadd.f32 %v3457, %v3615
      %s3621 = scalar_lea.vmem %s1, 84
      %v3622 = vld [vmem:[%s3621] sm:$0xf]
      %3623 = vrot.lane.b32.xlu0 %v208, 110
      %v3624 = vpop.permute.xlu0 %3623
      %3625 = vrot.lane.b32.xlu0 %v3141, 110
      %v3626 = vpop.permute.xlu0 %3625
      %3627 = vrot.lane.b32.xlu0 %v209, 110
      %v3628 = vpop.permute.xlu0 %3627
      %v3629 = vsel %vm699, %v3624, %v3626
      %v3630 = vsel %vm699, %v3626, %v3628
      %v3632 = vsel %vm225, %v3622, 0
      %v3634 = vsel %vm229, %v3629, 0
      %v3636 = vsel %vm229, %v3630, 0
      %v3638 = vsel %vm229, %v3628, 0
      %3640 = vmatprep.subr.mxu0 %v3636
      %3641 = vmatpush1.msra.mxu0 %v3634
      %3642 = vmatprep.subr.mxu0 0.0
      %3643 = vmatpush1.msra.mxu0 0.0
      %3644 = vmatprep.subr.mxu0 0.0
      %3645 = vmatpush1.msra.mxu0 0.0
      %3646 = vmatprep.subr.mxu0 0.0
      %3647 = vmatpush1.msra.mxu0 0.0
      %3648 = vmatprep.subr.mxu0 0.0
      %3649 = vmatpush1.msra.mxu0 0.0
      %3650 = vmatprep.subr.mxu0 0.0
      %3651 = vmatpush1.msra.mxu0 0.0
      %3652 = vmatprep.subr.mxu0 0.0
      %3653 = vmatpush1.msra.mxu0 0.0
      %3654 = vmatprep.subr.mxu0 0.0
      %3655 = vmatpush1.msra.mxu0 0.0
      %3656 = vmatprep.subr.mxu0 0.0
      %3657 = vmatpush1.msra.mxu0 0.0
      %3658 = vmatprep.subr.mxu0 0.0
      %3659 = vmatpush1.msra.mxu0 0.0
      %3660 = vmatprep.subr.mxu0 0.0
      %3661 = vmatpush1.msra.mxu0 0.0
      %3662 = vmatprep.subr.mxu0 0.0
      %3663 = vmatpush1.msra.mxu0 0.0
      %3664 = vmatprep.subr.mxu0 0.0
      %3665 = vmatpush1.msra.mxu0 0.0
      %3666 = vmatprep.subr.mxu0 0.0
      %3667 = vmatpush1.msra.mxu0 0.0
      %3668 = vmatprep.subr.mxu0 0.0
      %3669 = vmatpush1.msra.mxu0 0.0
      %3670 = vmatprep.subr.mxu0 0.0
      %3671 = vmatpush1.msra.mxu0 0.0
      %3672 = vmatprep.subr.mxu0 0.0
      %3673 = vmatpush1.msra.mxu0 0.0
      %3674 = vmatprep.subr.mxu0 0.0
      %3675 = vmatpush1.msra.mxu0 0.0
      %3676 = vmatprep.subr.mxu0 0.0
      %3677 = vmatpush1.msra.mxu0 0.0
      %3678 = vmatprep.subr.mxu0 0.0
      %3679 = vmatpush1.msra.mxu0 0.0
      %3680 = vmatprep.subr.mxu0 0.0
      %3681 = vmatpush1.msra.mxu0 0.0
      %3682 = vmatprep.subr.mxu0 0.0
      %3683 = vmatpush1.msra.mxu0 0.0
      %3684 = vmatprep.subr.mxu0 0.0
      %3685 = vmatpush1.msra.mxu0 0.0
      %3686 = vmatprep.subr.mxu0 0.0
      %3687 = vmatpush1.msra.mxu0 0.0
      %3688 = vmatprep.subr.mxu0 0.0
      %3689 = vmatpush1.msra.mxu0 0.0
      %3690 = vmatprep.subr.mxu0 0.0
      %3691 = vmatpush1.msra.mxu0 0.0
      %3692 = vmatprep.subr.mxu0 0.0
      %3693 = vmatpush1.msra.mxu0 0.0
      %3694 = vmatprep.subr.mxu0 0.0
      %3695 = vmatpush1.msra.mxu0 0.0
      %3696 = vmatprep.subr.mxu0 0.0
      %3697 = vmatpush1.msra.mxu0 0.0
      %3698 = vmatprep.subr.mxu0 0.0
      %3699 = vmatpush1.msra.mxu0 0.0
      %3700 = vmatprep.subr.mxu0 0.0
      %3701 = vmatpush1.msra.mxu0 0.0
      %3702 = vmatprep.subr.mxu0 0.0
      %3703 = vmatpush1.msra.mxu0 0.0
      %3704 = vmatprep.mubr.f32.mxu0 0.0
      %3705 = vmatmul.mubr.f32.gmra.mrb[0].mxu0 %v3632
      %v3706 = vpop.f32.mrb[0].mxu0
      %v3707 = vadd.f32 0.0, %v3706
      %v3708 = vpop.f32.mrb[0].mxu0
      %v3709 = vadd.f32 0.0, %v3708
      %3710 = vdwg.mxu0
      %3711 = vmatprep.subr.mxu0 0.0
      %3712 = vmatpush1.msra.mxu0 %v3638
      %3713 = vmatprep.subr.mxu0 0.0
      %3714 = vmatpush1.msra.mxu0 0.0
      %3715 = vmatprep.subr.mxu0 0.0
      %3716 = vmatpush1.msra.mxu0 0.0
      %3717 = vmatprep.subr.mxu0 0.0
      %3718 = vmatpush1.msra.mxu0 0.0
      %3719 = vmatprep.subr.mxu0 0.0
      %3720 = vmatpush1.msra.mxu0 0.0
      %3721 = vmatprep.subr.mxu0 0.0
      %3722 = vmatpush1.msra.mxu0 0.0
      %3723 = vmatprep.subr.mxu0 0.0
      %3724 = vmatpush1.msra.mxu0 0.0
      %3725 = vmatprep.subr.mxu0 0.0
      %3726 = vmatpush1.msra.mxu0 0.0
      %3727 = vmatprep.subr.mxu0 0.0
      %3728 = vmatpush1.msra.mxu0 0.0
      %3729 = vmatprep.subr.mxu0 0.0
      %3730 = vmatpush1.msra.mxu0 0.0
      %3731 = vmatprep.subr.mxu0 0.0
      %3732 = vmatpush1.msra.mxu0 0.0
      %3733 = vmatprep.subr.mxu0 0.0
      %3734 = vmatpush1.msra.mxu0 0.0
      %3735 = vmatprep.subr.mxu0 0.0
      %3736 = vmatpush1.msra.mxu0 0.0
      %3737 = vmatprep.subr.mxu0 0.0
      %3738 = vmatpush1.msra.mxu0 0.0
      %3739 = vmatprep.subr.mxu0 0.0
      %3740 = vmatpush1.msra.mxu0 0.0
      %3741 = vmatprep.subr.mxu0 0.0
      %3742 = vmatpush1.msra.mxu0 0.0
      %3743 = vmatprep.subr.mxu0 0.0
      %3744 = vmatpush1.msra.mxu0 0.0
      %3745 = vmatprep.subr.mxu0 0.0
      %3746 = vmatpush1.msra.mxu0 0.0
      %3747 = vmatprep.subr.mxu0 0.0
      %3748 = vmatpush1.msra.mxu0 0.0
      %3749 = vmatprep.subr.mxu0 0.0
      %3750 = vmatpush1.msra.mxu0 0.0
      %3751 = vmatprep.subr.mxu0 0.0
      %3752 = vmatpush1.msra.mxu0 0.0
      %3753 = vmatprep.subr.mxu0 0.0
      %3754 = vmatpush1.msra.mxu0 0.0
      %3755 = vmatprep.subr.mxu0 0.0
      %3756 = vmatpush1.msra.mxu0 0.0
      %3757 = vmatprep.subr.mxu0 0.0
      %3758 = vmatpush1.msra.mxu0 0.0
      %3759 = vmatprep.subr.mxu0 0.0
      %3760 = vmatpush1.msra.mxu0 0.0
      %3761 = vmatprep.subr.mxu0 0.0
      %3762 = vmatpush1.msra.mxu0 0.0
      %3763 = vmatprep.subr.mxu0 0.0
      %3764 = vmatpush1.msra.mxu0 0.0
      %3765 = vmatprep.subr.mxu0 0.0
      %3766 = vmatpush1.msra.mxu0 0.0
      %3767 = vmatprep.subr.mxu0 0.0
      %3768 = vmatpush1.msra.mxu0 0.0
      %3769 = vmatprep.subr.mxu0 0.0
      %3770 = vmatpush1.msra.mxu0 0.0
      %3771 = vmatprep.subr.mxu0 0.0
      %3772 = vmatpush1.msra.mxu0 0.0
      %3773 = vmatprep.subr.mxu0 0.0
      %3774 = vmatpush1.msra.mxu0 0.0
      %3775 = vmatprep.mubr.f32.mxu0 0.0
      %3776 = vmatmul.mubr.f32.gmra.mrb[0].mxu0 %v3632
      %v3777 = vpop.f32.mrb[0].mxu0
      %v3778 = vadd.f32 0.0, %v3777
      %v3779 = vpop.f32.mrb[0].mxu0
      %3780 = vdwg.mxu0
      %v3781 = vadd.f32 %v3618, %v3707
      %v3782 = vadd.f32 %v3619, %v3709
      %v3783 = vadd.f32 %v3620, %v3778
      %s3784 = scalar_lea.vmem %s1, 88
      %v3785 = vld [vmem:[%s3784] sm:$0xf]
      %3786 = vrot.lane.b32.xlu0 %v208, 109
      %v3787 = vpop.permute.xlu0 %3786
      %3788 = vrot.lane.b32.xlu0 %v3141, 109
      %v3789 = vpop.permute.xlu0 %3788
      %3790 = vrot.lane.b32.xlu0 %v209, 109
      %v3791 = vpop.permute.xlu0 %3790
      %v3792 = vsel %vm863, %v3787, %v3789
      %v3793 = vsel %vm863, %v3789, %v3791
      %v3795 = vsel %vm225, %v3785, 0
      %v3797 = vsel %vm229, %v3792, 0
      %v3799 = vsel %vm229, %v3793, 0
      %v3801 = vsel %vm229, %v3791, 0
      %3803 = vmatprep.subr.mxu0 %v3799
      %3804 = vmatpush1.msra.mxu0 %v3797
      %3805 = vmatprep.subr.mxu0 0.0
      %3806 = vmatpush1.msra.mxu0 0.0
      %3807 = vmatprep.subr.mxu0 0.0
      %3808 = vmatpush1.msra.mxu0 0.0
      %3809 = vmatprep.subr.mxu0 0.0
      %3810 = vmatpush1.msra.mxu0 0.0
      %3811 = vmatprep.subr.mxu0 0.0
      %3812 = vmatpush1.msra.mxu0 0.0
      %3813 = vmatprep.subr.mxu0 0.0
      %3814 = vmatpush1.msra.mxu0 0.0
      %3815 = vmatprep.subr.mxu0 0.0
      %3816 = vmatpush1.msra.mxu0 0.0
      %3817 = vmatprep.subr.mxu0 0.0
      %3818 = vmatpush1.msra.mxu0 0.0
      %3819 = vmatprep.subr.mxu0 0.0
      %3820 = vmatpush1.msra.mxu0 0.0
      %3821 = vmatprep.subr.mxu0 0.0
      %3822 = vmatpush1.msra.mxu0 0.0
      %3823 = vmatprep.subr.mxu0 0.0
      %3824 = vmatpush1.msra.mxu0 0.0
      %3825 = vmatprep.subr.mxu0 0.0
      %3826 = vmatpush1.msra.mxu0 0.0
      %3827 = vmatprep.subr.mxu0 0.0
      %3828 = vmatpush1.msra.mxu0 0.0
      %3829 = vmatprep.subr.mxu0 0.0
      %3830 = vmatpush1.msra.mxu0 0.0
      %3831 = vmatprep.subr.mxu0 0.0
      %3832 = vmatpush1.msra.mxu0 0.0
      %3833 = vmatprep.subr.mxu0 0.0
      %3834 = vmatpush1.msra.mxu0 0.0
      %3835 = vmatprep.subr.mxu0 0.0
      %3836 = vmatpush1.msra.mxu0 0.0
      %3837 = vmatprep.subr.mxu0 0.0
      %3838 = vmatpush1.msra.mxu0 0.0
      %3839 = vmatprep.subr.mxu0 0.0
      %3840 = vmatpush1.msra.mxu0 0.0
      %3841 = vmatprep.subr.mxu0 0.0
      %3842 = vmatpush1.msra.mxu0 0.0
      %3843 = vmatprep.subr.mxu0 0.0
      %3844 = vmatpush1.msra.mxu0 0.0
      %3845 = vmatprep.subr.mxu0 0.0
      %3846 = vmatpush1.msra.mxu0 0.0
      %3847 = vmatprep.subr.mxu0 0.0
      %3848 = vmatpush1.msra.mxu0 0.0
      %3849 = vmatprep.subr.mxu0 0.0
      %3850 = vmatpush1.msra.mxu0 0.0
      %3851 = vmatprep.subr.mxu0 0.0
      %3852 = vmatpush1.msra.mxu0 0.0
      %3853 = vmatprep.subr.mxu0 0.0
      %3854 = vmatpush1.msra.mxu0 0.0
      %3855 = vmatprep.subr.mxu0 0.0
      %3856 = vmatpush1.msra.mxu0 0.0
      %3857 = vmatprep.subr.mxu0 0.0
      %3858 = vmatpush1.msra.mxu0 0.0
      %3859 = vmatprep.subr.mxu0 0.0
      %3860 = vmatpush1.msra.mxu0 0.0
      %3861 = vmatprep.subr.mxu0 0.0
      %3862 = vmatpush1.msra.mxu0 0.0
      %3863 = vmatprep.subr.mxu0 0.0
      %3864 = vmatpush1.msra.mxu0 0.0
      %3865 = vmatprep.subr.mxu0 0.0
      %3866 = vmatpush1.msra.mxu0 0.0
      %3867 = vmatprep.mubr.f32.mxu0 0.0
      %3868 = vmatmul.mubr.f32.gmra.mrb[0].mxu0 %v3795
      %v3869 = vpop.f32.mrb[0].mxu0
      %v3870 = vadd.f32 0.0, %v3869
      %v3871 = vpop.f32.mrb[0].mxu0
      %v3872 = vadd.f32 0.0, %v3871
      %3873 = vdwg.mxu0
      %3874 = vmatprep.subr.mxu0 0.0
      %3875 = vmatpush1.msra.mxu0 %v3801
      %3876 = vmatprep.subr.mxu0 0.0
      %3877 = vmatpush1.msra.mxu0 0.0
      %3878 = vmatprep.subr.mxu0 0.0
      %3879 = vmatpush1.msra.mxu0 0.0
      %3880 = vmatprep.subr.mxu0 0.0
      %3881 = vmatpush1.msra.mxu0 0.0
      %3882 = vmatprep.subr.mxu0 0.0
      %3883 = vmatpush1.msra.mxu0 0.0
      %3884 = vmatprep.subr.mxu0 0.0
      %3885 = vmatpush1.msra.mxu0 0.0
      %3886 = vmatprep.subr.mxu0 0.0
      %3887 = vmatpush1.msra.mxu0 0.0
      %3888 = vmatprep.subr.mxu0 0.0
      %3889 = vmatpush1.msra.mxu0 0.0
      %3890 = vmatprep.subr.mxu0 0.0
      %3891 = vmatpush1.msra.mxu0 0.0
      %3892 = vmatprep.subr.mxu0 0.0
      %3893 = vmatpush1.msra.mxu0 0.0
      %3894 = vmatprep.subr.mxu0 0.0
      %3895 = vmatpush1.msra.mxu0 0.0
      %3896 = vmatprep.subr.mxu0 0.0
      %3897 = vmatpush1.msra.mxu0 0.0
      %3898 = vmatprep.subr.mxu0 0.0
      %3899 = vmatpush1.msra.mxu0 0.0
      %3900 = vmatprep.subr.mxu0 0.0
      %3901 = vmatpush1.msra.mxu0 0.0
      %3902 = vmatprep.subr.mxu0 0.0
      %3903 = vmatpush1.msra.mxu0 0.0
      %3904 = vmatprep.subr.mxu0 0.0
      %3905 = vmatpush1.msra.mxu0 0.0
      %3906 = vmatprep.subr.mxu0 0.0
      %3907 = vmatpush1.msra.mxu0 0.0
      %3908 = vmatprep.subr.mxu0 0.0
      %3909 = vmatpush1.msra.mxu0 0.0
      %3910 = vmatprep.subr.mxu0 0.0
      %3911 = vmatpush1.msra.mxu0 0.0
      %3912 = vmatprep.subr.mxu0 0.0
      %3913 = vmatpush1.msra.mxu0 0.0
      %3914 = vmatprep.subr.mxu0 0.0
      %3915 = vmatpush1.msra.mxu0 0.0
      %3916 = vmatprep.subr.mxu0 0.0
      %3917 = vmatpush1.msra.mxu0 0.0
      %3918 = vmatprep.subr.mxu0 0.0
      %3919 = vmatpush1.msra.mxu0 0.0
      %3920 = vmatprep.subr.mxu0 0.0
      %3921 = vmatpush1.msra.mxu0 0.0
      %3922 = vmatprep.subr.mxu0 0.0
      %3923 = vmatpush1.msra.mxu0 0.0
      %3924 = vmatprep.subr.mxu0 0.0
      %3925 = vmatpush1.msra.mxu0 0.0
      %3926 = vmatprep.subr.mxu0 0.0
      %3927 = vmatpush1.msra.mxu0 0.0
      %3928 = vmatprep.subr.mxu0 0.0
      %3929 = vmatpush1.msra.mxu0 0.0
      %3930 = vmatprep.subr.mxu0 0.0
      %3931 = vmatpush1.msra.mxu0 0.0
      %3932 = vmatprep.subr.mxu0 0.0
      %3933 = vmatpush1.msra.mxu0 0.0
      %3934 = vmatprep.subr.mxu0 0.0
      %3935 = vmatpush1.msra.mxu0 0.0
      %3936 = vmatprep.subr.mxu0 0.0
      %3937 = vmatpush1.msra.mxu0 0.0
      %3938 = vmatprep.mubr.f32.mxu0 0.0
      %3939 = vmatmul.mubr.f32.gmra.mrb[0].mxu0 %v3795
      %v3940 = vpop.f32.mrb[0].mxu0
      %v3941 = vadd.f32 0.0, %v3940
      %v3942 = vpop.f32.mrb[0].mxu0
      %3943 = vdwg.mxu0
      %v3944 = vadd.f32 %v3781, %v3870
      %v3945 = vadd.f32 %v3782, %v3872
      %v3946 = vadd.f32 %v3783, %v3941
      %s3947 = scalar_lea.vmem %s1, 92
      %v3948 = vld [vmem:[%s3947] sm:$0xf]
      %3949 = vrot.lane.b32.xlu0 %v208, 108
      %v3950 = vpop.permute.xlu0 %3949
      %3951 = vrot.lane.b32.xlu0 %v3141, 108
      %v3952 = vpop.permute.xlu0 %3951
      %3953 = vrot.lane.b32.xlu0 %v209, 108
      %v3954 = vpop.permute.xlu0 %3953
      %v3955 = vsel %vm1027, %v3950, %v3952
      %v3956 = vsel %vm1027, %v3952, %v3954
      %v3958 = vsel %vm225, %v3948, 0
      %v3960 = vsel %vm229, %v3955, 0
      %v3962 = vsel %vm229, %v3956, 0
      %v3964 = vsel %vm229, %v3954, 0
      %3966 = vmatprep.subr.mxu0 %v3962
      %3967 = vmatpush1.msra.mxu0 %v3960
      %3968 = vmatprep.subr.mxu0 0.0
      %3969 = vmatpush1.msra.mxu0 0.0
      %3970 = vmatprep.subr.mxu0 0.0
      %3971 = vmatpush1.msra.mxu0 0.0
      %3972 = vmatprep.subr.mxu0 0.0
      %3973 = vmatpush1.msra.mxu0 0.0
      %3974 = vmatprep.subr.mxu0 0.0
      %3975 = vmatpush1.msra.mxu0 0.0
      %3976 = vmatprep.subr.mxu0 0.0
      %3977 = vmatpush1.msra.mxu0 0.0
      %3978 = vmatprep.subr.mxu0 0.0
      %3979 = vmatpush1.msra.mxu0 0.0
      %3980 = vmatprep.subr.mxu0 0.0
      %3981 = vmatpush1.msra.mxu0 0.0
      %3982 = vmatprep.subr.mxu0 0.0
      %3983 = vmatpush1.msra.mxu0 0.0
      %3984 = vmatprep.subr.mxu0 0.0
      %3985 = vmatpush1.msra.mxu0 0.0
      %3986 = vmatprep.subr.mxu0 0.0
      %3987 = vmatpush1.msra.mxu0 0.0
      %3988 = vmatprep.subr.mxu0 0.0
      %3989 = vmatpush1.msra.mxu0 0.0
      %3990 = vmatprep.subr.mxu0 0.0
      %3991 = vmatpush1.msra.mxu0 0.0
      %3992 = vmatprep.subr.mxu0 0.0
      %3993 = vmatpush1.msra.mxu0 0.0
      %3994 = vmatprep.subr.mxu0 0.0
      %3995 = vmatpush1.msra.mxu0 0.0
      %3996 = vmatprep.subr.mxu0 0.0
      %3997 = vmatpush1.msra.mxu0 0.0
      %3998 = vmatprep.subr.mxu0 0.0
      %3999 = vmatpush1.msra.mxu0 0.0
      %4000 = vmatprep.subr.mxu0 0.0
      %4001 = vmatpush1.msra.mxu0 0.0
      %4002 = vmatprep.subr.mxu0 0.0
      %4003 = vmatpush1.msra.mxu0 0.0
      %4004 = vmatprep.subr.mxu0 0.0
      %4005 = vmatpush1.msra.mxu0 0.0
      %4006 = vmatprep.subr.mxu0 0.0
      %4007 = vmatpush1.msra.mxu0 0.0
      %4008 = vmatprep.subr.mxu0 0.0
      %4009 = vmatpush1.msra.mxu0 0.0
      %4010 = vmatprep.subr.mxu0 0.0
      %4011 = vmatpush1.msra.mxu0 0.0
      %4012 = vmatprep.subr.mxu0 0.0
      %4013 = vmatpush1.msra.mxu0 0.0
      %4014 = vmatprep.subr.mxu0 0.0
      %4015 = vmatpush1.msra.mxu0 0.0
      %4016 = vmatprep.subr.mxu0 0.0
      %4017 = vmatpush1.msra.mxu0 0.0
      %4018 = vmatprep.subr.mxu0 0.0
      %4019 = vmatpush1.msra.mxu0 0.0
      %4020 = vmatprep.subr.mxu0 0.0
      %4021 = vmatpush1.msra.mxu0 0.0
      %4022 = vmatprep.subr.mxu0 0.0
      %4023 = vmatpush1.msra.mxu0 0.0
      %4024 = vmatprep.subr.mxu0 0.0
      %4025 = vmatpush1.msra.mxu0 0.0
      %4026 = vmatprep.subr.mxu0 0.0
      %4027 = vmatpush1.msra.mxu0 0.0
      %4028 = vmatprep.subr.mxu0 0.0
      %4029 = vmatpush1.msra.mxu0 0.0
      %4030 = vmatprep.mubr.f32.mxu0 0.0
      %4031 = vmatmul.mubr.f32.gmra.mrb[0].mxu0 %v3958
      %v4032 = vpop.f32.mrb[0].mxu0
      %v4033 = vadd.f32 0.0, %v4032
      %v4034 = vpop.f32.mrb[0].mxu0
      %v4035 = vadd.f32 0.0, %v4034
      %4036 = vdwg.mxu0
      %4037 = vmatprep.subr.mxu0 0.0
      %4038 = vmatpush1.msra.mxu0 %v3964
      %4039 = vmatprep.subr.mxu0 0.0
      %4040 = vmatpush1.msra.mxu0 0.0
      %4041 = vmatprep.subr.mxu0 0.0
      %4042 = vmatpush1.msra.mxu0 0.0
      %4043 = vmatprep.subr.mxu0 0.0
      %4044 = vmatpush1.msra.mxu0 0.0
      %4045 = vmatprep.subr.mxu0 0.0
      %4046 = vmatpush1.msra.mxu0 0.0
      %4047 = vmatprep.subr.mxu0 0.0
      %4048 = vmatpush1.msra.mxu0 0.0
      %4049 = vmatprep.subr.mxu0 0.0
      %4050 = vmatpush1.msra.mxu0 0.0
      %4051 = vmatprep.subr.mxu0 0.0
      %4052 = vmatpush1.msra.mxu0 0.0
      %4053 = vmatprep.subr.mxu0 0.0
      %4054 = vmatpush1.msra.mxu0 0.0
      %4055 = vmatprep.subr.mxu0 0.0
      %4056 = vmatpush1.msra.mxu0 0.0
      %4057 = vmatprep.subr.mxu0 0.0
      %4058 = vmatpush1.msra.mxu0 0.0
      %4059 = vmatprep.subr.mxu0 0.0
      %4060 = vmatpush1.msra.mxu0 0.0
      %4061 = vmatprep.subr.mxu0 0.0
      %4062 = vmatpush1.msra.mxu0 0.0
      %4063 = vmatprep.subr.mxu0 0.0
      %4064 = vmatpush1.msra.mxu0 0.0
      %4065 = vmatprep.subr.mxu0 0.0
      %4066 = vmatpush1.msra.mxu0 0.0
      %4067 = vmatprep.subr.mxu0 0.0
      %4068 = vmatpush1.msra.mxu0 0.0
      %4069 = vmatprep.subr.mxu0 0.0
      %4070 = vmatpush1.msra.mxu0 0.0
      %4071 = vmatprep.subr.mxu0 0.0
      %4072 = vmatpush1.msra.mxu0 0.0
      %4073 = vmatprep.subr.mxu0 0.0
      %4074 = vmatpush1.msra.mxu0 0.0
      %4075 = vmatprep.subr.mxu0 0.0
      %4076 = vmatpush1.msra.mxu0 0.0
      %4077 = vmatprep.subr.mxu0 0.0
      %4078 = vmatpush1.msra.mxu0 0.0
      %4079 = vmatprep.subr.mxu0 0.0
      %4080 = vmatpush1.msra.mxu0 0.0
      %4081 = vmatprep.subr.mxu0 0.0
      %4082 = vmatpush1.msra.mxu0 0.0
      %4083 = vmatprep.subr.mxu0 0.0
      %4084 = vmatpush1.msra.mxu0 0.0
      %4085 = vmatprep.subr.mxu0 0.0
      %4086 = vmatpush1.msra.mxu0 0.0
      %4087 = vmatprep.subr.mxu0 0.0
      %4088 = vmatpush1.msra.mxu0 0.0
      %4089 = vmatprep.subr.mxu0 0.0
      %4090 = vmatpush1.msra.mxu0 0.0
      %4091 = vmatprep.subr.mxu0 0.0
      %4092 = vmatpush1.msra.mxu0 0.0
      %4093 = vmatprep.subr.mxu0 0.0
      %4094 = vmatpush1.msra.mxu0 0.0
      %4095 = vmatprep.subr.mxu0 0.0
      %4096 = vmatpush1.msra.mxu0 0.0
      %4097 = vmatprep.subr.mxu0 0.0
      %4098 = vmatpush1.msra.mxu0 0.0
      %4099 = vmatprep.subr.mxu0 0.0
      %4100 = vmatpush1.msra.mxu0 0.0
      %4101 = vmatprep.mubr.f32.mxu0 0.0
      %4102 = vmatmul.mubr.f32.gmra.mrb[0].mxu0 %v3958
      %v4103 = vpop.f32.mrb[0].mxu0
      %v4104 = vadd.f32 0.0, %v4103
      %v4105 = vpop.f32.mrb[0].mxu0
      %4106 = vdwg.mxu0
      %v4107 = vadd.f32 %v3944, %v4033
      %v4108 = vadd.f32 %v3945, %v4035
      %v4109 = vadd.f32 %v3946, %v4104
      %s4110 = scalar_lea.vmem %s1, 96
      %v4111 = vld [vmem:[%s4110] sm:$0xf]
      %4112 = vrot.lane.b32.xlu0 %v208, 92
      %v4113 = vpop.permute.xlu0 %4112
      %4114 = vrot.lane.b32.xlu0 %v3141, 92
      %v4115 = vpop.permute.xlu0 %4114
      %4116 = vrot.lane.b32.xlu0 %v209, 92
      %v4117 = vpop.permute.xlu0 %4116
      %v4118 = vsel %vm1191, %v4113, %v4115
      %v4119 = vsel %vm1191, %v4115, %v4117
      %v4121 = vsel %vm225, %v4111, 0
      %v4123 = vsel %vm229, %v4118, 0
      %v4125 = vsel %vm229, %v4119, 0
      %v4127 = vsel %vm229, %v4117, 0
      %4129 = vmatprep.subr.mxu0 %v4125
      %4130 = vmatpush1.msra.mxu0 %v4123
      %4131 = vmatprep.subr.mxu0 0.0
      %4132 = vmatpush1.msra.mxu0 0.0
      %4133 = vmatprep.subr.mxu0 0.0
      %4134 = vmatpush1.msra.mxu0 0.0
      %4135 = vmatprep.subr.mxu0 0.0
      %4136 = vmatpush1.msra.mxu0 0.0
      %4137 = vmatprep.subr.mxu0 0.0
      %4138 = vmatpush1.msra.mxu0 0.0
      %4139 = vmatprep.subr.mxu0 0.0
      %4140 = vmatpush1.msra.mxu0 0.0
      %4141 = vmatprep.subr.mxu0 0.0
      %4142 = vmatpush1.msra.mxu0 0.0
      %4143 = vmatprep.subr.mxu0 0.0
      %4144 = vmatpush1.msra.mxu0 0.0
      %4145 = vmatprep.subr.mxu0 0.0
      %4146 = vmatpush1.msra.mxu0 0.0
      %4147 = vmatprep.subr.mxu0 0.0
      %4148 = vmatpush1.msra.mxu0 0.0
      %4149 = vmatprep.subr.mxu0 0.0
      %4150 = vmatpush1.msra.mxu0 0.0
      %4151 = vmatprep.subr.mxu0 0.0
      %4152 = vmatpush1.msra.mxu0 0.0
      %4153 = vmatprep.subr.mxu0 0.0
      %4154 = vmatpush1.msra.mxu0 0.0
      %4155 = vmatprep.subr.mxu0 0.0
      %4156 = vmatpush1.msra.mxu0 0.0
      %4157 = vmatprep.subr.mxu0 0.0
      %4158 = vmatpush1.msra.mxu0 0.0
      %4159 = vmatprep.subr.mxu0 0.0
      %4160 = vmatpush1.msra.mxu0 0.0
      %4161 = vmatprep.subr.mxu0 0.0
      %4162 = vmatpush1.msra.mxu0 0.0
      %4163 = vmatprep.subr.mxu0 0.0
      %4164 = vmatpush1.msra.mxu0 0.0
      %4165 = vmatprep.subr.mxu0 0.0
      %4166 = vmatpush1.msra.mxu0 0.0
      %4167 = vmatprep.subr.mxu0 0.0
      %4168 = vmatpush1.msra.mxu0 0.0
      %4169 = vmatprep.subr.mxu0 0.0
      %4170 = vmatpush1.msra.mxu0 0.0
      %4171 = vmatprep.subr.mxu0 0.0
      %4172 = vmatpush1.msra.mxu0 0.0
      %4173 = vmatprep.subr.mxu0 0.0
      %4174 = vmatpush1.msra.mxu0 0.0
      %4175 = vmatprep.subr.mxu0 0.0
      %4176 = vmatpush1.msra.mxu0 0.0
      %4177 = vmatprep.subr.mxu0 0.0
      %4178 = vmatpush1.msra.mxu0 0.0
      %4179 = vmatprep.subr.mxu0 0.0
      %4180 = vmatpush1.msra.mxu0 0.0
      %4181 = vmatprep.subr.mxu0 0.0
      %4182 = vmatpush1.msra.mxu0 0.0
      %4183 = vmatprep.subr.mxu0 0.0
      %4184 = vmatpush1.msra.mxu0 0.0
      %4185 = vmatprep.subr.mxu0 0.0
      %4186 = vmatpush1.msra.mxu0 0.0
      %4187 = vmatprep.subr.mxu0 0.0
      %4188 = vmatpush1.msra.mxu0 0.0
      %4189 = vmatprep.subr.mxu0 0.0
      %4190 = vmatpush1.msra.mxu0 0.0
      %4191 = vmatprep.subr.mxu0 0.0
      %4192 = vmatpush1.msra.mxu0 0.0
      %4193 = vmatprep.mubr.f32.mxu0 0.0
      %4194 = vmatmul.mubr.f32.gmra.mrb[0].mxu0 %v4121
      %v4195 = vpop.f32.mrb[0].mxu0
      %v4196 = vadd.f32 0.0, %v4195
      %v4197 = vpop.f32.mrb[0].mxu0
      %v4198 = vadd.f32 0.0, %v4197
      %4199 = vdwg.mxu0
      %4200 = vmatprep.subr.mxu0 0.0
      %4201 = vmatpush1.msra.mxu0 %v4127
      %4202 = vmatprep.subr.mxu0 0.0
      %4203 = vmatpush1.msra.mxu0 0.0
      %4204 = vmatprep.subr.mxu0 0.0
      %4205 = vmatpush1.msra.mxu0 0.0
      %4206 = vmatprep.subr.mxu0 0.0
      %4207 = vmatpush1.msra.mxu0 0.0
      %4208 = vmatprep.subr.mxu0 0.0
      %4209 = vmatpush1.msra.mxu0 0.0
      %4210 = vmatprep.subr.mxu0 0.0
      %4211 = vmatpush1.msra.mxu0 0.0
      %4212 = vmatprep.subr.mxu0 0.0
      %4213 = vmatpush1.msra.mxu0 0.0
      %4214 = vmatprep.subr.mxu0 0.0
      %4215 = vmatpush1.msra.mxu0 0.0
      %4216 = vmatprep.subr.mxu0 0.0
      %4217 = vmatpush1.msra.mxu0 0.0
      %4218 = vmatprep.subr.mxu0 0.0
      %4219 = vmatpush1.msra.mxu0 0.0
      %4220 = vmatprep.subr.mxu0 0.0
      %4221 = vmatpush1.msra.mxu0 0.0
      %4222 = vmatprep.subr.mxu0 0.0
      %4223 = vmatpush1.msra.mxu0 0.0
      %4224 = vmatprep.subr.mxu0 0.0
      %4225 = vmatpush1.msra.mxu0 0.0
      %4226 = vmatprep.subr.mxu0 0.0
      %4227 = vmatpush1.msra.mxu0 0.0
      %4228 = vmatprep.subr.mxu0 0.0
      %4229 = vmatpush1.msra.mxu0 0.0
      %4230 = vmatprep.subr.mxu0 0.0
      %4231 = vmatpush1.msra.mxu0 0.0
      %4232 = vmatprep.subr.mxu0 0.0
      %4233 = vmatpush1.msra.mxu0 0.0
      %4234 = vmatprep.subr.mxu0 0.0
      %4235 = vmatpush1.msra.mxu0 0.0
      %4236 = vmatprep.subr.mxu0 0.0
      %4237 = vmatpush1.msra.mxu0 0.0
      %4238 = vmatprep.subr.mxu0 0.0
      %4239 = vmatpush1.msra.mxu0 0.0
      %4240 = vmatprep.subr.mxu0 0.0
      %4241 = vmatpush1.msra.mxu0 0.0
      %4242 = vmatprep.subr.mxu0 0.0
      %4243 = vmatpush1.msra.mxu0 0.0
      %4244 = vmatprep.subr.mxu0 0.0
      %4245 = vmatpush1.msra.mxu0 0.0
      %4246 = vmatprep.subr.mxu0 0.0
      %4247 = vmatpush1.msra.mxu0 0.0
      %4248 = vmatprep.subr.mxu0 0.0
      %4249 = vmatpush1.msra.mxu0 0.0
      %4250 = vmatprep.subr.mxu0 0.0
      %4251 = vmatpush1.msra.mxu0 0.0
      %4252 = vmatprep.subr.mxu0 0.0
      %4253 = vmatpush1.msra.mxu0 0.0
      %4254 = vmatprep.subr.mxu0 0.0
      %4255 = vmatpush1.msra.mxu0 0.0
      %4256 = vmatprep.subr.mxu0 0.0
      %4257 = vmatpush1.msra.mxu0 0.0
      %4258 = vmatprep.subr.mxu0 0.0
      %4259 = vmatpush1.msra.mxu0 0.0
      %4260 = vmatprep.subr.mxu0 0.0
      %4261 = vmatpush1.msra.mxu0 0.0
      %4262 = vmatprep.subr.mxu0 0.0
      %4263 = vmatpush1.msra.mxu0 0.0
      %4264 = vmatprep.mubr.f32.mxu0 0.0
      %4265 = vmatmul.mubr.f32.gmra.mrb[0].mxu0 %v4121
      %v4266 = vpop.f32.mrb[0].mxu0
      %v4267 = vadd.f32 0.0, %v4266
      %v4268 = vpop.f32.mrb[0].mxu0
      %4269 = vdwg.mxu0
      %v4270 = vadd.f32 %v4107, %v4196
      %v4271 = vadd.f32 %v4108, %v4198
      %v4272 = vadd.f32 %v4109, %v4267
      %s4273 = scalar_lea.vmem %s1, 100
      %v4274 = vld [vmem:[%s4273] sm:$0xf]
      %4275 = vrot.lane.b32.xlu0 %v208, 91
      %v4276 = vpop.permute.xlu0 %4275
      %4277 = vrot.lane.b32.xlu0 %v3141, 91
      %v4278 = vpop.permute.xlu0 %4277
      %4279 = vrot.lane.b32.xlu0 %v209, 91
      %v4280 = vpop.permute.xlu0 %4279
      %v4281 = vsel %vm1355, %v4276, %v4278
      %v4282 = vsel %vm1355, %v4278, %v4280
      %v4284 = vsel %vm225, %v4274, 0
      %v4286 = vsel %vm229, %v4281, 0
      %v4288 = vsel %vm229, %v4282, 0
      %v4290 = vsel %vm229, %v4280, 0
      %4292 = vmatprep.subr.mxu0 %v4288
      %4293 = vmatpush1.msra.mxu0 %v4286
      %4294 = vmatprep.subr.mxu0 0.0
      %4295 = vmatpush1.msra.mxu0 0.0
      %4296 = vmatprep.subr.mxu0 0.0
      %4297 = vmatpush1.msra.mxu0 0.0
      %4298 = vmatprep.subr.mxu0 0.0
      %4299 = vmatpush1.msra.mxu0 0.0
      %4300 = vmatprep.subr.mxu0 0.0
      %4301 = vmatpush1.msra.mxu0 0.0
      %4302 = vmatprep.subr.mxu0 0.0
      %4303 = vmatpush1.msra.mxu0 0.0
      %4304 = vmatprep.subr.mxu0 0.0
      %4305 = vmatpush1.msra.mxu0 0.0
      %4306 = vmatprep.subr.mxu0 0.0
      %4307 = vmatpush1.msra.mxu0 0.0
      %4308 = vmatprep.subr.mxu0 0.0
      %4309 = vmatpush1.msra.mxu0 0.0
      %4310 = vmatprep.subr.mxu0 0.0
      %4311 = vmatpush1.msra.mxu0 0.0
      %4312 = vmatprep.subr.mxu0 0.0
      %4313 = vmatpush1.msra.mxu0 0.0
      %4314 = vmatprep.subr.mxu0 0.0
      %4315 = vmatpush1.msra.mxu0 0.0
      %4316 = vmatprep.subr.mxu0 0.0
      %4317 = vmatpush1.msra.mxu0 0.0
      %4318 = vmatprep.subr.mxu0 0.0
      %4319 = vmatpush1.msra.mxu0 0.0
      %4320 = vmatprep.subr.mxu0 0.0
      %4321 = vmatpush1.msra.mxu0 0.0
      %4322 = vmatprep.subr.mxu0 0.0
      %4323 = vmatpush1.msra.mxu0 0.0
      %4324 = vmatprep.subr.mxu0 0.0
      %4325 = vmatpush1.msra.mxu0 0.0
      %4326 = vmatprep.subr.mxu0 0.0
      %4327 = vmatpush1.msra.mxu0 0.0
      %4328 = vmatprep.subr.mxu0 0.0
      %4329 = vmatpush1.msra.mxu0 0.0
      %4330 = vmatprep.subr.mxu0 0.0
      %4331 = vmatpush1.msra.mxu0 0.0
      %4332 = vmatprep.subr.mxu0 0.0
      %4333 = vmatpush1.msra.mxu0 0.0
      %4334 = vmatprep.subr.mxu0 0.0
      %4335 = vmatpush1.msra.mxu0 0.0
      %4336 = vmatprep.subr.mxu0 0.0
      %4337 = vmatpush1.msra.mxu0 0.0
      %4338 = vmatprep.subr.mxu0 0.0
      %4339 = vmatpush1.msra.mxu0 0.0
      %4340 = vmatprep.subr.mxu0 0.0
      %4341 = vmatpush1.msra.mxu0 0.0
      %4342 = vmatprep.subr.mxu0 0.0
      %4343 = vmatpush1.msra.mxu0 0.0
      %4344 = vmatprep.subr.mxu0 0.0
      %4345 = vmatpush1.msra.mxu0 0.0
      %4346 = vmatprep.subr.mxu0 0.0
      %4347 = vmatpush1.msra.mxu0 0.0
      %4348 = vmatprep.subr.mxu0 0.0
      %4349 = vmatpush1.msra.mxu0 0.0
      %4350 = vmatprep.subr.mxu0 0.0
      %4351 = vmatpush1.msra.mxu0 0.0
      %4352 = vmatprep.subr.mxu0 0.0
      %4353 = vmatpush1.msra.mxu0 0.0
      %4354 = vmatprep.subr.mxu0 0.0
      %4355 = vmatpush1.msra.mxu0 0.0
      %4356 = vmatprep.mubr.f32.mxu0 0.0
      %4357 = vmatmul.mubr.f32.gmra.mrb[0].mxu0 %v4284
      %v4358 = vpop.f32.mrb[0].mxu0
      %v4359 = vadd.f32 0.0, %v4358
      %v4360 = vpop.f32.mrb[0].mxu0
      %v4361 = vadd.f32 0.0, %v4360
      %4362 = vdwg.mxu0
      %4363 = vmatprep.subr.mxu0 0.0
      %4364 = vmatpush1.msra.mxu0 %v4290
      %4365 = vmatprep.subr.mxu0 0.0
      %4366 = vmatpush1.msra.mxu0 0.0
      %4367 = vmatprep.subr.mxu0 0.0
      %4368 = vmatpush1.msra.mxu0 0.0
      %4369 = vmatprep.subr.mxu0 0.0
      %4370 = vmatpush1.msra.mxu0 0.0
      %4371 = vmatprep.subr.mxu0 0.0
      %4372 = vmatpush1.msra.mxu0 0.0
      %4373 = vmatprep.subr.mxu0 0.0
      %4374 = vmatpush1.msra.mxu0 0.0
      %4375 = vmatprep.subr.mxu0 0.0
      %4376 = vmatpush1.msra.mxu0 0.0
      %4377 = vmatprep.subr.mxu0 0.0
      %4378 = vmatpush1.msra.mxu0 0.0
      %4379 = vmatprep.subr.mxu0 0.0
      %4380 = vmatpush1.msra.mxu0 0.0
      %4381 = vmatprep.subr.mxu0 0.0
      %4382 = vmatpush1.msra.mxu0 0.0
      %4383 = vmatprep.subr.mxu0 0.0
      %4384 = vmatpush1.msra.mxu0 0.0
      %4385 = vmatprep.subr.mxu0 0.0
      %4386 = vmatpush1.msra.mxu0 0.0
      %4387 = vmatprep.subr.mxu0 0.0
      %4388 = vmatpush1.msra.mxu0 0.0
      %4389 = vmatprep.subr.mxu0 0.0
      %4390 = vmatpush1.msra.mxu0 0.0
      %4391 = vmatprep.subr.mxu0 0.0
      %4392 = vmatpush1.msra.mxu0 0.0
      %4393 = vmatprep.subr.mxu0 0.0
      %4394 = vmatpush1.msra.mxu0 0.0
      %4395 = vmatprep.subr.mxu0 0.0
      %4396 = vmatpush1.msra.mxu0 0.0
      %4397 = vmatprep.subr.mxu0 0.0
      %4398 = vmatpush1.msra.mxu0 0.0
      %4399 = vmatprep.subr.mxu0 0.0
      %4400 = vmatpush1.msra.mxu0 0.0
      %4401 = vmatprep.subr.mxu0 0.0
      %4402 = vmatpush1.msra.mxu0 0.0
      %4403 = vmatprep.subr.mxu0 0.0
      %4404 = vmatpush1.msra.mxu0 0.0
      %4405 = vmatprep.subr.mxu0 0.0
      %4406 = vmatpush1.msra.mxu0 0.0
      %4407 = vmatprep.subr.mxu0 0.0
      %4408 = vmatpush1.msra.mxu0 0.0
      %4409 = vmatprep.subr.mxu0 0.0
      %4410 = vmatpush1.msra.mxu0 0.0
      %4411 = vmatprep.subr.mxu0 0.0
      %4412 = vmatpush1.msra.mxu0 0.0
      %4413 = vmatprep.subr.mxu0 0.0
      %4414 = vmatpush1.msra.mxu0 0.0
      %4415 = vmatprep.subr.mxu0 0.0
      %4416 = vmatpush1.msra.mxu0 0.0
      %4417 = vmatprep.subr.mxu0 0.0
      %4418 = vmatpush1.msra.mxu0 0.0
      %4419 = vmatprep.subr.mxu0 0.0
      %4420 = vmatpush1.msra.mxu0 0.0
      %4421 = vmatprep.subr.mxu0 0.0
      %4422 = vmatpush1.msra.mxu0 0.0
      %4423 = vmatprep.subr.mxu0 0.0
      %4424 = vmatpush1.msra.mxu0 0.0
      %4425 = vmatprep.subr.mxu0 0.0
      %4426 = vmatpush1.msra.mxu0 0.0
      %4427 = vmatprep.mubr.f32.mxu0 0.0
      %4428 = vmatmul.mubr.f32.gmra.mrb[0].mxu0 %v4284
      %v4429 = vpop.f32.mrb[0].mxu0
      %v4430 = vadd.f32 0.0, %v4429
      %v4431 = vpop.f32.mrb[0].mxu0
      %4432 = vdwg.mxu0
      %v4433 = vadd.f32 %v4270, %v4359
      %v4434 = vadd.f32 %v4271, %v4361
      %v4435 = vadd.f32 %v4272, %v4430
      %s4436 = scalar_lea.vmem %s1, 104
      %v4437 = vld [vmem:[%s4436] sm:$0xf]
      %4438 = vrot.lane.b32.xlu0 %v208, 90
      %v4439 = vpop.permute.xlu0 %4438
      %4440 = vrot.lane.b32.xlu0 %v3141, 90
      %v4441 = vpop.permute.xlu0 %4440
      %4442 = vrot.lane.b32.xlu0 %v209, 90
      %v4443 = vpop.permute.xlu0 %4442
      %v4444 = vsel %vm1519, %v4439, %v4441
      %v4445 = vsel %vm1519, %v4441, %v4443
      %v4447 = vsel %vm225, %v4437, 0
      %v4449 = vsel %vm229, %v4444, 0
      %v4451 = vsel %vm229, %v4445, 0
      %v4453 = vsel %vm229, %v4443, 0
      %4455 = vmatprep.subr.mxu0 %v4451
      %4456 = vmatpush1.msra.mxu0 %v4449
      %4457 = vmatprep.subr.mxu0 0.0
      %4458 = vmatpush1.msra.mxu0 0.0
      %4459 = vmatprep.subr.mxu0 0.0
      %4460 = vmatpush1.msra.mxu0 0.0
      %4461 = vmatprep.subr.mxu0 0.0
      %4462 = vmatpush1.msra.mxu0 0.0
      %4463 = vmatprep.subr.mxu0 0.0
      %4464 = vmatpush1.msra.mxu0 0.0
      %4465 = vmatprep.subr.mxu0 0.0
      %4466 = vmatpush1.msra.mxu0 0.0
      %4467 = vmatprep.subr.mxu0 0.0
      %4468 = vmatpush1.msra.mxu0 0.0
      %4469 = vmatprep.subr.mxu0 0.0
      %4470 = vmatpush1.msra.mxu0 0.0
      %4471 = vmatprep.subr.mxu0 0.0
      %4472 = vmatpush1.msra.mxu0 0.0
      %4473 = vmatprep.subr.mxu0 0.0
      %4474 = vmatpush1.msra.mxu0 0.0
      %4475 = vmatprep.subr.mxu0 0.0
      %4476 = vmatpush1.msra.mxu0 0.0
      %4477 = vmatprep.subr.mxu0 0.0
      %4478 = vmatpush1.msra.mxu0 0.0
      %4479 = vmatprep.subr.mxu0 0.0
      %4480 = vmatpush1.msra.mxu0 0.0
      %4481 = vmatprep.subr.mxu0 0.0
      %4482 = vmatpush1.msra.mxu0 0.0
      %4483 = vmatprep.subr.mxu0 0.0
      %4484 = vmatpush1.msra.mxu0 0.0
      %4485 = vmatprep.subr.mxu0 0.0
      %4486 = vmatpush1.msra.mxu0 0.0
      %4487 = vmatprep.subr.mxu0 0.0
      %4488 = vmatpush1.msra.mxu0 0.0
      %4489 = vmatprep.subr.mxu0 0.0
      %4490 = vmatpush1.msra.mxu0 0.0
      %4491 = vmatprep.subr.mxu0 0.0
      %4492 = vmatpush1.msra.mxu0 0.0
      %4493 = vmatprep.subr.mxu0 0.0
      %4494 = vmatpush1.msra.mxu0 0.0
      %4495 = vmatprep.subr.mxu0 0.0
      %4496 = vmatpush1.msra.mxu0 0.0
      %4497 = vmatprep.subr.mxu0 0.0
      %4498 = vmatpush1.msra.mxu0 0.0
      %4499 = vmatprep.subr.mxu0 0.0
      %4500 = vmatpush1.msra.mxu0 0.0
      %4501 = vmatprep.subr.mxu0 0.0
      %4502 = vmatpush1.msra.mxu0 0.0
      %4503 = vmatprep.subr.mxu0 0.0
      %4504 = vmatpush1.msra.mxu0 0.0
      %4505 = vmatprep.subr.mxu0 0.0
      %4506 = vmatpush1.msra.mxu0 0.0
      %4507 = vmatprep.subr.mxu0 0.0
      %4508 = vmatpush1.msra.mxu0 0.0
      %4509 = vmatprep.subr.mxu0 0.0
      %4510 = vmatpush1.msra.mxu0 0.0
      %4511 = vmatprep.subr.mxu0 0.0
      %4512 = vmatpush1.msra.mxu0 0.0
      %4513 = vmatprep.subr.mxu0 0.0
      %4514 = vmatpush1.msra.mxu0 0.0
      %4515 = vmatprep.subr.mxu0 0.0
      %4516 = vmatpush1.msra.mxu0 0.0
      %4517 = vmatprep.subr.mxu0 0.0
      %4518 = vmatpush1.msra.mxu0 0.0
      %4519 = vmatprep.mubr.f32.mxu0 0.0
      %4520 = vmatmul.mubr.f32.gmra.mrb[0].mxu0 %v4447
      %v4521 = vpop.f32.mrb[0].mxu0
      %v4522 = vadd.f32 0.0, %v4521
      %v4523 = vpop.f32.mrb[0].mxu0
      %v4524 = vadd.f32 0.0, %v4523
      %4525 = vdwg.mxu0
      %4526 = vmatprep.subr.mxu0 0.0
      %4527 = vmatpush1.msra.mxu0 %v4453
      %4528 = vmatprep.subr.mxu0 0.0
      %4529 = vmatpush1.msra.mxu0 0.0
      %4530 = vmatprep.subr.mxu0 0.0
      %4531 = vmatpush1.msra.mxu0 0.0
      %4532 = vmatprep.subr.mxu0 0.0
      %4533 = vmatpush1.msra.mxu0 0.0
      %4534 = vmatprep.subr.mxu0 0.0
      %4535 = vmatpush1.msra.mxu0 0.0
      %4536 = vmatprep.subr.mxu0 0.0
      %4537 = vmatpush1.msra.mxu0 0.0
      %4538 = vmatprep.subr.mxu0 0.0
      %4539 = vmatpush1.msra.mxu0 0.0
      %4540 = vmatprep.subr.mxu0 0.0
      %4541 = vmatpush1.msra.mxu0 0.0
      %4542 = vmatprep.subr.mxu0 0.0
      %4543 = vmatpush1.msra.mxu0 0.0
      %4544 = vmatprep.subr.mxu0 0.0
      %4545 = vmatpush1.msra.mxu0 0.0
      %4546 = vmatprep.subr.mxu0 0.0
      %4547 = vmatpush1.msra.mxu0 0.0
      %4548 = vmatprep.subr.mxu0 0.0
      %4549 = vmatpush1.msra.mxu0 0.0
      %4550 = vmatprep.subr.mxu0 0.0
      %4551 = vmatpush1.msra.mxu0 0.0
      %4552 = vmatprep.subr.mxu0 0.0
      %4553 = vmatpush1.msra.mxu0 0.0
      %4554 = vmatprep.subr.mxu0 0.0
      %4555 = vmatpush1.msra.mxu0 0.0
      %4556 = vmatprep.subr.mxu0 0.0
      %4557 = vmatpush1.msra.mxu0 0.0
      %4558 = vmatprep.subr.mxu0 0.0
      %4559 = vmatpush1.msra.mxu0 0.0
      %4560 = vmatprep.subr.mxu0 0.0
      %4561 = vmatpush1.msra.mxu0 0.0
      %4562 = vmatprep.subr.mxu0 0.0
      %4563 = vmatpush1.msra.mxu0 0.0
      %4564 = vmatprep.subr.mxu0 0.0
      %4565 = vmatpush1.msra.mxu0 0.0
      %4566 = vmatprep.subr.mxu0 0.0
      %4567 = vmatpush1.msra.mxu0 0.0
      %4568 = vmatprep.subr.mxu0 0.0
      %4569 = vmatpush1.msra.mxu0 0.0
      %4570 = vmatprep.subr.mxu0 0.0
      %4571 = vmatpush1.msra.mxu0 0.0
      %4572 = vmatprep.subr.mxu0 0.0
      %4573 = vmatpush1.msra.mxu0 0.0
      %4574 = vmatprep.subr.mxu0 0.0
      %4575 = vmatpush1.msra.mxu0 0.0
      %4576 = vmatprep.subr.mxu0 0.0
      %4577 = vmatpush1.msra.mxu0 0.0
      %4578 = vmatprep.subr.mxu0 0.0
      %4579 = vmatpush1.msra.mxu0 0.0
      %4580 = vmatprep.subr.mxu0 0.0
      %4581 = vmatpush1.msra.mxu0 0.0
      %4582 = vmatprep.subr.mxu0 0.0
      %4583 = vmatpush1.msra.mxu0 0.0
      %4584 = vmatprep.subr.mxu0 0.0
      %4585 = vmatpush1.msra.mxu0 0.0
      %4586 = vmatprep.subr.mxu0 0.0
      %4587 = vmatpush1.msra.mxu0 0.0
      %4588 = vmatprep.subr.mxu0 0.0
      %4589 = vmatpush1.msra.mxu0 0.0
      %4590 = vmatprep.mubr.f32.mxu0 0.0
      %4591 = vmatmul.mubr.f32.gmra.mrb[0].mxu0 %v4447
      %v4592 = vpop.f32.mrb[0].mxu0
      %v4593 = vadd.f32 0.0, %v4592
      %v4594 = vpop.f32.mrb[0].mxu0
      %4595 = vdwg.mxu0
      %v4596 = vadd.f32 %v4433, %v4522
      %v4597 = vadd.f32 %v4434, %v4524
      %v4598 = vadd.f32 %v4435, %v4593
      %v4599 = vld [vmem:[%s2] sm:$0xf]
      %4601 = vset.pattern.permute.xlu0 0
      %4602 = vperm.xlu0 %4601, %v4599
      %v4603 = vpop.permute.xlu0 %4602
      %v4605 = vadd.f32 %v4596, %v4603
      %v4606 = vadd.f32 %v4597, %v4603
      %v4607 = vadd.f32 %v4598, %v4603
      %v4610 = vcombine.low %v4605, %v4606
      %4612 = vst [vmem:[%s192] sm:$0xff] %v4610
      %vm4613 = vcmask 257024
      %4614 = vst.msk [vmem:[%s192 + $0x8] sm:$0xf] %vm4613, %v4607
      %p4615 = scmp.lt.s32.totalorder %s18, 1
      %s4616 = scalar_select %p4615, %s18, 1
      %p4617 = scmp.lt.s32.totalorder %s19, 7
      %s4618 = scalar_select %p4617, %s19, 7
      %s4619 = smul.addr %s4618, 3
      %s4620 = smul.addr %s4616, 24
      %s4621 = sadd.s32 %s4619, %s4620
      %s4622 = smul.addr %s4621, 4
      %s4623 = scalar_lea.vmem %s3, %s4622
      // Predicated region
      $region33: #{causal_conv3d.1} parent=31 // pred_check
        %p4624 = pneg %p114
      $region34: #{causal_conv3d.1} parent=31 // pred_check_branch
        %4626 = sbr.rel (%p4624) target = $region36
      $region35: #{causal_conv3d.1} parent=31 // pred_region
        _
      $region36: #{causal_conv3d.1} parent=31 // pred_fallthru
        _
    $region32: #{causal_conv3d.1} parent=5 // pred_fallthru
      _
    %p4627 = scmp.le.s32.totalorder 2, %s9
    // Predicated region
    $region37: #{causal_conv3d.1} parent=5 // pred_check
      %p4628 = pneg %p4627
    $region38: #{causal_conv3d.1} parent=5 // pred_check_branch
      %4630 = sbr.rel (%p4628) target = $region40
    $region39: #{causal_conv3d.1} parent=5 // pred_region
      %s4631 = ssub.s32 %s9, 2
      // Predicated region
      $region41: #{causal_conv3d.1} parent=39 // pred_check
        %p4632 = pneg %p120
      $region42: #{causal_conv3d.1} parent=39 // pred_check_branch
        %4634 = sbr.rel (%p4632) target = $region44
      $region43: #{causal_conv3d.1} parent=39 // pred_region
        %p4635 = scmp.lt.s32.totalorder %s20, 1
        %s4636 = scalar_select %p4635, %s20, 1
        %p4637 = scmp.lt.s32.totalorder %s21, 7
        %s4638 = scalar_select %p4637, %s21, 7
        %s4639 = smul.addr %s4638, 3
        %s4640 = smul.addr %s4636, 24
        %s4641 = sadd.s32 %s4639, %s4640
        %s4642 = smul.addr %s4641, 4
        %s4643 = scalar_lea.vmem %s3, %s4642
      $region44: #{causal_conv3d.1} parent=39 // pred_fallthru
        _
    $region40: #{causal_conv3d.1} parent=5 // pred_fallthru
      _
  $region6: #{causal_conv3d.1} parent=0 // loop_footer
    %s13 = sadd.s32 1, %s9
  $region7: #{causal_conv3d.1} parent=0 // loop_footer_branch
    %8 = sbr.rel target = $region3
  $region8: #{causal_conv3d.1} parent=0 // loop_exit
    _

</llo_original>
